<compile_context>
chip_gen: v6e
topology: v6e:2x2x1
jax: 0.10.0
libtpu: 0.0.40
codegen_flags: <defaults>
</compile_context>

<pallas_src>
import functools

import jax
import jax.numpy as jnp
from jax import lax
from jax.experimental import pallas as pl
from jax.experimental.pallas import tpu as pltpu


_VMEM_LIMIT_DENSE = 32 * 1024 * 1024   # row-tiled linears / MLPs
_VMEM_LIMIT_CONV = 64 * 1024 * 1024    # whole-graph (Nn,H) residency in the agg kernel
_EDGE_GROUP = 8                        # edges gathered / relu'd together per step


def _row_tile(m):
    # Full-array block when it fits, otherwise 1024-row tiles (divisible by 8;
    # a 1024x192 f32 block is ~0.75 MiB, amortizes the ~0.35us per-grid-step cost).
    return m if m <= 1024 else 1024


def _split_rows(w, k, n):
    # Split a stacked (n*k, out) weight into n K-blocks of (k, out).
    return [w[i * k:(i + 1) * k] for i in range(n)]


# ----------------------------------------------------------------------------
# Pallas kernels
# ----------------------------------------------------------------------------
def _fused_linear_kernel(*refs, n_seg):
    """out = sum_i x_i @ w_i + b   (weights already bf16, f32 accumulation)."""
    xs = refs[:n_seg]
    ws = refs[n_seg:2 * n_seg]
    b_ref = refs[2 * n_seg]
    o_ref = refs[-1]
    acc = b_ref[...]
    for x_ref, w_ref in zip(xs, ws):
        acc = acc + jnp.dot(x_ref[...].astype(jnp.bfloat16), w_ref[...],
                            preferred_element_type=jnp.float32)
    o_ref[...] = acc


def _fused_mlp_kernel(*refs, n_seg):
    """out = relu(sum_i x_i @ w1_i + b1) @ w2 + b2."""
    xs = refs[:n_seg]
    w1s = refs[n_seg:2 * n_seg]
    b1_ref = refs[2 * n_seg]
    w2_ref = refs[2 * n_seg + 1]
    b2_ref = refs[2 * n_seg + 2]
    o_ref = refs[-1]
    h = b1_ref[...]
    for x_ref, w_ref in zip(xs, w1s):
        h = h + jnp.dot(x_ref[...].astype(jnp.bfloat16), w_ref[...],
                        preferred_element_type=jnp.float32)
    h = jnp.maximum(h, 0.0)
    o_ref[...] = jnp.dot(h.astype(jnp.bfloat16), w2_ref[...],
                         preferred_element_type=jnp.float32) + b2_ref[...]


def _gine_agg_kernel(src_ref, dst_ref,        # scalar prefetch (SMEM), padded
                     x_ref, e_ref,            # x: (Nn,H) resident; e: (te,H) per tile
                     o_ref,                   # (Nn,H): x + sum relu(x_src + e)
                     acc_ref, gbuf_ref,       # VMEM scratch: (Nn,H) f32, (group,H) f32
                     *, edges_per_tile, num_edges, group):
    t = pl.program_id(0)

    @pl.when(t == 0)
    def _init():
        acc_ref[...] = jnp.zeros_like(acc_ref)

    base = t * edges_per_tile
    num_groups = edges_per_tile // group      # static

    def group_body(g, carry):
        goff = pl.multiple_of(g * group, group)
        ebase = base + goff
        # `group` independent dynamic-row gathers into a staging tile (ILP across loads)
        for j in range(group):
            gbuf_ref[pl.ds(j, 1), :] = x_ref[pl.ds(src_ref[ebase + j], 1), :]
        # one vectorized message computation for the whole group
        msg = jnp.maximum(gbuf_ref[...] + e_ref[pl.ds(goff, group), :], 0.0)
        row = lax.broadcasted_iota(jnp.int32, (group, 1), 0)
        msg = jnp.where(ebase + row < num_edges, msg, 0.0)   # mask pad edges
        # duplicate dst rows must stay a serial RMW chain
        for j in range(group):
            d = dst_ref[ebase + j]
            acc_ref[pl.ds(d, 1), :] = acc_ref[pl.ds(d, 1), :] + msg[j:j + 1, :]
        return carry

    lax.fori_loop(0, num_groups, group_body, 0, unroll=True)

    @pl.when(t == pl.num_programs(0) - 1)
    def _finish():
        o_ref[...] = x_ref[...] + acc_ref[...]     # (1+eps)*x + agg, eps = 0


# ----------------------------------------------------------------------------
# Pallas wrappers
# ----------------------------------------------------------------------------
def pallas_fused_linear(xs, ws, b):
    M = xs[0].shape[0]
    N = ws[0].shape[1]
    tm = _row_tile(M)
    kernel = functools.partial(_fused_linear_kernel, n_seg=len(xs))
    in_specs = ([pl.BlockSpec((tm, x.shape[1]), lambda i: (i, 0)) for x in xs]
                + [pl.BlockSpec((w.shape[0], N), lambda i: (0, 0)) for w in ws]
                + [pl.BlockSpec((1, N), lambda i: (0, 0))])
    args = (list(xs) + [w.astype(jnp.bfloat16) for w in ws] + [b.reshape(1, N)])
    return pl.pallas_call(
        kernel,
        out_shape=jax.ShapeDtypeStruct((M, N), jnp.float32),
        grid=(pl.cdiv(M, tm),),
        in_specs=in_specs,
        out_specs=pl.BlockSpec((tm, N), lambda i: (i, 0)),
        compiler_params=pltpu.CompilerParams(
            dimension_semantics=("parallel",), vmem_limit_bytes=_VMEM_LIMIT_DENSE),
    )(*args)


def pallas_fused_linear_padded(xs, ws, b):
    """Fused linear with the output width zero-padded to 128 lanes inside the
    kernel (lane-dense stores); pad columns are sliced off here."""
    n = ws[0].shape[1]
    n_pad = ((n + 127) // 128) * 128
    if n_pad != n:
        ws = [jnp.pad(w, ((0, 0), (0, n_pad - n))) for w in ws]
        b = jnp.pad(b, (0, n_pad - n))
    return pallas_fused_linear(xs, ws, b)[:, :n]


def pallas_linear(x, w, b):
    return pallas_fused_linear([x], [w], b)


def pallas_fused_mlp(xs, w1_blocks, b1, w2, b2):
    M = xs[0].shape[0]
    H = w2.shape[0]
    N = w2.shape[1]
    tm = _row_tile(M)
    kernel = functools.partial(_fused_mlp_kernel, n_seg=len(xs))
    in_specs = ([pl.BlockSpec((tm, x.shape[1]), lambda i: (i, 0)) for x in xs]
                + [pl.BlockSpec((w.shape[0], H), lambda i: (0, 0)) for w in w1_blocks]
                + [pl.BlockSpec((1, H), lambda i: (0, 0)),
                   pl.BlockSpec((H, N), lambda i: (0, 0)),
                   pl.BlockSpec((1, N), lambda i: (0, 0))])
    args = (list(xs)
            + [w.astype(jnp.bfloat16) for w in w1_blocks]
            + [b1.reshape(1, H), w2.astype(jnp.bfloat16), b2.reshape(1, N)])
    return pl.pallas_call(
        kernel,
        out_shape=jax.ShapeDtypeStruct((M, N), jnp.float32),
        grid=(pl.cdiv(M, tm),),
        in_specs=in_specs,
        out_specs=pl.BlockSpec((tm, N), lambda i: (i, 0)),
        compiler_params=pltpu.CompilerParams(
            dimension_semantics=("parallel",), vmem_limit_bytes=_VMEM_LIMIT_DENSE),
    )(*args)


def pallas_mlp(x, w1, b1, w2, b2):
    return pallas_fused_mlp([x], [w1], b1, w2, b2)


def pallas_gine_aggregate(x, edge_attr, src, dst):
    """h_i = x_i + sum_{(j->i)} relu(x_j + e_ji)   (GINEConv aggregation, eps=0)."""
    Nn, H = x.shape
    E = edge_attr.shape[0]
    if E == 0:                                  # degenerate: no messages
        return x
    te = min(256, pl.cdiv(E, _EDGE_GROUP) * _EDGE_GROUP)   # edge tile, multiple of group
    e_pad = pl.cdiv(E, te) * te
    src_p = jnp.pad(src, (0, e_pad - E))        # padded edges are masked in-kernel
    dst_p = jnp.pad(dst, (0, e_pad - E))
    ea_p = jnp.pad(edge_attr, ((0, e_pad - E), (0, 0)))
    # TODO(synk): for very large E, tile src/dst per edge tile instead of prefetching
    # the whole arrays (1-D s32[E] SMEM pads to next_pow2(4E) bytes); for very large Nn
    # tile the node dim with edge bucketing and/or shard edges across the two v7x
    # TensorCores with two accumulators + final add (v7x has only 64 MiB VMEM).
    kernel = functools.partial(_gine_agg_kernel, edges_per_tile=te,
                               num_edges=E, group=_EDGE_GROUP)
    return pl.pallas_call(
        kernel,
        out_shape=jax.ShapeDtypeStruct((Nn, H), jnp.float32),
        grid_spec=pltpu.PrefetchScalarGridSpec(
            num_scalar_prefetch=2,
            grid=(e_pad // te,),
            in_specs=[pl.BlockSpec((Nn, H), lambda t, s, d: (0, 0)),   # x (resident)
                      pl.BlockSpec((te, H), lambda t, s, d: (t, 0))],  # edge features
            out_specs=pl.BlockSpec((Nn, H), lambda t, s, d: (0, 0)),
            scratch_shapes=[pltpu.VMEM((Nn, H), jnp.float32),
                            pltpu.VMEM((_EDGE_GROUP, H), jnp.float32)]),
        compiler_params=pltpu.CompilerParams(
            dimension_semantics=("arbitrary",), vmem_limit_bytes=_VMEM_LIMIT_CONV),
    )(src_p, dst_p, x, ea_p)


# ----------------------------------------------------------------------------
# Plain-JAX glue
# ----------------------------------------------------------------------------
def positional_encoding(pos, dim):
    # sinusoidal encoding of a scalar "position" (target graph size), (G,1) -> (G,dim)
    idx = jnp.arange(0, dim, 2, dtype=jnp.float32)
    inv_freq = jnp.exp(-idx * jnp.log(10000.0) / dim)
    ang = pos.astype(jnp.float32) * inv_freq[None, :]          # (G, dim/2)
    pe = jnp.stack([jnp.sin(ang), jnp.cos(ang)], axis=-1)      # (G, dim/2, 2)
    return pe.reshape(pos.shape[0], dim)


def coalesce_mean(edge_index, values):
    # Symmetrize directed-edge outputs: mean over (i,j) and (j,i), returned in
    # coalesced (sorted by row,col) order, matching torch_geometric.coalesce(...)[1].
    # Assumes edge_index contains both directions of every undirected edge exactly
    # once.  Lexicographic 2-key sort avoids the int32 overflow of src*N + dst.
    src, dst = edge_index[0], edge_index[1]
    full_src = jnp.concatenate([src, dst])
    full_dst = jnp.concatenate([dst, src])
    vals = jnp.concatenate([values, values], axis=0)
    order = jnp.lexsort((full_dst, full_src))
    E = values.shape[0]
    return vals[order].reshape(E, 2, -1).mean(axis=1)


# ----------------------------------------------------------------------------
# Parameters
# ----------------------------------------------------------------------------
def init_linear(key, fan_in, fan_out):
    k1, k2 = jax.random.split(key)
    s = 1.0 / jnp.sqrt(jnp.float32(fan_in))
    w = jax.random.uniform(k1, (fan_in, fan_out), jnp.float32, -s, s)
    b = jax.random.uniform(k2, (fan_out,), jnp.float32, -s, s)
    return w, b


def init_mlp(key, fan_in, hidden, out):
    k1, k2 = jax.random.split(key)
    return init_linear(k1, fan_in, hidden) + init_linear(k2, hidden, out)


def init_params(key, node_in, edge_in, node_out, edge_out, emb, hidden, num_layers):
    keys = jax.random.split(key, 8 + 2 * num_layers)
    p = {}
    p["node_emb"] = init_linear(keys[0], node_in, emb)
    p["edge_emb"] = init_linear(keys[1], edge_in, emb)
    p["noise_emb"] = init_linear(keys[2], 1, emb)
    p["red_emb"] = init_linear(keys[3], 1, emb)
    p["node_in_mlp"] = init_mlp(keys[4], 5 * emb, hidden, hidden)
    p["edge_in_mlp"] = init_mlp(keys[5], 6 * emb, hidden, hidden)
    p["gine"] = [init_mlp(keys[6 + 2 * l], hidden, hidden, hidden)
                 for l in range(num_layers)]
    p["edge_layers"] = [init_mlp(keys[7 + 2 * l], 3 * hidden, hidden, hidden)
                        for l in range(num_layers)]
    p["node_out"] = init_linear(keys[6 + 2 * num_layers], (num_layers + 1) * hidden, node_out)
    p["edge_out"] = init_linear(keys[7 + 2 * num_layers], (num_layers + 1) * hidden, edge_out)
    return p


# ----------------------------------------------------------------------------
# GINE forward
# ----------------------------------------------------------------------------
def gine_forward(params, edge_index, batch, node_attr, edge_attr, node_emb,
                 noise_cond, red_frac, target_size, *, emb, hidden, num_layers):
    src, dst = edge_index[0], edge_index[1]

    # embeddings
    node_attr_emb = pallas_linear(node_attr, *params["node_emb"])
    edge_attr_emb = pallas_linear(edge_attr, *params["edge_emb"])
    wn, bn = params["noise_emb"]                   # (G,1)@(1,emb): broadcast glue
    noise_cond_emb = noise_cond[:, None] * wn[0][None, :] + bn[None, :]
    wr, br = params["red_emb"]
    red_frac_emb = red_frac[:, None] * wr[0][None, :] + br[None, :]
    target_size_emb = positional_encoding(target_size[:, None], emb)

    # node input MLP: the 5-way concat is fused as K-blocks inside the kernel
    w1, b1, w2, b2 = params["node_in_mlp"]
    x_node = pallas_fused_mlp(
        [node_attr_emb, node_emb, noise_cond_emb[batch],
         red_frac_emb[batch], target_size_emb[batch]],
        _split_rows(w1, emb, 5), b1, w2, b2)

    # edge input MLP: 6-way concat fused
    edge_batch = batch[src]
    w1, b1, w2, b2 = params["edge_in_mlp"]
    x_edge = pallas_fused_mlp(
        [edge_attr_emb, node_emb[src], node_emb[dst],
         noise_cond_emb[edge_batch], red_frac_emb[edge_batch],
         target_size_emb[edge_batch]],
        _split_rows(w1, emb, 6), b1, w2, b2)

    skip_node, skip_edge = [x_node], [x_edge]
    for l in range(num_layers):
        # GINEConv split: Pallas scatter-add aggregation, then the standard
        # row-tiled / parallel MLP (no serial MLP tail inside the edge loop).
        h = pallas_gine_aggregate(x_node, x_edge, src, dst)
        gw1, gb1, gw2, gb2 = params["gine"][l]
        x_node = pallas_mlp(h, gw1, gb1, gw2, gb2)
        skip_node.append(x_node)

        # per-layer edge update: 3-way concat fused as K-blocks (no (E,3H) concat)
        # TODO(synk): gather x_node[src]/x_node[dst] in-kernel via scalar-prefetched
        # indices to also remove the two XLA gather materializations per layer.
        ew1, eb1, ew2, eb2 = params["edge_layers"][l]
        x_edge = pallas_fused_mlp([x_edge, x_node[src], x_node[dst]],
                                  _split_rows(ew1, hidden, 3), eb1, ew2, eb2)
        skip_edge.append(x_edge)

    # output heads: skip concat folded into K-block accumulation; 128-lane-padded
    # weight slabs give lane-dense stores.
    wno, bno = params["node_out"]
    out_node = pallas_fused_linear_padded(
        skip_node, _split_rows(wno, hidden, num_layers + 1), bno)
    weo, beo = params["edge_out"]
    out_edge = pallas_fused_linear_padded(
        skip_edge, _split_rows(weo, hidden, num_layers + 1), beo)
    out_edge = coalesce_mean(edge_index, out_edge)
    return out_node, out_edge


# ----------------------------------------------------------------------------
# main
# ----------------------------------------------------------------------------
if __name__ == "__main__":
    NODE_IN, EDGE_IN = 8, 8
    NODE_OUT, EDGE_OUT = 4, 2
    EMB, HIDDEN, NUM_LAYERS = 32, 32, 2

    key = jax.random.PRNGKey(0)
    kp, k1, k2, k3, k4, k5, k6 = jax.random.split(key, 7)

    params = init_params(kp, NODE_IN, EDGE_IN, NODE_OUT, EDGE_OUT,
                         EMB, HIDDEN, NUM_LAYERS)

    # two ring graphs of 6 nodes each; both edge directions present
    def ring(offset, n):
        i = jnp.arange(n)
        s = i + offset
        d = (i + 1) % n + offset
        return jnp.concatenate([s, d]), jnp.concatenate([d, s])

    s0, d0 = ring(0, 6)
    s1, d1 = ring(6, 6)
    edge_index = jnp.stack([jnp.concatenate([s0, s1]),
                            jnp.concatenate([d0, d1])]).astype(jnp.int32)   # (2, 24)
    num_nodes, num_edges, num_graphs = 12, 24, 2
    batch = jnp.concatenate([jnp.zeros(6, jnp.int32), jnp.ones(6, jnp.int32)])

    node_attr = jax.random.normal(k1, (num_nodes, NODE_IN), jnp.float32)
    edge_attr = jax.random.normal(k2, (num_edges, EDGE_IN), jnp.float32)
    node_emb = jax.random.normal(k3, (num_nodes, EMB), jnp.float32)
    noise_cond = jax.random.uniform(k4, (num_graphs,), jnp.float32)
    red_frac = jax.random.uniform(k5, (num_graphs,), jnp.float32)
    target_size = jnp.array([6.0, 6.0], jnp.float32) + jax.random.uniform(
        k6, (num_graphs,), jnp.float32)

    fwd = jax.jit(functools.partial(gine_forward, emb=EMB, hidden=HIDDEN,
                                    num_layers=NUM_LAYERS))
    out_node, out_edge = fwd(params, edge_index, batch, node_attr, edge_attr,
                             node_emb, noise_cond, red_frac, target_size)
    jax.block_until_ready((out_node, out_edge))

    assert out_node.shape == (num_nodes, NODE_OUT)
    assert out_edge.shape == (num_edges, EDGE_OUT)
    assert jnp.all(jnp.isfinite(out_node)) and jnp.all(jnp.isfinite(out_edge))
    print("KERNEL_OK")
</pallas_src>

<mosaic_0001>
module attributes {stable_mosaic.version = 11 : i64} {
  func.func @_fused_linear_kernel(%arg0: i32, %arg1: memref<24x8xf32, #tpu.memory_space<vmem>>, %arg2: memref<8x32xbf16, #tpu.memory_space<vmem>>, %arg3: memref<1x32xf32, #tpu.memory_space<vmem>>, %arg4: memref<24x32xf32, #tpu.memory_space<vmem>>) attributes {dimension_semantics = [#tpu.dimension_semantics<parallel>], iteration_bounds = array<i64: 1>, scalar_prefetch = 0 : i64, scratch_operands = 0 : i64, tpu.core_type = #tpu.core_type<tc>, window_params = [{transform_indices = @transform_0, window_bounds = array<i64: 24, 8>}, {pipeline_mode = #tpu.pipeline_mode<synchronous>, transform_indices = @transform_1, window_bounds = array<i64: 8, 32>}, {pipeline_mode = #tpu.pipeline_mode<synchronous>, transform_indices = @transform_2, window_bounds = array<i64: 1, 32>}, {transform_indices = @transform_3, window_bounds = array<i64: 24, 32>}]} {
    %c0 = arith.constant 0 : index
    %c0_0 = arith.constant 0 : index
    %0 = vector.load %arg3[%c0, %c0_0] : memref<1x32xf32, #tpu.memory_space<vmem>>, vector<1x32xf32>
    %c0_1 = arith.constant 0 : index
    %c0_2 = arith.constant 0 : index
    %1 = vector.load %arg1[%c0_1, %c0_2] : memref<24x8xf32, #tpu.memory_space<vmem>>, vector<24x8xf32>
    %2 = arith.truncf %1 : vector<24x8xf32> to vector<24x8xbf16>
    %c0_3 = arith.constant 0 : index
    %c0_4 = arith.constant 0 : index
    %3 = vector.load %arg2[%c0_3, %c0_4] : memref<8x32xbf16, #tpu.memory_space<vmem>>, vector<8x32xbf16>
    %cst = arith.constant dense<0.000000e+00> : vector<24x32xf32>
    %4 = tpu.matmul %2, %3, %cst {dimension_numbers = #tpu.dot_dimension_numbers<[1], [0], [0], [1], [0, 0, 1, 1], [], []>} : vector<24x8xbf16>, vector<8x32xbf16>, vector<24x32xf32> -> vector<24x32xf32>
    %5 = vector.broadcast %0 : vector<1x32xf32> to vector<24x32xf32>
    %6 = arith.addf %5, %4 : vector<24x32xf32>
    %c0_5 = arith.constant 0 : index
    %c0_6 = arith.constant 0 : index
    %7 = vector.load %arg4[%c0_5, %c0_6] : memref<24x32xf32, #tpu.memory_space<vmem>>, vector<24x32xf32>
    tpu.vector_store %arg4[%c0_5, %c0_6], %6 {strides = array<i32>} : memref<24x32xf32, #tpu.memory_space<vmem>>, vector<24x32xf32>,
    return
  }
  func.func @transform_0(%arg0: i32) -> (i32, i32) {
    %c0_i32 = arith.constant 0 : i32
    %c0_i32_0 = arith.constant 0 : i32
    return %arg0, %c0_i32 : i32, i32
  }
  func.func @transform_1(%arg0: i32) -> (i32, i32) {
    %c0_i32 = arith.constant 0 : i32
    %c0_i32_0 = arith.constant 0 : i32
    %c0_i32_1 = arith.constant 0 : i32
    return %c0_i32, %c0_i32_0 : i32, i32
  }
  func.func @transform_2(%arg0: i32) -> (i32, i32) {
    %c0_i32 = arith.constant 0 : i32
    %c0_i32_0 = arith.constant 0 : i32
    %c0_i32_1 = arith.constant 0 : i32
    return %c0_i32, %c0_i32_0 : i32, i32
  }
  func.func @transform_3(%arg0: i32) -> (i32, i32) {
    %c0_i32 = arith.constant 0 : i32
    %c0_i32_0 = arith.constant 0 : i32
    return %arg0, %c0_i32 : i32, i32
  }
}

module attributes {stable_mosaic.version = 11 : i64} {
  func.func @_fused_mlp_kernel(%arg0: i32, %arg1: memref<24x32xf32, #tpu.memory_space<vmem>>, %arg2: memref<24x32xf32, #tpu.memory_space<vmem>>, %arg3: memref<24x32xf32, #tpu.memory_space<vmem>>, %arg4: memref<24x32xf32, #tpu.memory_space<vmem>>, %arg5: memref<24x32xf32, #tpu.memory_space<vmem>>, %arg6: memref<24x32xf32, #tpu.memory_space<vmem>>, %arg7: memref<32x32xbf16, #tpu.memory_space<vmem>>, %arg8: memref<32x32xbf16, #tpu.memory_space<vmem>>, %arg9: memref<32x32xbf16, #tpu.memory_space<vmem>>, %arg10: memref<32x32xbf16, #tpu.memory_space<vmem>>, %arg11: memref<32x32xbf16, #tpu.memory_space<vmem>>, %arg12: memref<32x32xbf16, #tpu.memory_space<vmem>>, %arg13: memref<1x32xf32, #tpu.memory_space<vmem>>, %arg14: memref<32x32xbf16, #tpu.memory_space<vmem>>, %arg15: memref<1x32xf32, #tpu.memory_space<vmem>>, %arg16: memref<24x32xf32, #tpu.memory_space<vmem>>) attributes {dimension_semantics = [#tpu.dimension_semantics<parallel>], iteration_bounds = array<i64: 1>, scalar_prefetch = 0 : i64, scratch_operands = 0 : i64, tpu.core_type = #tpu.core_type<tc>, window_params = [{transform_indices = @transform_0, window_bounds = array<i64: 24, 32>}, {transform_indices = @transform_1, window_bounds = array<i64: 24, 32>}, {transform_indices = @transform_2, window_bounds = array<i64: 24, 32>}, {transform_indices = @transform_3, window_bounds = array<i64: 24, 32>}, {transform_indices = @transform_4, window_bounds = array<i64: 24, 32>}, {transform_indices = @transform_5, window_bounds = array<i64: 24, 32>}, {pipeline_mode = #tpu.pipeline_mode<synchronous>, transform_indices = @transform_6, window_bounds = array<i64: 32, 32>}, {pipeline_mode = #tpu.pipeline_mode<synchronous>, transform_indices = @transform_7, window_bounds = array<i64: 32, 32>}, {pipeline_mode = #tpu.pipeline_mode<synchronous>, transform_indices = @transform_8, window_bounds = array<i64: 32, 32>}, {pipeline_mode = #tpu.pipeline_mode<synchronous>, transform_indices = @transform_9, window_bounds = array<i64: 32, 32>}, {pipeline_mode = #tpu.pipeline_mode<synchronous>, transform_indices = @transform_10, window_bounds = array<i64: 32, 32>}, {pipeline_mode = #tpu.pipeline_mode<synchronous>, transform_indices = @transform_11, window_bounds = array<i64: 32, 32>}, {pipeline_mode = #tpu.pipeline_mode<synchronous>, transform_indices = @transform_12, window_bounds = array<i64: 1, 32>}, {pipeline_mode = #tpu.pipeline_mode<synchronous>, transform_indices = @transform_13, window_bounds = array<i64: 32, 32>}, {pipeline_mode = #tpu.pipeline_mode<synchronous>, transform_indices = @transform_14, window_bounds = array<i64: 1, 32>}, {transform_indices = @transform_15, window_bounds = array<i64: 24, 32>}]} {
    %c0 = arith.constant 0 : index
    %c0_0 = arith.constant 0 : index
    %0 = vector.load %arg13[%c0, %c0_0] : memref<1x32xf32, #tpu.memory_space<vmem>>, vector<1x32xf32>
    %c0_1 = arith.constant 0 : index
    %c0_2 = arith.constant 0 : index
    %1 = vector.load %arg1[%c0_1, %c0_2] : memref<24x32xf32, #tpu.memory_space<vmem>>, vector<24x32xf32>
    %2 = arith.truncf %1 : vector<24x32xf32> to vector<24x32xbf16>
    %c0_3 = arith.constant 0 : index
    %c0_4 = arith.constant 0 : index
    %3 = vector.load %arg7[%c0_3, %c0_4] : memref<32x32xbf16, #tpu.memory_space<vmem>>, vector<32x32xbf16>
    %cst = arith.constant dense<0.000000e+00> : vector<24x32xf32>
    %4 = tpu.matmul %2, %3, %cst {dimension_numbers = #tpu.dot_dimension_numbers<[1], [0], [0], [1], [0, 0, 1, 1], [], []>} : vector<24x32xbf16>, vector<32x32xbf16>, vector<24x32xf32> -> vector<24x32xf32>
    %5 = vector.broadcast %0 : vector<1x32xf32> to vector<24x32xf32>
    %6 = arith.addf %5, %4 : vector<24x32xf32>
    %c0_5 = arith.constant 0 : index
    %c0_6 = arith.constant 0 : index
    %7 = vector.load %arg2[%c0_5, %c0_6] : memref<24x32xf32, #tpu.memory_space<vmem>>, vector<24x32xf32>
    %8 = arith.truncf %7 : vector<24x32xf32> to vector<24x32xbf16>
    %c0_7 = arith.constant 0 : index
    %c0_8 = arith.constant 0 : index
    %9 = vector.load %arg8[%c0_7, %c0_8] : memref<32x32xbf16, #tpu.memory_space<vmem>>, vector<32x32xbf16>
    %cst_9 = arith.constant dense<0.000000e+00> : vector<24x32xf32>
    %10 = tpu.matmul %8, %9, %cst_9 {dimension_numbers = #tpu.dot_dimension_numbers<[1], [0], [0], [1], [0, 0, 1, 1], [], []>} : vector<24x32xbf16>, vector<32x32xbf16>, vector<24x32xf32> -> vector<24x32xf32>
    %11 = arith.addf %6, %10 : vector<24x32xf32>
    %c0_10 = arith.constant 0 : index
    %c0_11 = arith.constant 0 : index
    %12 = vector.load %arg3[%c0_10, %c0_11] : memref<24x32xf32, #tpu.memory_space<vmem>>, vector<24x32xf32>
    %13 = arith.truncf %12 : vector<24x32xf32> to vector<24x32xbf16>
    %c0_12 = arith.constant 0 : index
    %c0_13 = arith.constant 0 : index
    %14 = vector.load %arg9[%c0_12, %c0_13] : memref<32x32xbf16, #tpu.memory_space<vmem>>, vector<32x32xbf16>
    %cst_14 = arith.constant dense<0.000000e+00> : vector<24x32xf32>
    %15 = tpu.matmul %13, %14, %cst_14 {dimension_numbers = #tpu.dot_dimension_numbers<[1], [0], [0], [1], [0, 0, 1, 1], [], []>} : vector<24x32xbf16>, vector<32x32xbf16>, vector<24x32xf32> -> vector<24x32xf32>
    %16 = arith.addf %11, %15 : vector<24x32xf32>
    %c0_15 = arith.constant 0 : index
    %c0_16 = arith.constant 0 : index
    %17 = vector.load %arg4[%c0_15, %c0_16] : memref<24x32xf32, #tpu.memory_space<vmem>>, vector<24x32xf32>
    %18 = arith.truncf %17 : vector<24x32xf32> to vector<24x32xbf16>
    %c0_17 = arith.constant 0 : index
    %c0_18 = arith.constant 0 : index
    %19 = vector.load %arg10[%c0_17, %c0_18] : memref<32x32xbf16, #tpu.memory_space<vmem>>, vector<32x32xbf16>
    %cst_19 = arith.constant dense<0.000000e+00> : vector<24x32xf32>
    %20 = tpu.matmul %18, %19, %cst_19 {dimension_numbers = #tpu.dot_dimension_numbers<[1], [0], [0], [1], [0, 0, 1, 1], [], []>} : vector<24x32xbf16>, vector<32x32xbf16>, vector<24x32xf32> -> vector<24x32xf32>
    %21 = arith.addf %16, %20 : vector<24x32xf32>
    %c0_20 = arith.constant 0 : index
    %c0_21 = arith.constant 0 : index
    %22 = vector.load %arg5[%c0_20, %c0_21] : memref<24x32xf32, #tpu.memory_space<vmem>>, vector<24x32xf32>
    %23 = arith.truncf %22 : vector<24x32xf32> to vector<24x32xbf16>
    %c0_22 = arith.constant 0 : index
    %c0_23 = arith.constant 0 : index
    %24 = vector.load %arg11[%c0_22, %c0_23] : memref<32x32xbf16, #tpu.memory_space<vmem>>, vector<32x32xbf16>
    %cst_24 = arith.constant dense<0.000000e+00> : vector<24x32xf32>
    %25 = tpu.matmul %23, %24, %cst_24 {dimension_numbers = #tpu.dot_dimension_numbers<[1], [0], [0], [1], [0, 0, 1, 1], [], []>} : vector<24x32xbf16>, vector<32x32xbf16>, vector<24x32xf32> -> vector<24x32xf32>
    %26 = arith.addf %21, %25 : vector<24x32xf32>
    %c0_25 = arith.constant 0 : index
    %c0_26 = arith.constant 0 : index
    %27 = vector.load %arg6[%c0_25, %c0_26] : memref<24x32xf32, #tpu.memory_space<vmem>>, vector<24x32xf32>
    %28 = arith.truncf %27 : vector<24x32xf32> to vector<24x32xbf16>
    %c0_27 = arith.constant 0 : index
    %c0_28 = arith.constant 0 : index
    %29 = vector.load %arg12[%c0_27, %c0_28] : memref<32x32xbf16, #tpu.memory_space<vmem>>, vector<32x32xbf16>
    %cst_29 = arith.constant dense<0.000000e+00> : vector<24x32xf32>
    %30 = tpu.matmul %28, %29, %cst_29 {dimension_numbers = #tpu.dot_dimension_numbers<[1], [0], [0], [1], [0, 0, 1, 1], [], []>} : vector<24x32xbf16>, vector<32x32xbf16>, vector<24x32xf32> -> vector<24x32xf32>
    %31 = arith.addf %26, %30 : vector<24x32xf32>
    %cst_30 = arith.constant 0.000000e+00 : f32
    %32 = vector.broadcast %cst_30 : f32 to vector<24x32xf32>
    %33 = arith.maximumf %31, %32 : vector<24x32xf32>
    %34 = arith.truncf %33 : vector<24x32xf32> to vector<24x32xbf16>
    %c0_31 = arith.constant 0 : index
    %c0_32 = arith.constant 0 : index
    %35 = vector.load %arg14[%c0_31, %c0_32] : memref<32x32xbf16, #tpu.memory_space<vmem>>, vector<32x32xbf16>
    %cst_33 = arith.constant dense<0.000000e+00> : vector<24x32xf32>
    %36 = tpu.matmul %34, %35, %cst_33 {dimension_numbers = #tpu.dot_dimension_numbers<[1], [0], [0], [1], [0, 0, 1, 1], [], []>} : vector<24x32xbf16>, vector<32x32xbf16>, vector<24x32xf32> -> vector<24x32xf32>
    %c0_34 = arith.constant 0 : index
    %c0_35 = arith.constant 0 : index
    %37 = vector.load %arg15[%c0_34, %c0_35] : memref<1x32xf32, #tpu.memory_space<vmem>>, vector<1x32xf32>
    %38 = vector.broadcast %37 : vector<1x32xf32> to vector<24x32xf32>
    %39 = arith.addf %36, %38 : vector<24x32xf32>
    %c0_36 = arith.constant 0 : index
    %c0_37 = arith.constant 0 : index
    %40 = vector.load %arg16[%c0_36, %c0_37] : memref<24x32xf32, #tpu.memory_space<vmem>>, vector<24x32xf32>
    tpu.vector_store %arg16[%c0_36, %c0_37], %39 {strides = array<i32>} : memref<24x32xf32, #tpu.memory_space<vmem>>, vector<24x32xf32>,
    return
  }
  func.func @transform_0(%arg0: i32) -> (i32, i32) {
    %c0_i32 = arith.constant 0 : i32
    %c0_i32_0 = arith.constant 0 : i32
    return %arg0, %c0_i32 : i32, i32
  }
  func.func @transform_1(%arg0: i32) -> (i32, i32) {
    %c0_i32 = arith.constant 0 : i32
    %c0_i32_0 = arith.constant 0 : i32
    return %arg0, %c0_i32 : i32, i32
  }
  func.func @transform_2(%arg0: i32) -> (i32, i32) {
    %c0_i32 = arith.constant 0 : i32
    %c0_i32_0 = arith.constant 0 : i32
    return %arg0, %c0_i32 : i32, i32
  }
  func.func @transform_3(%arg0: i32) -> (i32, i32) {
    %c0_i32 = arith.constant 0 : i32
    %c0_i32_0 = arith.constant 0 : i32
    return %arg0, %c0_i32 : i32, i32
  }
  func.func @transform_4(%arg0: i32) -> (i32, i32) {
    %c0_i32 = arith.constant 0 : i32
    %c0_i32_0 = arith.constant 0 : i32
    return %arg0, %c0_i32 : i32, i32
  }
  func.func @transform_5(%arg0: i32) -> (i32, i32) {
    %c0_i32 = arith.constant 0 : i32
    %c0_i32_0 = arith.constant 0 : i32
    return %arg0, %c0_i32 : i32, i32
  }
  func.func @transform_6(%arg0: i32) -> (i32, i32) {
    %c0_i32 = arith.constant 0 : i32
    %c0_i32_0 = arith.constant 0 : i32
    %c0_i32_1 = arith.constant 0 : i32
    return %c0_i32, %c0_i32_0 : i32, i32
  }
  func.func @transform_7(%arg0: i32) -> (i32, i32) {
    %c0_i32 = arith.constant 0 : i32
    %c0_i32_0 = arith.constant 0 : i32
    %c0_i32_1 = arith.constant 0 : i32
    return %c0_i32, %c0_i32_0 : i32, i32
  }
  func.func @transform_8(%arg0: i32) -> (i32, i32) {
    %c0_i32 = arith.constant 0 : i32
    %c0_i32_0 = arith.constant 0 : i32
    %c0_i32_1 = arith.constant 0 : i32
    return %c0_i32, %c0_i32_0 : i32, i32
  }
  func.func @transform_9(%arg0: i32) -> (i32, i32) {
    %c0_i32 = arith.constant 0 : i32
    %c0_i32_0 = arith.constant 0 : i32
    %c0_i32_1 = arith.constant 0 : i32
    return %c0_i32, %c0_i32_0 : i32, i32
  }
  func.func @transform_10(%arg0: i32) -> (i32, i32) {
    %c0_i32 = arith.constant 0 : i32
    %c0_i32_0 = arith.constant 0 : i32
    %c0_i32_1 = arith.constant 0 : i32
    return %c0_i32, %c0_i32_0 : i32, i32
  }
  func.func @transform_11(%arg0: i32) -> (i32, i32) {
    %c0_i32 = arith.constant 0 : i32
    %c0_i32_0 = arith.constant 0 : i32
    %c0_i32_1 = arith.constant 0 : i32
    return %c0_i32, %c0_i32_0 : i32, i32
  }
  func.func @transform_12(%arg0: i32) -> (i32, i32) {
    %c0_i32 = arith.constant 0 : i32
    %c0_i32_0 = arith.constant 0 : i32
    %c0_i32_1 = arith.constant 0 : i32
    return %c0_i32, %c0_i32_0 : i32, i32
  }
  func.func @transform_13(%arg0: i32) -> (i32, i32) {
    %c0_i32 = arith.constant 0 : i32
    %c0_i32_0 = arith.constant 0 : i32
    %c0_i32_1 = arith.constant 0 : i32
    return %c0_i32, %c0_i32_0 : i32, i32
  }
  func.func @transform_14(%arg0: i32) -> (i32, i32) {
    %c0_i32 = arith.constant 0 : i32
    %c0_i32_0 = arith.constant 0 : i32
    %c0_i32_1 = arith.constant 0 : i32
    return %c0_i32, %c0_i32_0 : i32, i32
  }
  func.func @transform_15(%arg0: i32) -> (i32, i32) {
    %c0_i32 = arith.constant 0 : i32
    %c0_i32_0 = arith.constant 0 : i32
    return %arg0, %c0_i32 : i32, i32
  }
}

module attributes {stable_mosaic.version = 11 : i64} {
  func.func @_fused_linear_kernel(%arg0: i32, %arg1: memref<12x8xf32, #tpu.memory_space<vmem>>, %arg2: memref<8x32xbf16, #tpu.memory_space<vmem>>, %arg3: memref<1x32xf32, #tpu.memory_space<vmem>>, %arg4: memref<12x32xf32, #tpu.memory_space<vmem>>) attributes {dimension_semantics = [#tpu.dimension_semantics<parallel>], iteration_bounds = array<i64: 1>, scalar_prefetch = 0 : i64, scratch_operands = 0 : i64, tpu.core_type = #tpu.core_type<tc>, window_params = [{transform_indices = @transform_0, window_bounds = array<i64: 12, 8>}, {pipeline_mode = #tpu.pipeline_mode<synchronous>, transform_indices = @transform_1, window_bounds = array<i64: 8, 32>}, {pipeline_mode = #tpu.pipeline_mode<synchronous>, transform_indices = @transform_2, window_bounds = array<i64: 1, 32>}, {transform_indices = @transform_3, window_bounds = array<i64: 12, 32>}]} {
    %c0 = arith.constant 0 : index
    %c0_0 = arith.constant 0 : index
    %0 = vector.load %arg3[%c0, %c0_0] : memref<1x32xf32, #tpu.memory_space<vmem>>, vector<1x32xf32>
    %c0_1 = arith.constant 0 : index
    %c0_2 = arith.constant 0 : index
    %1 = vector.load %arg1[%c0_1, %c0_2] : memref<12x8xf32, #tpu.memory_space<vmem>>, vector<12x8xf32>
    %2 = arith.truncf %1 : vector<12x8xf32> to vector<12x8xbf16>
    %c0_3 = arith.constant 0 : index
    %c0_4 = arith.constant 0 : index
    %3 = vector.load %arg2[%c0_3, %c0_4] : memref<8x32xbf16, #tpu.memory_space<vmem>>, vector<8x32xbf16>
    %cst = arith.constant dense<0.000000e+00> : vector<12x32xf32>
    %4 = tpu.matmul %2, %3, %cst {dimension_numbers = #tpu.dot_dimension_numbers<[1], [0], [0], [1], [0, 0, 1, 1], [], []>} : vector<12x8xbf16>, vector<8x32xbf16>, vector<12x32xf32> -> vector<12x32xf32>
    %5 = vector.broadcast %0 : vector<1x32xf32> to vector<12x32xf32>
    %6 = arith.addf %5, %4 : vector<12x32xf32>
    %c0_5 = arith.constant 0 : index
    %c0_6 = arith.constant 0 : index
    %7 = vector.load %arg4[%c0_5, %c0_6] : memref<12x32xf32, #tpu.memory_space<vmem>>, vector<12x32xf32>
    tpu.vector_store %arg4[%c0_5, %c0_6], %6 {strides = array<i32>} : memref<12x32xf32, #tpu.memory_space<vmem>>, vector<12x32xf32>,
    return
  }
  func.func @transform_0(%arg0: i32) -> (i32, i32) {
    %c0_i32 = arith.constant 0 : i32
    %c0_i32_0 = arith.constant 0 : i32
    return %arg0, %c0_i32 : i32, i32
  }
  func.func @transform_1(%arg0: i32) -> (i32, i32) {
    %c0_i32 = arith.constant 0 : i32
    %c0_i32_0 = arith.constant 0 : i32
    %c0_i32_1 = arith.constant 0 : i32
    return %c0_i32, %c0_i32_0 : i32, i32
  }
  func.func @transform_2(%arg0: i32) -> (i32, i32) {
    %c0_i32 = arith.constant 0 : i32
    %c0_i32_0 = arith.constant 0 : i32
    %c0_i32_1 = arith.constant 0 : i32
    return %c0_i32, %c0_i32_0 : i32, i32
  }
  func.func @transform_3(%arg0: i32) -> (i32, i32) {
    %c0_i32 = arith.constant 0 : i32
    %c0_i32_0 = arith.constant 0 : i32
    return %arg0, %c0_i32 : i32, i32
  }
}

module attributes {stable_mosaic.version = 11 : i64} {
  func.func @_fused_mlp_kernel(%arg0: i32, %arg1: memref<12x32xf32, #tpu.memory_space<vmem>>, %arg2: memref<12x32xf32, #tpu.memory_space<vmem>>, %arg3: memref<12x32xf32, #tpu.memory_space<vmem>>, %arg4: memref<12x32xf32, #tpu.memory_space<vmem>>, %arg5: memref<12x32xf32, #tpu.memory_space<vmem>>, %arg6: memref<32x32xbf16, #tpu.memory_space<vmem>>, %arg7: memref<32x32xbf16, #tpu.memory_space<vmem>>, %arg8: memref<32x32xbf16, #tpu.memory_space<vmem>>, %arg9: memref<32x32xbf16, #tpu.memory_space<vmem>>, %arg10: memref<32x32xbf16, #tpu.memory_space<vmem>>, %arg11: memref<1x32xf32, #tpu.memory_space<vmem>>, %arg12: memref<32x32xbf16, #tpu.memory_space<vmem>>, %arg13: memref<1x32xf32, #tpu.memory_space<vmem>>, %arg14: memref<12x32xf32, #tpu.memory_space<vmem>>) attributes {dimension_semantics = [#tpu.dimension_semantics<parallel>], iteration_bounds = array<i64: 1>, scalar_prefetch = 0 : i64, scratch_operands = 0 : i64, tpu.core_type = #tpu.core_type<tc>, window_params = [{transform_indices = @transform_0, window_bounds = array<i64: 12, 32>}, {transform_indices = @transform_1, window_bounds = array<i64: 12, 32>}, {transform_indices = @transform_2, window_bounds = array<i64: 12, 32>}, {transform_indices = @transform_3, window_bounds = array<i64: 12, 32>}, {transform_indices = @transform_4, window_bounds = array<i64: 12, 32>}, {pipeline_mode = #tpu.pipeline_mode<synchronous>, transform_indices = @transform_5, window_bounds = array<i64: 32, 32>}, {pipeline_mode = #tpu.pipeline_mode<synchronous>, transform_indices = @transform_6, window_bounds = array<i64: 32, 32>}, {pipeline_mode = #tpu.pipeline_mode<synchronous>, transform_indices = @transform_7, window_bounds = array<i64: 32, 32>}, {pipeline_mode = #tpu.pipeline_mode<synchronous>, transform_indices = @transform_8, window_bounds = array<i64: 32, 32>}, {pipeline_mode = #tpu.pipeline_mode<synchronous>, transform_indices = @transform_9, window_bounds = array<i64: 32, 32>}, {pipeline_mode = #tpu.pipeline_mode<synchronous>, transform_indices = @transform_10, window_bounds = array<i64: 1, 32>}, {pipeline_mode = #tpu.pipeline_mode<synchronous>, transform_indices = @transform_11, window_bounds = array<i64: 32, 32>}, {pipeline_mode = #tpu.pipeline_mode<synchronous>, transform_indices = @transform_12, window_bounds = array<i64: 1, 32>}, {transform_indices = @transform_13, window_bounds = array<i64: 12, 32>}]} {
    %c0 = arith.constant 0 : index
    %c0_0 = arith.constant 0 : index
    %0 = vector.load %arg11[%c0, %c0_0] : memref<1x32xf32, #tpu.memory_space<vmem>>, vector<1x32xf32>
    %c0_1 = arith.constant 0 : index
    %c0_2 = arith.constant 0 : index
    %1 = vector.load %arg1[%c0_1, %c0_2] : memref<12x32xf32, #tpu.memory_space<vmem>>, vector<12x32xf32>
    %2 = arith.truncf %1 : vector<12x32xf32> to vector<12x32xbf16>
    %c0_3 = arith.constant 0 : index
    %c0_4 = arith.constant 0 : index
    %3 = vector.load %arg6[%c0_3, %c0_4] : memref<32x32xbf16, #tpu.memory_space<vmem>>, vector<32x32xbf16>
    %cst = arith.constant dense<0.000000e+00> : vector<12x32xf32>
    %4 = tpu.matmul %2, %3, %cst {dimension_numbers = #tpu.dot_dimension_numbers<[1], [0], [0], [1], [0, 0, 1, 1], [], []>} : vector<12x32xbf16>, vector<32x32xbf16>, vector<12x32xf32> -> vector<12x32xf32>
    %5 = vector.broadcast %0 : vector<1x32xf32> to vector<12x32xf32>
    %6 = arith.addf %5, %4 : vector<12x32xf32>
    %c0_5 = arith.constant 0 : index
    %c0_6 = arith.constant 0 : index
    %7 = vector.load %arg2[%c0_5, %c0_6] : memref<12x32xf32, #tpu.memory_space<vmem>>, vector<12x32xf32>
    %8 = arith.truncf %7 : vector<12x32xf32> to vector<12x32xbf16>
    %c0_7 = arith.constant 0 : index
    %c0_8 = arith.constant 0 : index
    %9 = vector.load %arg7[%c0_7, %c0_8] : memref<32x32xbf16, #tpu.memory_space<vmem>>, vector<32x32xbf16>
    %cst_9 = arith.constant dense<0.000000e+00> : vector<12x32xf32>
    %10 = tpu.matmul %8, %9, %cst_9 {dimension_numbers = #tpu.dot_dimension_numbers<[1], [0], [0], [1], [0, 0, 1, 1], [], []>} : vector<12x32xbf16>, vector<32x32xbf16>, vector<12x32xf32> -> vector<12x32xf32>
    %11 = arith.addf %6, %10 : vector<12x32xf32>
    %c0_10 = arith.constant 0 : index
    %c0_11 = arith.constant 0 : index
    %12 = vector.load %arg3[%c0_10, %c0_11] : memref<12x32xf32, #tpu.memory_space<vmem>>, vector<12x32xf32>
    %13 = arith.truncf %12 : vector<12x32xf32> to vector<12x32xbf16>
    %c0_12 = arith.constant 0 : index
    %c0_13 = arith.constant 0 : index
    %14 = vector.load %arg8[%c0_12, %c0_13] : memref<32x32xbf16, #tpu.memory_space<vmem>>, vector<32x32xbf16>
    %cst_14 = arith.constant dense<0.000000e+00> : vector<12x32xf32>
    %15 = tpu.matmul %13, %14, %cst_14 {dimension_numbers = #tpu.dot_dimension_numbers<[1], [0], [0], [1], [0, 0, 1, 1], [], []>} : vector<12x32xbf16>, vector<32x32xbf16>, vector<12x32xf32> -> vector<12x32xf32>
    %16 = arith.addf %11, %15 : vector<12x32xf32>
    %c0_15 = arith.constant 0 : index
    %c0_16 = arith.constant 0 : index
    %17 = vector.load %arg4[%c0_15, %c0_16] : memref<12x32xf32, #tpu.memory_space<vmem>>, vector<12x32xf32>
    %18 = arith.truncf %17 : vector<12x32xf32> to vector<12x32xbf16>
    %c0_17 = arith.constant 0 : index
    %c0_18 = arith.constant 0 : index
    %19 = vector.load %arg9[%c0_17, %c0_18] : memref<32x32xbf16, #tpu.memory_space<vmem>>, vector<32x32xbf16>
    %cst_19 = arith.constant dense<0.000000e+00> : vector<12x32xf32>
    %20 = tpu.matmul %18, %19, %cst_19 {dimension_numbers = #tpu.dot_dimension_numbers<[1], [0], [0], [1], [0, 0, 1, 1], [], []>} : vector<12x32xbf16>, vector<32x32xbf16>, vector<12x32xf32> -> vector<12x32xf32>
    %21 = arith.addf %16, %20 : vector<12x32xf32>
    %c0_20 = arith.constant 0 : index
    %c0_21 = arith.constant 0 : index
    %22 = vector.load %arg5[%c0_20, %c0_21] : memref<12x32xf32, #tpu.memory_space<vmem>>, vector<12x32xf32>
    %23 = arith.truncf %22 : vector<12x32xf32> to vector<12x32xbf16>
    %c0_22 = arith.constant 0 : index
    %c0_23 = arith.constant 0 : index
    %24 = vector.load %arg10[%c0_22, %c0_23] : memref<32x32xbf16, #tpu.memory_space<vmem>>, vector<32x32xbf16>
    %cst_24 = arith.constant dense<0.000000e+00> : vector<12x32xf32>
    %25 = tpu.matmul %23, %24, %cst_24 {dimension_numbers = #tpu.dot_dimension_numbers<[1], [0], [0], [1], [0, 0, 1, 1], [], []>} : vector<12x32xbf16>, vector<32x32xbf16>, vector<12x32xf32> -> vector<12x32xf32>
    %26 = arith.addf %21, %25 : vector<12x32xf32>
    %cst_25 = arith.constant 0.000000e+00 : f32
    %27 = vector.broadcast %cst_25 : f32 to vector<12x32xf32>
    %28 = arith.maximumf %26, %27 : vector<12x32xf32>
    %29 = arith.truncf %28 : vector<12x32xf32> to vector<12x32xbf16>
    %c0_26 = arith.constant 0 : index
    %c0_27 = arith.constant 0 : index
    %30 = vector.load %arg12[%c0_26, %c0_27] : memref<32x32xbf16, #tpu.memory_space<vmem>>, vector<32x32xbf16>
    %cst_28 = arith.constant dense<0.000000e+00> : vector<12x32xf32>
    %31 = tpu.matmul %29, %30, %cst_28 {dimension_numbers = #tpu.dot_dimension_numbers<[1], [0], [0], [1], [0, 0, 1, 1], [], []>} : vector<12x32xbf16>, vector<32x32xbf16>, vector<12x32xf32> -> vector<12x32xf32>
    %c0_29 = arith.constant 0 : index
    %c0_30 = arith.constant 0 : index
    %32 = vector.load %arg13[%c0_29, %c0_30] : memref<1x32xf32, #tpu.memory_space<vmem>>, vector<1x32xf32>
    %33 = vector.broadcast %32 : vector<1x32xf32> to vector<12x32xf32>
    %34 = arith.addf %31, %33 : vector<12x32xf32>
    %c0_31 = arith.constant 0 : index
    %c0_32 = arith.constant 0 : index
    %35 = vector.load %arg14[%c0_31, %c0_32] : memref<12x32xf32, #tpu.memory_space<vmem>>, vector<12x32xf32>
    tpu.vector_store %arg14[%c0_31, %c0_32], %34 {strides = array<i32>} : memref<12x32xf32, #tpu.memory_space<vmem>>, vector<12x32xf32>,
    return
  }
  func.func @transform_0(%arg0: i32) -> (i32, i32) {
    %c0_i32 = arith.constant 0 : i32
    %c0_i32_0 = arith.constant 0 : i32
    return %arg0, %c0_i32 : i32, i32
  }
  func.func @transform_1(%arg0: i32) -> (i32, i32) {
    %c0_i32 = arith.constant 0 : i32
    %c0_i32_0 = arith.constant 0 : i32
    return %arg0, %c0_i32 : i32, i32
  }
  func.func @transform_2(%arg0: i32) -> (i32, i32) {
    %c0_i32 = arith.constant 0 : i32
    %c0_i32_0 = arith.constant 0 : i32
    return %arg0, %c0_i32 : i32, i32
  }
  func.func @transform_3(%arg0: i32) -> (i32, i32) {
    %c0_i32 = arith.constant 0 : i32
    %c0_i32_0 = arith.constant 0 : i32
    return %arg0, %c0_i32 : i32, i32
  }
  func.func @transform_4(%arg0: i32) -> (i32, i32) {
    %c0_i32 = arith.constant 0 : i32
    %c0_i32_0 = arith.constant 0 : i32
    return %arg0, %c0_i32 : i32, i32
  }
  func.func @transform_5(%arg0: i32) -> (i32, i32) {
    %c0_i32 = arith.constant 0 : i32
    %c0_i32_0 = arith.constant 0 : i32
    %c0_i32_1 = arith.constant 0 : i32
    return %c0_i32, %c0_i32_0 : i32, i32
  }
  func.func @transform_6(%arg0: i32) -> (i32, i32) {
    %c0_i32 = arith.constant 0 : i32
    %c0_i32_0 = arith.constant 0 : i32
    %c0_i32_1 = arith.constant 0 : i32
    return %c0_i32, %c0_i32_0 : i32, i32
  }
  func.func @transform_7(%arg0: i32) -> (i32, i32) {
    %c0_i32 = arith.constant 0 : i32
    %c0_i32_0 = arith.constant 0 : i32
    %c0_i32_1 = arith.constant 0 : i32
    return %c0_i32, %c0_i32_0 : i32, i32
  }
  func.func @transform_8(%arg0: i32) -> (i32, i32) {
    %c0_i32 = arith.constant 0 : i32
    %c0_i32_0 = arith.constant 0 : i32
    %c0_i32_1 = arith.constant 0 : i32
    return %c0_i32, %c0_i32_0 : i32, i32
  }
  func.func @transform_9(%arg0: i32) -> (i32, i32) {
    %c0_i32 = arith.constant 0 : i32
    %c0_i32_0 = arith.constant 0 : i32
    %c0_i32_1 = arith.constant 0 : i32
    return %c0_i32, %c0_i32_0 : i32, i32
  }
  func.func @transform_10(%arg0: i32) -> (i32, i32) {
    %c0_i32 = arith.constant 0 : i32
    %c0_i32_0 = arith.constant 0 : i32
    %c0_i32_1 = arith.constant 0 : i32
    return %c0_i32, %c0_i32_0 : i32, i32
  }
  func.func @transform_11(%arg0: i32) -> (i32, i32) {
    %c0_i32 = arith.constant 0 : i32
    %c0_i32_0 = arith.constant 0 : i32
    %c0_i32_1 = arith.constant 0 : i32
    return %c0_i32, %c0_i32_0 : i32, i32
  }
  func.func @transform_12(%arg0: i32) -> (i32, i32) {
    %c0_i32 = arith.constant 0 : i32
    %c0_i32_0 = arith.constant 0 : i32
    %c0_i32_1 = arith.constant 0 : i32
    return %c0_i32, %c0_i32_0 : i32, i32
  }
  func.func @transform_13(%arg0: i32) -> (i32, i32) {
    %c0_i32 = arith.constant 0 : i32
    %c0_i32_0 = arith.constant 0 : i32
    return %arg0, %c0_i32 : i32, i32
  }
}

module attributes {stable_mosaic.version = 11 : i64} {
  func.func @_fused_mlp_kernel(%arg0: i32, %arg1: memref<12x32xf32, #tpu.memory_space<vmem>>, %arg2: memref<32x32xbf16, #tpu.memory_space<vmem>>, %arg3: memref<1x32xf32, #tpu.memory_space<vmem>>, %arg4: memref<32x32xbf16, #tpu.memory_space<vmem>>, %arg5: memref<1x32xf32, #tpu.memory_space<vmem>>, %arg6: memref<12x32xf32, #tpu.memory_space<vmem>>) attributes {dimension_semantics = [#tpu.dimension_semantics<parallel>], iteration_bounds = array<i64: 1>, scalar_prefetch = 0 : i64, scratch_operands = 0 : i64, tpu.core_type = #tpu.core_type<tc>, window_params = [{transform_indices = @transform_0, window_bounds = array<i64: 12, 32>}, {pipeline_mode = #tpu.pipeline_mode<synchronous>, transform_indices = @transform_1, window_bounds = array<i64: 32, 32>}, {pipeline_mode = #tpu.pipeline_mode<synchronous>, transform_indices = @transform_2, window_bounds = array<i64: 1, 32>}, {pipeline_mode = #tpu.pipeline_mode<synchronous>, transform_indices = @transform_3, window_bounds = array<i64: 32, 32>}, {pipeline_mode = #tpu.pipeline_mode<synchronous>, transform_indices = @transform_4, window_bounds = array<i64: 1, 32>}, {transform_indices = @transform_5, window_bounds = array<i64: 12, 32>}]} {
    %c0 = arith.constant 0 : index
    %c0_0 = arith.constant 0 : index
    %0 = vector.load %arg3[%c0, %c0_0] : memref<1x32xf32, #tpu.memory_space<vmem>>, vector<1x32xf32>
    %c0_1 = arith.constant 0 : index
    %c0_2 = arith.constant 0 : index
    %1 = vector.load %arg1[%c0_1, %c0_2] : memref<12x32xf32, #tpu.memory_space<vmem>>, vector<12x32xf32>
    %2 = arith.truncf %1 : vector<12x32xf32> to vector<12x32xbf16>
    %c0_3 = arith.constant 0 : index
    %c0_4 = arith.constant 0 : index
    %3 = vector.load %arg2[%c0_3, %c0_4] : memref<32x32xbf16, #tpu.memory_space<vmem>>, vector<32x32xbf16>
    %cst = arith.constant dense<0.000000e+00> : vector<12x32xf32>
    %4 = tpu.matmul %2, %3, %cst {dimension_numbers = #tpu.dot_dimension_numbers<[1], [0], [0], [1], [0, 0, 1, 1], [], []>} : vector<12x32xbf16>, vector<32x32xbf16>, vector<12x32xf32> -> vector<12x32xf32>
    %5 = vector.broadcast %0 : vector<1x32xf32> to vector<12x32xf32>
    %6 = arith.addf %5, %4 : vector<12x32xf32>
    %cst_5 = arith.constant 0.000000e+00 : f32
    %7 = vector.broadcast %cst_5 : f32 to vector<12x32xf32>
    %8 = arith.maximumf %6, %7 : vector<12x32xf32>
    %9 = arith.truncf %8 : vector<12x32xf32> to vector<12x32xbf16>
    %c0_6 = arith.constant 0 : index
    %c0_7 = arith.constant 0 : index
    %10 = vector.load %arg4[%c0_6, %c0_7] : memref<32x32xbf16, #tpu.memory_space<vmem>>, vector<32x32xbf16>
    %cst_8 = arith.constant dense<0.000000e+00> : vector<12x32xf32>
    %11 = tpu.matmul %9, %10, %cst_8 {dimension_numbers = #tpu.dot_dimension_numbers<[1], [0], [0], [1], [0, 0, 1, 1], [], []>} : vector<12x32xbf16>, vector<32x32xbf16>, vector<12x32xf32> -> vector<12x32xf32>
    %c0_9 = arith.constant 0 : index
    %c0_10 = arith.constant 0 : index
    %12 = vector.load %arg5[%c0_9, %c0_10] : memref<1x32xf32, #tpu.memory_space<vmem>>, vector<1x32xf32>
    %13 = vector.broadcast %12 : vector<1x32xf32> to vector<12x32xf32>
    %14 = arith.addf %11, %13 : vector<12x32xf32>
    %c0_11 = arith.constant 0 : index
    %c0_12 = arith.constant 0 : index
    %15 = vector.load %arg6[%c0_11, %c0_12] : memref<12x32xf32, #tpu.memory_space<vmem>>, vector<12x32xf32>
    tpu.vector_store %arg6[%c0_11, %c0_12], %14 {strides = array<i32>} : memref<12x32xf32, #tpu.memory_space<vmem>>, vector<12x32xf32>,
    return
  }
  func.func @transform_0(%arg0: i32) -> (i32, i32) {
    %c0_i32 = arith.constant 0 : i32
    %c0_i32_0 = arith.constant 0 : i32
    return %arg0, %c0_i32 : i32, i32
  }
  func.func @transform_1(%arg0: i32) -> (i32, i32) {
    %c0_i32 = arith.constant 0 : i32
    %c0_i32_0 = arith.constant 0 : i32
    %c0_i32_1 = arith.constant 0 : i32
    return %c0_i32, %c0_i32_0 : i32, i32
  }
  func.func @transform_2(%arg0: i32) -> (i32, i32) {
    %c0_i32 = arith.constant 0 : i32
    %c0_i32_0 = arith.constant 0 : i32
    %c0_i32_1 = arith.constant 0 : i32
    return %c0_i32, %c0_i32_0 : i32, i32
  }
  func.func @transform_3(%arg0: i32) -> (i32, i32) {
    %c0_i32 = arith.constant 0 : i32
    %c0_i32_0 = arith.constant 0 : i32
    %c0_i32_1 = arith.constant 0 : i32
    return %c0_i32, %c0_i32_0 : i32, i32
  }
  func.func @transform_4(%arg0: i32) -> (i32, i32) {
    %c0_i32 = arith.constant 0 : i32
    %c0_i32_0 = arith.constant 0 : i32
    %c0_i32_1 = arith.constant 0 : i32
    return %c0_i32, %c0_i32_0 : i32, i32
  }
  func.func @transform_5(%arg0: i32) -> (i32, i32) {
    %c0_i32 = arith.constant 0 : i32
    %c0_i32_0 = arith.constant 0 : i32
    return %arg0, %c0_i32 : i32, i32
  }
}

module attributes {stable_mosaic.version = 11 : i64} {
  func.func @_gine_agg_kernel(%arg0: i32, %arg1: memref<24xi32, #tpu.memory_space<smem>>, %arg2: memref<24xi32, #tpu.memory_space<smem>>, %arg3: memref<12x32xf32, #tpu.memory_space<vmem>>, %arg4: memref<24x32xf32, #tpu.memory_space<vmem>>, %arg5: memref<12x32xf32, #tpu.memory_space<vmem>>, %arg6: memref<12x32xf32, #tpu.memory_space<vmem>>, %arg7: memref<8x32xf32, #tpu.memory_space<vmem>>) attributes {dimension_semantics = [#tpu.dimension_semantics<arbitrary>], iteration_bounds = array<i64: 1>, scalar_prefetch = 2 : i64, scratch_operands = 2 : i64, tpu.core_type = #tpu.core_type<tc>, window_params = [{pipeline_mode = #tpu.pipeline_mode<synchronous>, transform_indices = @transform_0, window_bounds = array<i64: 12, 32>}, {transform_indices = @transform_1, window_bounds = array<i64: 24, 32>}, {pipeline_mode = #tpu.pipeline_mode<synchronous>, transform_indices = @transform_2, window_bounds = array<i64: 12, 32>}]} {
    %c0_i32 = arith.constant 0 : i32
    %0 = arith.cmpi eq, %arg0, %c0_i32 : i32
    %1 = arith.extui %0 : i1 to i32
    %c0_i32_0 = arith.constant 0 : i32
    %2 = arith.cmpi ne, %1, %c0_i32_0 : i32
    scf.if %2 {
      %cst_179 = arith.constant 0.000000e+00 : f32
      %421 = vector.broadcast %cst_179 : f32 to vector<12x32xf32>
      %c0_180 = arith.constant 0 : index
      %c0_181 = arith.constant 0 : index
      %422 = vector.load %arg6[%c0_180, %c0_181] : memref<12x32xf32, #tpu.memory_space<vmem>>, vector<12x32xf32>
      tpu.vector_store %arg6[%c0_180, %c0_181], %421 {strides = array<i32>} : memref<12x32xf32, #tpu.memory_space<vmem>>, vector<12x32xf32>,
    } else {
    }
    %c24_i32 = arith.constant 24 : i32
    %3 = arith.muli %arg0, %c24_i32 : i32
    %c0_i32_1 = arith.constant 0 : i32
    %c8_i32 = arith.constant 8 : i32
    %4 = arith.muli %c0_i32_1, %c8_i32 : i32
    %5 = tpu.assume_multiple %4, 8 : i32
    %6 = arith.addi %3, %5 : i32
    %c0_i32_2 = arith.constant 0 : i32
    %7 = arith.addi %6, %c0_i32_2 : i32
    %8 = arith.index_cast %7 : i32 to index
    %9 = memref.load %arg1[%8] : memref<24xi32, #tpu.memory_space<smem>>
    %10 = arith.index_cast %9 : i32 to index
    %c0 = arith.constant 0 : index
    %11 = vector.load %arg3[%10, %c0] : memref<12x32xf32, #tpu.memory_space<vmem>>, vector<1x32xf32>
    %c0_3 = arith.constant 0 : index
    %c0_4 = arith.constant 0 : index
    %12 = vector.load %arg7[%c0_3, %c0_4] : memref<8x32xf32, #tpu.memory_space<vmem>>, vector<1x32xf32>
    tpu.vector_store %arg7[%c0_3, %c0_4], %11 {strides = array<i32>} : memref<8x32xf32, #tpu.memory_space<vmem>>, vector<1x32xf32>,
    %c1_i32 = arith.constant 1 : i32
    %13 = arith.addi %6, %c1_i32 : i32
    %14 = arith.index_cast %13 : i32 to index
    %15 = memref.load %arg1[%14] : memref<24xi32, #tpu.memory_space<smem>>
    %16 = arith.index_cast %15 : i32 to index
    %c0_5 = arith.constant 0 : index
    %17 = vector.load %arg3[%16, %c0_5] : memref<12x32xf32, #tpu.memory_space<vmem>>, vector<1x32xf32>
    %c1 = arith.constant 1 : index
    %c0_6 = arith.constant 0 : index
    %18 = vector.load %arg7[%c1, %c0_6] : memref<8x32xf32, #tpu.memory_space<vmem>>, vector<1x32xf32>
    tpu.vector_store %arg7[%c1, %c0_6], %17 {strides = array<i32>} : memref<8x32xf32, #tpu.memory_space<vmem>>, vector<1x32xf32>,
    %c2_i32 = arith.constant 2 : i32
    %19 = arith.addi %6, %c2_i32 : i32
    %20 = arith.index_cast %19 : i32 to index
    %21 = memref.load %arg1[%20] : memref<24xi32, #tpu.memory_space<smem>>
    %22 = arith.index_cast %21 : i32 to index
    %c0_7 = arith.constant 0 : index
    %23 = vector.load %arg3[%22, %c0_7] : memref<12x32xf32, #tpu.memory_space<vmem>>, vector<1x32xf32>
    %c2 = arith.constant 2 : index
    %c0_8 = arith.constant 0 : index
    %24 = vector.load %arg7[%c2, %c0_8] : memref<8x32xf32, #tpu.memory_space<vmem>>, vector<1x32xf32>
    tpu.vector_store %arg7[%c2, %c0_8], %23 {strides = array<i32>} : memref<8x32xf32, #tpu.memory_space<vmem>>, vector<1x32xf32>,
    %c3_i32 = arith.constant 3 : i32
    %25 = arith.addi %6, %c3_i32 : i32
    %26 = arith.index_cast %25 : i32 to index
    %27 = memref.load %arg1[%26] : memref<24xi32, #tpu.memory_space<smem>>
    %28 = arith.index_cast %27 : i32 to index
    %c0_9 = arith.constant 0 : index
    %29 = vector.load %arg3[%28, %c0_9] : memref<12x32xf32, #tpu.memory_space<vmem>>, vector<1x32xf32>
    %c3 = arith.constant 3 : index
    %c0_10 = arith.constant 0 : index
    %30 = vector.load %arg7[%c3, %c0_10] : memref<8x32xf32, #tpu.memory_space<vmem>>, vector<1x32xf32>
    tpu.vector_store %arg7[%c3, %c0_10], %29 {strides = array<i32>} : memref<8x32xf32, #tpu.memory_space<vmem>>, vector<1x32xf32>,
    %c4_i32 = arith.constant 4 : i32
    %31 = arith.addi %6, %c4_i32 : i32
    %32 = arith.index_cast %31 : i32 to index
    %33 = memref.load %arg1[%32] : memref<24xi32, #tpu.memory_space<smem>>
    %34 = arith.index_cast %33 : i32 to index
    %c0_11 = arith.constant 0 : index
    %35 = vector.load %arg3[%34, %c0_11] : memref<12x32xf32, #tpu.memory_space<vmem>>, vector<1x32xf32>
    %c4 = arith.constant 4 : index
    %c0_12 = arith.constant 0 : index
    %36 = vector.load %arg7[%c4, %c0_12] : memref<8x32xf32, #tpu.memory_space<vmem>>, vector<1x32xf32>
    tpu.vector_store %arg7[%c4, %c0_12], %35 {strides = array<i32>} : memref<8x32xf32, #tpu.memory_space<vmem>>, vector<1x32xf32>,
    %c5_i32 = arith.constant 5 : i32
    %37 = arith.addi %6, %c5_i32 : i32
    %38 = arith.index_cast %37 : i32 to index
    %39 = memref.load %arg1[%38] : memref<24xi32, #tpu.memory_space<smem>>
    %40 = arith.index_cast %39 : i32 to index
    %c0_13 = arith.constant 0 : index
    %41 = vector.load %arg3[%40, %c0_13] : memref<12x32xf32, #tpu.memory_space<vmem>>, vector<1x32xf32>
    %c5 = arith.constant 5 : index
    %c0_14 = arith.constant 0 : index
    %42 = vector.load %arg7[%c5, %c0_14] : memref<8x32xf32, #tpu.memory_space<vmem>>, vector<1x32xf32>
    tpu.vector_store %arg7[%c5, %c0_14], %41 {strides = array<i32>} : memref<8x32xf32, #tpu.memory_space<vmem>>, vector<1x32xf32>,
    %c6_i32 = arith.constant 6 : i32
    %43 = arith.addi %6, %c6_i32 : i32
    %44 = arith.index_cast %43 : i32 to index
    %45 = memref.load %arg1[%44] : memref<24xi32, #tpu.memory_space<smem>>
    %46 = arith.index_cast %45 : i32 to index
    %c0_15 = arith.constant 0 : index
    %47 = vector.load %arg3[%46, %c0_15] : memref<12x32xf32, #tpu.memory_space<vmem>>, vector<1x32xf32>
    %c6 = arith.constant 6 : index
    %c0_16 = arith.constant 0 : index
    %48 = vector.load %arg7[%c6, %c0_16] : memref<8x32xf32, #tpu.memory_space<vmem>>, vector<1x32xf32>
    tpu.vector_store %arg7[%c6, %c0_16], %47 {strides = array<i32>} : memref<8x32xf32, #tpu.memory_space<vmem>>, vector<1x32xf32>,
    %c7_i32 = arith.constant 7 : i32
    %49 = arith.addi %6, %c7_i32 : i32
    %50 = arith.index_cast %49 : i32 to index
    %51 = memref.load %arg1[%50] : memref<24xi32, #tpu.memory_space<smem>>
    %52 = arith.index_cast %51 : i32 to index
    %c0_17 = arith.constant 0 : index
    %53 = vector.load %arg3[%52, %c0_17] : memref<12x32xf32, #tpu.memory_space<vmem>>, vector<1x32xf32>
    %c7 = arith.constant 7 : index
    %c0_18 = arith.constant 0 : index
    %54 = vector.load %arg7[%c7, %c0_18] : memref<8x32xf32, #tpu.memory_space<vmem>>, vector<1x32xf32>
    tpu.vector_store %arg7[%c7, %c0_18], %53 {strides = array<i32>} : memref<8x32xf32, #tpu.memory_space<vmem>>, vector<1x32xf32>,
    %c0_19 = arith.constant 0 : index
    %c0_20 = arith.constant 0 : index
    %55 = vector.load %arg7[%c0_19, %c0_20] : memref<8x32xf32, #tpu.memory_space<vmem>>, vector<8x32xf32>
    %56 = arith.index_cast %5 : i32 to index
    %c0_21 = arith.constant 0 : index
    %57 = vector.load %arg4[%56, %c0_21] : memref<24x32xf32, #tpu.memory_space<vmem>>, vector<8x32xf32>
    %58 = arith.addf %55, %57 : vector<8x32xf32>
    %cst = arith.constant 0.000000e+00 : f32
    %59 = vector.broadcast %cst : f32 to vector<8x32xf32>
    %60 = arith.maximumf %58, %59 : vector<8x32xf32>
    %61 = tpu.iota {dimensions = array<i32: 0>} : vector<8x1xi32>
    %62 = vector.broadcast %6 : i32 to vector<8x1xi32>
    %63 = arith.addi %62, %61 : vector<8x1xi32>
    %c24_i32_22 = arith.constant 24 : i32
    %64 = vector.broadcast %c24_i32_22 : i32 to vector<8x1xi32>
    %65 = arith.cmpi slt, %63, %64 : vector<8x1xi32>
    %cst_23 = arith.constant 0.000000e+00 : f32
    %66 = vector.shape_cast %65 : vector<8x1xi1> to vector<8x1xi1>
    %67 = vector.broadcast %66 : vector<8x1xi1> to vector<8x32xi1>
    %68 = vector.broadcast %cst_23 : f32 to vector<8x32xf32>
    %69 = arith.select %67, %60, %68 : vector<8x32xi1>, vector<8x32xf32>
    %c0_i32_24 = arith.constant 0 : i32
    %70 = arith.addi %6, %c0_i32_24 : i32
    %71 = arith.index_cast %70 : i32 to index
    %72 = memref.load %arg2[%71] : memref<24xi32, #tpu.memory_space<smem>>
    %73 = arith.index_cast %72 : i32 to index
    %c0_25 = arith.constant 0 : index
    %74 = vector.load %arg6[%73, %c0_25] : memref<12x32xf32, #tpu.memory_space<vmem>>, vector<1x32xf32>
    %75 = vector.extract_strided_slice %69 {offsets = [0, 0], sizes = [1, 32], strides = [1, 1]} : vector<8x32xf32> to vector<1x32xf32>
    %76 = arith.addf %74, %75 : vector<1x32xf32>
    %77 = arith.index_cast %72 : i32 to index
    %c0_26 = arith.constant 0 : index
    %78 = vector.load %arg6[%77, %c0_26] : memref<12x32xf32, #tpu.memory_space<vmem>>, vector<1x32xf32>
    tpu.vector_store %arg6[%77, %c0_26], %76 {strides = array<i32>} : memref<12x32xf32, #tpu.memory_space<vmem>>, vector<1x32xf32>,
    %c1_i32_27 = arith.constant 1 : i32
    %79 = arith.addi %6, %c1_i32_27 : i32
    %80 = arith.index_cast %79 : i32 to index
    %81 = memref.load %arg2[%80] : memref<24xi32, #tpu.memory_space<smem>>
    %82 = arith.index_cast %81 : i32 to index
    %c0_28 = arith.constant 0 : index
    %83 = vector.load %arg6[%82, %c0_28] : memref<12x32xf32, #tpu.memory_space<vmem>>, vector<1x32xf32>
    %84 = vector.extract_strided_slice %69 {offsets = [1, 0], sizes = [1, 32], strides = [1, 1]} : vector<8x32xf32> to vector<1x32xf32>
    %85 = arith.addf %83, %84 : vector<1x32xf32>
    %86 = arith.index_cast %81 : i32 to index
    %c0_29 = arith.constant 0 : index
    %87 = vector.load %arg6[%86, %c0_29] : memref<12x32xf32, #tpu.memory_space<vmem>>, vector<1x32xf32>
    tpu.vector_store %arg6[%86, %c0_29], %85 {strides = array<i32>} : memref<12x32xf32, #tpu.memory_space<vmem>>, vector<1x32xf32>,
    %c2_i32_30 = arith.constant 2 : i32
    %88 = arith.addi %6, %c2_i32_30 : i32
    %89 = arith.index_cast %88 : i32 to index
    %90 = memref.load %arg2[%89] : memref<24xi32, #tpu.memory_space<smem>>
    %91 = arith.index_cast %90 : i32 to index
    %c0_31 = arith.constant 0 : index
    %92 = vector.load %arg6[%91, %c0_31] : memref<12x32xf32, #tpu.memory_space<vmem>>, vector<1x32xf32>
    %93 = vector.extract_strided_slice %69 {offsets = [2, 0], sizes = [1, 32], strides = [1, 1]} : vector<8x32xf32> to vector<1x32xf32>
    %94 = arith.addf %92, %93 : vector<1x32xf32>
    %95 = arith.index_cast %90 : i32 to index
    %c0_32 = arith.constant 0 : index
    %96 = vector.load %arg6[%95, %c0_32] : memref<12x32xf32, #tpu.memory_space<vmem>>, vector<1x32xf32>
    tpu.vector_store %arg6[%95, %c0_32], %94 {strides = array<i32>} : memref<12x32xf32, #tpu.memory_space<vmem>>, vector<1x32xf32>,
    %c3_i32_33 = arith.constant 3 : i32
    %97 = arith.addi %6, %c3_i32_33 : i32
    %98 = arith.index_cast %97 : i32 to index
    %99 = memref.load %arg2[%98] : memref<24xi32, #tpu.memory_space<smem>>
    %100 = arith.index_cast %99 : i32 to index
    %c0_34 = arith.constant 0 : index
    %101 = vector.load %arg6[%100, %c0_34] : memref<12x32xf32, #tpu.memory_space<vmem>>, vector<1x32xf32>
    %102 = vector.extract_strided_slice %69 {offsets = [3, 0], sizes = [1, 32], strides = [1, 1]} : vector<8x32xf32> to vector<1x32xf32>
    %103 = arith.addf %101, %102 : vector<1x32xf32>
    %104 = arith.index_cast %99 : i32 to index
    %c0_35 = arith.constant 0 : index
    %105 = vector.load %arg6[%104, %c0_35] : memref<12x32xf32, #tpu.memory_space<vmem>>, vector<1x32xf32>
    tpu.vector_store %arg6[%104, %c0_35], %103 {strides = array<i32>} : memref<12x32xf32, #tpu.memory_space<vmem>>, vector<1x32xf32>,
    %c4_i32_36 = arith.constant 4 : i32
    %106 = arith.addi %6, %c4_i32_36 : i32
    %107 = arith.index_cast %106 : i32 to index
    %108 = memref.load %arg2[%107] : memref<24xi32, #tpu.memory_space<smem>>
    %109 = arith.index_cast %108 : i32 to index
    %c0_37 = arith.constant 0 : index
    %110 = vector.load %arg6[%109, %c0_37] : memref<12x32xf32, #tpu.memory_space<vmem>>, vector<1x32xf32>
    %111 = vector.extract_strided_slice %69 {offsets = [4, 0], sizes = [1, 32], strides = [1, 1]} : vector<8x32xf32> to vector<1x32xf32>
    %112 = arith.addf %110, %111 : vector<1x32xf32>
    %113 = arith.index_cast %108 : i32 to index
    %c0_38 = arith.constant 0 : index
    %114 = vector.load %arg6[%113, %c0_38] : memref<12x32xf32, #tpu.memory_space<vmem>>, vector<1x32xf32>
    tpu.vector_store %arg6[%113, %c0_38], %112 {strides = array<i32>} : memref<12x32xf32, #tpu.memory_space<vmem>>, vector<1x32xf32>,
    %c5_i32_39 = arith.constant 5 : i32
    %115 = arith.addi %6, %c5_i32_39 : i32
    %116 = arith.index_cast %115 : i32 to index
    %117 = memref.load %arg2[%116] : memref<24xi32, #tpu.memory_space<smem>>
    %118 = arith.index_cast %117 : i32 to index
    %c0_40 = arith.constant 0 : index
    %119 = vector.load %arg6[%118, %c0_40] : memref<12x32xf32, #tpu.memory_space<vmem>>, vector<1x32xf32>
    %120 = vector.extract_strided_slice %69 {offsets = [5, 0], sizes = [1, 32], strides = [1, 1]} : vector<8x32xf32> to vector<1x32xf32>
    %121 = arith.addf %119, %120 : vector<1x32xf32>
    %122 = arith.index_cast %117 : i32 to index
    %c0_41 = arith.constant 0 : index
    %123 = vector.load %arg6[%122, %c0_41] : memref<12x32xf32, #tpu.memory_space<vmem>>, vector<1x32xf32>
    tpu.vector_store %arg6[%122, %c0_41], %121 {strides = array<i32>} : memref<12x32xf32, #tpu.memory_space<vmem>>, vector<1x32xf32>,
    %c6_i32_42 = arith.constant 6 : i32
    %124 = arith.addi %6, %c6_i32_42 : i32
    %125 = arith.index_cast %124 : i32 to index
    %126 = memref.load %arg2[%125] : memref<24xi32, #tpu.memory_space<smem>>
    %127 = arith.index_cast %126 : i32 to index
    %c0_43 = arith.constant 0 : index
    %128 = vector.load %arg6[%127, %c0_43] : memref<12x32xf32, #tpu.memory_space<vmem>>, vector<1x32xf32>
    %129 = vector.extract_strided_slice %69 {offsets = [6, 0], sizes = [1, 32], strides = [1, 1]} : vector<8x32xf32> to vector<1x32xf32>
    %130 = arith.addf %128, %129 : vector<1x32xf32>
    %131 = arith.index_cast %126 : i32 to index
    %c0_44 = arith.constant 0 : index
    %132 = vector.load %arg6[%131, %c0_44] : memref<12x32xf32, #tpu.memory_space<vmem>>, vector<1x32xf32>
    tpu.vector_store %arg6[%131, %c0_44], %130 {strides = array<i32>} : memref<12x32xf32, #tpu.memory_space<vmem>>, vector<1x32xf32>,
    %c7_i32_45 = arith.constant 7 : i32
    %133 = arith.addi %6, %c7_i32_45 : i32
    %134 = arith.index_cast %133 : i32 to index
    %135 = memref.load %arg2[%134] : memref<24xi32, #tpu.memory_space<smem>>
    %136 = arith.index_cast %135 : i32 to index
    %c0_46 = arith.constant 0 : index
    %137 = vector.load %arg6[%136, %c0_46] : memref<12x32xf32, #tpu.memory_space<vmem>>, vector<1x32xf32>
    %138 = vector.extract_strided_slice %69 {offsets = [7, 0], sizes = [1, 32], strides = [1, 1]} : vector<8x32xf32> to vector<1x32xf32>
    %139 = arith.addf %137, %138 : vector<1x32xf32>
    %140 = arith.index_cast %135 : i32 to index
    %c0_47 = arith.constant 0 : index
    %141 = vector.load %arg6[%140, %c0_47] : memref<12x32xf32, #tpu.memory_space<vmem>>, vector<1x32xf32>
    tpu.vector_store %arg6[%140, %c0_47], %139 {strides = array<i32>} : memref<12x32xf32, #tpu.memory_space<vmem>>, vector<1x32xf32>,
    %c1_i32_48 = arith.constant 1 : i32
    %c8_i32_49 = arith.constant 8 : i32
    %142 = arith.muli %c1_i32_48, %c8_i32_49 : i32
    %143 = tpu.assume_multiple %142, 8 : i32
    %144 = arith.addi %3, %143 : i32
    %c0_i32_50 = arith.constant 0 : i32
    %145 = arith.addi %144, %c0_i32_50 : i32
    %146 = arith.index_cast %145 : i32 to index
    %147 = memref.load %arg1[%146] : memref<24xi32, #tpu.memory_space<smem>>
    %148 = arith.index_cast %147 : i32 to index
    %c0_51 = arith.constant 0 : index
    %149 = vector.load %arg3[%148, %c0_51] : memref<12x32xf32, #tpu.memory_space<vmem>>, vector<1x32xf32>
    %c0_52 = arith.constant 0 : index
    %c0_53 = arith.constant 0 : index
    %150 = vector.load %arg7[%c0_52, %c0_53] : memref<8x32xf32, #tpu.memory_space<vmem>>, vector<1x32xf32>
    tpu.vector_store %arg7[%c0_52, %c0_53], %149 {strides = array<i32>} : memref<8x32xf32, #tpu.memory_space<vmem>>, vector<1x32xf32>,
    %c1_i32_54 = arith.constant 1 : i32
    %151 = arith.addi %144, %c1_i32_54 : i32
    %152 = arith.index_cast %151 : i32 to index
    %153 = memref.load %arg1[%152] : memref<24xi32, #tpu.memory_space<smem>>
    %154 = arith.index_cast %153 : i32 to index
    %c0_55 = arith.constant 0 : index
    %155 = vector.load %arg3[%154, %c0_55] : memref<12x32xf32, #tpu.memory_space<vmem>>, vector<1x32xf32>
    %c1_56 = arith.constant 1 : index
    %c0_57 = arith.constant 0 : index
    %156 = vector.load %arg7[%c1_56, %c0_57] : memref<8x32xf32, #tpu.memory_space<vmem>>, vector<1x32xf32>
    tpu.vector_store %arg7[%c1_56, %c0_57], %155 {strides = array<i32>} : memref<8x32xf32, #tpu.memory_space<vmem>>, vector<1x32xf32>,
    %c2_i32_58 = arith.constant 2 : i32
    %157 = arith.addi %144, %c2_i32_58 : i32
    %158 = arith.index_cast %157 : i32 to index
    %159 = memref.load %arg1[%158] : memref<24xi32, #tpu.memory_space<smem>>
    %160 = arith.index_cast %159 : i32 to index
    %c0_59 = arith.constant 0 : index
    %161 = vector.load %arg3[%160, %c0_59] : memref<12x32xf32, #tpu.memory_space<vmem>>, vector<1x32xf32>
    %c2_60 = arith.constant 2 : index
    %c0_61 = arith.constant 0 : index
    %162 = vector.load %arg7[%c2_60, %c0_61] : memref<8x32xf32, #tpu.memory_space<vmem>>, vector<1x32xf32>
    tpu.vector_store %arg7[%c2_60, %c0_61], %161 {strides = array<i32>} : memref<8x32xf32, #tpu.memory_space<vmem>>, vector<1x32xf32>,
    %c3_i32_62 = arith.constant 3 : i32
    %163 = arith.addi %144, %c3_i32_62 : i32
    %164 = arith.index_cast %163 : i32 to index
    %165 = memref.load %arg1[%164] : memref<24xi32, #tpu.memory_space<smem>>
    %166 = arith.index_cast %165 : i32 to index
    %c0_63 = arith.constant 0 : index
    %167 = vector.load %arg3[%166, %c0_63] : memref<12x32xf32, #tpu.memory_space<vmem>>, vector<1x32xf32>
    %c3_64 = arith.constant 3 : index
    %c0_65 = arith.constant 0 : index
    %168 = vector.load %arg7[%c3_64, %c0_65] : memref<8x32xf32, #tpu.memory_space<vmem>>, vector<1x32xf32>
    tpu.vector_store %arg7[%c3_64, %c0_65], %167 {strides = array<i32>} : memref<8x32xf32, #tpu.memory_space<vmem>>, vector<1x32xf32>,
    %c4_i32_66 = arith.constant 4 : i32
    %169 = arith.addi %144, %c4_i32_66 : i32
    %170 = arith.index_cast %169 : i32 to index
    %171 = memref.load %arg1[%170] : memref<24xi32, #tpu.memory_space<smem>>
    %172 = arith.index_cast %171 : i32 to index
    %c0_67 = arith.constant 0 : index
    %173 = vector.load %arg3[%172, %c0_67] : memref<12x32xf32, #tpu.memory_space<vmem>>, vector<1x32xf32>
    %c4_68 = arith.constant 4 : index
    %c0_69 = arith.constant 0 : index
    %174 = vector.load %arg7[%c4_68, %c0_69] : memref<8x32xf32, #tpu.memory_space<vmem>>, vector<1x32xf32>
    tpu.vector_store %arg7[%c4_68, %c0_69], %173 {strides = array<i32>} : memref<8x32xf32, #tpu.memory_space<vmem>>, vector<1x32xf32>,
    %c5_i32_70 = arith.constant 5 : i32
    %175 = arith.addi %144, %c5_i32_70 : i32
    %176 = arith.index_cast %175 : i32 to index
    %177 = memref.load %arg1[%176] : memref<24xi32, #tpu.memory_space<smem>>
    %178 = arith.index_cast %177 : i32 to index
    %c0_71 = arith.constant 0 : index
    %179 = vector.load %arg3[%178, %c0_71] : memref<12x32xf32, #tpu.memory_space<vmem>>, vector<1x32xf32>
    %c5_72 = arith.constant 5 : index
    %c0_73 = arith.constant 0 : index
    %180 = vector.load %arg7[%c5_72, %c0_73] : memref<8x32xf32, #tpu.memory_space<vmem>>, vector<1x32xf32>
    tpu.vector_store %arg7[%c5_72, %c0_73], %179 {strides = array<i32>} : memref<8x32xf32, #tpu.memory_space<vmem>>, vector<1x32xf32>,
    %c6_i32_74 = arith.constant 6 : i32
    %181 = arith.addi %144, %c6_i32_74 : i32
    %182 = arith.index_cast %181 : i32 to index
    %183 = memref.load %arg1[%182] : memref<24xi32, #tpu.memory_space<smem>>
    %184 = arith.index_cast %183 : i32 to index
    %c0_75 = arith.constant 0 : index
    %185 = vector.load %arg3[%184, %c0_75] : memref<12x32xf32, #tpu.memory_space<vmem>>, vector<1x32xf32>
    %c6_76 = arith.constant 6 : index
    %c0_77 = arith.constant 0 : index
    %186 = vector.load %arg7[%c6_76, %c0_77] : memref<8x32xf32, #tpu.memory_space<vmem>>, vector<1x32xf32>
    tpu.vector_store %arg7[%c6_76, %c0_77], %185 {strides = array<i32>} : memref<8x32xf32, #tpu.memory_space<vmem>>, vector<1x32xf32>,
    %c7_i32_78 = arith.constant 7 : i32
    %187 = arith.addi %144, %c7_i32_78 : i32
    %188 = arith.index_cast %187 : i32 to index
    %189 = memref.load %arg1[%188] : memref<24xi32, #tpu.memory_space<smem>>
    %190 = arith.index_cast %189 : i32 to index
    %c0_79 = arith.constant 0 : index
    %191 = vector.load %arg3[%190, %c0_79] : memref<12x32xf32, #tpu.memory_space<vmem>>, vector<1x32xf32>
    %c7_80 = arith.constant 7 : index
    %c0_81 = arith.constant 0 : index
    %192 = vector.load %arg7[%c7_80, %c0_81] : memref<8x32xf32, #tpu.memory_space<vmem>>, vector<1x32xf32>
    tpu.vector_store %arg7[%c7_80, %c0_81], %191 {strides = array<i32>} : memref<8x32xf32, #tpu.memory_space<vmem>>, vector<1x32xf32>,
    %c0_82 = arith.constant 0 : index
    %c0_83 = arith.constant 0 : index
    %193 = vector.load %arg7[%c0_82, %c0_83] : memref<8x32xf32, #tpu.memory_space<vmem>>, vector<8x32xf32>
    %194 = arith.index_cast %143 : i32 to index
    %c0_84 = arith.constant 0 : index
    %195 = vector.load %arg4[%194, %c0_84] : memref<24x32xf32, #tpu.memory_space<vmem>>, vector<8x32xf32>
    %196 = arith.addf %193, %195 : vector<8x32xf32>
    %cst_85 = arith.constant 0.000000e+00 : f32
    %197 = vector.broadcast %cst_85 : f32 to vector<8x32xf32>
    %198 = arith.maximumf %196, %197 : vector<8x32xf32>
    %199 = tpu.iota {dimensions = array<i32: 0>} : vector<8x1xi32>
    %200 = vector.broadcast %144 : i32 to vector<8x1xi32>
    %201 = arith.addi %200, %199 : vector<8x1xi32>
    %c24_i32_86 = arith.constant 24 : i32
    %202 = vector.broadcast %c24_i32_86 : i32 to vector<8x1xi32>
    %203 = arith.cmpi slt, %201, %202 : vector<8x1xi32>
    %cst_87 = arith.constant 0.000000e+00 : f32
    %204 = vector.shape_cast %203 : vector<8x1xi1> to vector<8x1xi1>
    %205 = vector.broadcast %204 : vector<8x1xi1> to vector<8x32xi1>
    %206 = vector.broadcast %cst_87 : f32 to vector<8x32xf32>
    %207 = arith.select %205, %198, %206 : vector<8x32xi1>, vector<8x32xf32>
    %c0_i32_88 = arith.constant 0 : i32
    %208 = arith.addi %144, %c0_i32_88 : i32
    %209 = arith.index_cast %208 : i32 to index
    %210 = memref.load %arg2[%209] : memref<24xi32, #tpu.memory_space<smem>>
    %211 = arith.index_cast %210 : i32 to index
    %c0_89 = arith.constant 0 : index
    %212 = vector.load %arg6[%211, %c0_89] : memref<12x32xf32, #tpu.memory_space<vmem>>, vector<1x32xf32>
    %213 = vector.extract_strided_slice %207 {offsets = [0, 0], sizes = [1, 32], strides = [1, 1]} : vector<8x32xf32> to vector<1x32xf32>
    %214 = arith.addf %212, %213 : vector<1x32xf32>
    %215 = arith.index_cast %210 : i32 to index
    %c0_90 = arith.constant 0 : index
    %216 = vector.load %arg6[%215, %c0_90] : memref<12x32xf32, #tpu.memory_space<vmem>>, vector<1x32xf32>
    tpu.vector_store %arg6[%215, %c0_90], %214 {strides = array<i32>} : memref<12x32xf32, #tpu.memory_space<vmem>>, vector<1x32xf32>,
    %c1_i32_91 = arith.constant 1 : i32
    %217 = arith.addi %144, %c1_i32_91 : i32
    %218 = arith.index_cast %217 : i32 to index
    %219 = memref.load %arg2[%218] : memref<24xi32, #tpu.memory_space<smem>>
    %220 = arith.index_cast %219 : i32 to index
    %c0_92 = arith.constant 0 : index
    %221 = vector.load %arg6[%220, %c0_92] : memref<12x32xf32, #tpu.memory_space<vmem>>, vector<1x32xf32>
    %222 = vector.extract_strided_slice %207 {offsets = [1, 0], sizes = [1, 32], strides = [1, 1]} : vector<8x32xf32> to vector<1x32xf32>
    %223 = arith.addf %221, %222 : vector<1x32xf32>
    %224 = arith.index_cast %219 : i32 to index
    %c0_93 = arith.constant 0 : index
    %225 = vector.load %arg6[%224, %c0_93] : memref<12x32xf32, #tpu.memory_space<vmem>>, vector<1x32xf32>
    tpu.vector_store %arg6[%224, %c0_93], %223 {strides = array<i32>} : memref<12x32xf32, #tpu.memory_space<vmem>>, vector<1x32xf32>,
    %c2_i32_94 = arith.constant 2 : i32
    %226 = arith.addi %144, %c2_i32_94 : i32
    %227 = arith.index_cast %226 : i32 to index
    %228 = memref.load %arg2[%227] : memref<24xi32, #tpu.memory_space<smem>>
    %229 = arith.index_cast %228 : i32 to index
    %c0_95 = arith.constant 0 : index
    %230 = vector.load %arg6[%229, %c0_95] : memref<12x32xf32, #tpu.memory_space<vmem>>, vector<1x32xf32>
    %231 = vector.extract_strided_slice %207 {offsets = [2, 0], sizes = [1, 32], strides = [1, 1]} : vector<8x32xf32> to vector<1x32xf32>
    %232 = arith.addf %230, %231 : vector<1x32xf32>
    %233 = arith.index_cast %228 : i32 to index
    %c0_96 = arith.constant 0 : index
    %234 = vector.load %arg6[%233, %c0_96] : memref<12x32xf32, #tpu.memory_space<vmem>>, vector<1x32xf32>
    tpu.vector_store %arg6[%233, %c0_96], %232 {strides = array<i32>} : memref<12x32xf32, #tpu.memory_space<vmem>>, vector<1x32xf32>,
    %c3_i32_97 = arith.constant 3 : i32
    %235 = arith.addi %144, %c3_i32_97 : i32
    %236 = arith.index_cast %235 : i32 to index
    %237 = memref.load %arg2[%236] : memref<24xi32, #tpu.memory_space<smem>>
    %238 = arith.index_cast %237 : i32 to index
    %c0_98 = arith.constant 0 : index
    %239 = vector.load %arg6[%238, %c0_98] : memref<12x32xf32, #tpu.memory_space<vmem>>, vector<1x32xf32>
    %240 = vector.extract_strided_slice %207 {offsets = [3, 0], sizes = [1, 32], strides = [1, 1]} : vector<8x32xf32> to vector<1x32xf32>
    %241 = arith.addf %239, %240 : vector<1x32xf32>
    %242 = arith.index_cast %237 : i32 to index
    %c0_99 = arith.constant 0 : index
    %243 = vector.load %arg6[%242, %c0_99] : memref<12x32xf32, #tpu.memory_space<vmem>>, vector<1x32xf32>
    tpu.vector_store %arg6[%242, %c0_99], %241 {strides = array<i32>} : memref<12x32xf32, #tpu.memory_space<vmem>>, vector<1x32xf32>,
    %c4_i32_100 = arith.constant 4 : i32
    %244 = arith.addi %144, %c4_i32_100 : i32
    %245 = arith.index_cast %244 : i32 to index
    %246 = memref.load %arg2[%245] : memref<24xi32, #tpu.memory_space<smem>>
    %247 = arith.index_cast %246 : i32 to index
    %c0_101 = arith.constant 0 : index
    %248 = vector.load %arg6[%247, %c0_101] : memref<12x32xf32, #tpu.memory_space<vmem>>, vector<1x32xf32>
    %249 = vector.extract_strided_slice %207 {offsets = [4, 0], sizes = [1, 32], strides = [1, 1]} : vector<8x32xf32> to vector<1x32xf32>
    %250 = arith.addf %248, %249 : vector<1x32xf32>
    %251 = arith.index_cast %246 : i32 to index
    %c0_102 = arith.constant 0 : index
    %252 = vector.load %arg6[%251, %c0_102] : memref<12x32xf32, #tpu.memory_space<vmem>>, vector<1x32xf32>
    tpu.vector_store %arg6[%251, %c0_102], %250 {strides = array<i32>} : memref<12x32xf32, #tpu.memory_space<vmem>>, vector<1x32xf32>,
    %c5_i32_103 = arith.constant 5 : i32
    %253 = arith.addi %144, %c5_i32_103 : i32
    %254 = arith.index_cast %253 : i32 to index
    %255 = memref.load %arg2[%254] : memref<24xi32, #tpu.memory_space<smem>>
    %256 = arith.index_cast %255 : i32 to index
    %c0_104 = arith.constant 0 : index
    %257 = vector.load %arg6[%256, %c0_104] : memref<12x32xf32, #tpu.memory_space<vmem>>, vector<1x32xf32>
    %258 = vector.extract_strided_slice %207 {offsets = [5, 0], sizes = [1, 32], strides = [1, 1]} : vector<8x32xf32> to vector<1x32xf32>
    %259 = arith.addf %257, %258 : vector<1x32xf32>
    %260 = arith.index_cast %255 : i32 to index
    %c0_105 = arith.constant 0 : index
    %261 = vector.load %arg6[%260, %c0_105] : memref<12x32xf32, #tpu.memory_space<vmem>>, vector<1x32xf32>
    tpu.vector_store %arg6[%260, %c0_105], %259 {strides = array<i32>} : memref<12x32xf32, #tpu.memory_space<vmem>>, vector<1x32xf32>,
    %c6_i32_106 = arith.constant 6 : i32
    %262 = arith.addi %144, %c6_i32_106 : i32
    %263 = arith.index_cast %262 : i32 to index
    %264 = memref.load %arg2[%263] : memref<24xi32, #tpu.memory_space<smem>>
    %265 = arith.index_cast %264 : i32 to index
    %c0_107 = arith.constant 0 : index
    %266 = vector.load %arg6[%265, %c0_107] : memref<12x32xf32, #tpu.memory_space<vmem>>, vector<1x32xf32>
    %267 = vector.extract_strided_slice %207 {offsets = [6, 0], sizes = [1, 32], strides = [1, 1]} : vector<8x32xf32> to vector<1x32xf32>
    %268 = arith.addf %266, %267 : vector<1x32xf32>
    %269 = arith.index_cast %264 : i32 to index
    %c0_108 = arith.constant 0 : index
    %270 = vector.load %arg6[%269, %c0_108] : memref<12x32xf32, #tpu.memory_space<vmem>>, vector<1x32xf32>
    tpu.vector_store %arg6[%269, %c0_108], %268 {strides = array<i32>} : memref<12x32xf32, #tpu.memory_space<vmem>>, vector<1x32xf32>,
    %c7_i32_109 = arith.constant 7 : i32
    %271 = arith.addi %144, %c7_i32_109 : i32
    %272 = arith.index_cast %271 : i32 to index
    %273 = memref.load %arg2[%272] : memref<24xi32, #tpu.memory_space<smem>>
    %274 = arith.index_cast %273 : i32 to index
    %c0_110 = arith.constant 0 : index
    %275 = vector.load %arg6[%274, %c0_110] : memref<12x32xf32, #tpu.memory_space<vmem>>, vector<1x32xf32>
    %276 = vector.extract_strided_slice %207 {offsets = [7, 0], sizes = [1, 32], strides = [1, 1]} : vector<8x32xf32> to vector<1x32xf32>
    %277 = arith.addf %275, %276 : vector<1x32xf32>
    %278 = arith.index_cast %273 : i32 to index
    %c0_111 = arith.constant 0 : index
    %279 = vector.load %arg6[%278, %c0_111] : memref<12x32xf32, #tpu.memory_space<vmem>>, vector<1x32xf32>
    tpu.vector_store %arg6[%278, %c0_111], %277 {strides = array<i32>} : memref<12x32xf32, #tpu.memory_space<vmem>>, vector<1x32xf32>,
    %c2_i32_112 = arith.constant 2 : i32
    %c8_i32_113 = arith.constant 8 : i32
    %280 = arith.muli %c2_i32_112, %c8_i32_113 : i32
    %281 = tpu.assume_multiple %280, 8 : i32
    %282 = arith.addi %3, %281 : i32
    %c0_i32_114 = arith.constant 0 : i32
    %283 = arith.addi %282, %c0_i32_114 : i32
    %284 = arith.index_cast %283 : i32 to index
    %285 = memref.load %arg1[%284] : memref<24xi32, #tpu.memory_space<smem>>
    %286 = arith.index_cast %285 : i32 to index
    %c0_115 = arith.constant 0 : index
    %287 = vector.load %arg3[%286, %c0_115] : memref<12x32xf32, #tpu.memory_space<vmem>>, vector<1x32xf32>
    %c0_116 = arith.constant 0 : index
    %c0_117 = arith.constant 0 : index
    %288 = vector.load %arg7[%c0_116, %c0_117] : memref<8x32xf32, #tpu.memory_space<vmem>>, vector<1x32xf32>
    tpu.vector_store %arg7[%c0_116, %c0_117], %287 {strides = array<i32>} : memref<8x32xf32, #tpu.memory_space<vmem>>, vector<1x32xf32>,
    %c1_i32_118 = arith.constant 1 : i32
    %289 = arith.addi %282, %c1_i32_118 : i32
    %290 = arith.index_cast %289 : i32 to index
    %291 = memref.load %arg1[%290] : memref<24xi32, #tpu.memory_space<smem>>
    %292 = arith.index_cast %291 : i32 to index
    %c0_119 = arith.constant 0 : index
    %293 = vector.load %arg3[%292, %c0_119] : memref<12x32xf32, #tpu.memory_space<vmem>>, vector<1x32xf32>
    %c1_120 = arith.constant 1 : index
    %c0_121 = arith.constant 0 : index
    %294 = vector.load %arg7[%c1_120, %c0_121] : memref<8x32xf32, #tpu.memory_space<vmem>>, vector<1x32xf32>
    tpu.vector_store %arg7[%c1_120, %c0_121], %293 {strides = array<i32>} : memref<8x32xf32, #tpu.memory_space<vmem>>, vector<1x32xf32>,
    %c2_i32_122 = arith.constant 2 : i32
    %295 = arith.addi %282, %c2_i32_122 : i32
    %296 = arith.index_cast %295 : i32 to index
    %297 = memref.load %arg1[%296] : memref<24xi32, #tpu.memory_space<smem>>
    %298 = arith.index_cast %297 : i32 to index
    %c0_123 = arith.constant 0 : index
    %299 = vector.load %arg3[%298, %c0_123] : memref<12x32xf32, #tpu.memory_space<vmem>>, vector<1x32xf32>
    %c2_124 = arith.constant 2 : index
    %c0_125 = arith.constant 0 : index
    %300 = vector.load %arg7[%c2_124, %c0_125] : memref<8x32xf32, #tpu.memory_space<vmem>>, vector<1x32xf32>
    tpu.vector_store %arg7[%c2_124, %c0_125], %299 {strides = array<i32>} : memref<8x32xf32, #tpu.memory_space<vmem>>, vector<1x32xf32>,
    %c3_i32_126 = arith.constant 3 : i32
    %301 = arith.addi %282, %c3_i32_126 : i32
    %302 = arith.index_cast %301 : i32 to index
    %303 = memref.load %arg1[%302] : memref<24xi32, #tpu.memory_space<smem>>
    %304 = arith.index_cast %303 : i32 to index
    %c0_127 = arith.constant 0 : index
    %305 = vector.load %arg3[%304, %c0_127] : memref<12x32xf32, #tpu.memory_space<vmem>>, vector<1x32xf32>
    %c3_128 = arith.constant 3 : index
    %c0_129 = arith.constant 0 : index
    %306 = vector.load %arg7[%c3_128, %c0_129] : memref<8x32xf32, #tpu.memory_space<vmem>>, vector<1x32xf32>
    tpu.vector_store %arg7[%c3_128, %c0_129], %305 {strides = array<i32>} : memref<8x32xf32, #tpu.memory_space<vmem>>, vector<1x32xf32>,
    %c4_i32_130 = arith.constant 4 : i32
    %307 = arith.addi %282, %c4_i32_130 : i32
    %308 = arith.index_cast %307 : i32 to index
    %309 = memref.load %arg1[%308] : memref<24xi32, #tpu.memory_space<smem>>
    %310 = arith.index_cast %309 : i32 to index
    %c0_131 = arith.constant 0 : index
    %311 = vector.load %arg3[%310, %c0_131] : memref<12x32xf32, #tpu.memory_space<vmem>>, vector<1x32xf32>
    %c4_132 = arith.constant 4 : index
    %c0_133 = arith.constant 0 : index
    %312 = vector.load %arg7[%c4_132, %c0_133] : memref<8x32xf32, #tpu.memory_space<vmem>>, vector<1x32xf32>
    tpu.vector_store %arg7[%c4_132, %c0_133], %311 {strides = array<i32>} : memref<8x32xf32, #tpu.memory_space<vmem>>, vector<1x32xf32>,
    %c5_i32_134 = arith.constant 5 : i32
    %313 = arith.addi %282, %c5_i32_134 : i32
    %314 = arith.index_cast %313 : i32 to index
    %315 = memref.load %arg1[%314] : memref<24xi32, #tpu.memory_space<smem>>
    %316 = arith.index_cast %315 : i32 to index
    %c0_135 = arith.constant 0 : index
    %317 = vector.load %arg3[%316, %c0_135] : memref<12x32xf32, #tpu.memory_space<vmem>>, vector<1x32xf32>
    %c5_136 = arith.constant 5 : index
    %c0_137 = arith.constant 0 : index
    %318 = vector.load %arg7[%c5_136, %c0_137] : memref<8x32xf32, #tpu.memory_space<vmem>>, vector<1x32xf32>
    tpu.vector_store %arg7[%c5_136, %c0_137], %317 {strides = array<i32>} : memref<8x32xf32, #tpu.memory_space<vmem>>, vector<1x32xf32>,
    %c6_i32_138 = arith.constant 6 : i32
    %319 = arith.addi %282, %c6_i32_138 : i32
    %320 = arith.index_cast %319 : i32 to index
    %321 = memref.load %arg1[%320] : memref<24xi32, #tpu.memory_space<smem>>
    %322 = arith.index_cast %321 : i32 to index
    %c0_139 = arith.constant 0 : index
    %323 = vector.load %arg3[%322, %c0_139] : memref<12x32xf32, #tpu.memory_space<vmem>>, vector<1x32xf32>
    %c6_140 = arith.constant 6 : index
    %c0_141 = arith.constant 0 : index
    %324 = vector.load %arg7[%c6_140, %c0_141] : memref<8x32xf32, #tpu.memory_space<vmem>>, vector<1x32xf32>
    tpu.vector_store %arg7[%c6_140, %c0_141], %323 {strides = array<i32>} : memref<8x32xf32, #tpu.memory_space<vmem>>, vector<1x32xf32>,
    %c7_i32_142 = arith.constant 7 : i32
    %325 = arith.addi %282, %c7_i32_142 : i32
    %326 = arith.index_cast %325 : i32 to index
    %327 = memref.load %arg1[%326] : memref<24xi32, #tpu.memory_space<smem>>
    %328 = arith.index_cast %327 : i32 to index
    %c0_143 = arith.constant 0 : index
    %329 = vector.load %arg3[%328, %c0_143] : memref<12x32xf32, #tpu.memory_space<vmem>>, vector<1x32xf32>
    %c7_144 = arith.constant 7 : index
    %c0_145 = arith.constant 0 : index
    %330 = vector.load %arg7[%c7_144, %c0_145] : memref<8x32xf32, #tpu.memory_space<vmem>>, vector<1x32xf32>
    tpu.vector_store %arg7[%c7_144, %c0_145], %329 {strides = array<i32>} : memref<8x32xf32, #tpu.memory_space<vmem>>, vector<1x32xf32>,
    %c0_146 = arith.constant 0 : index
    %c0_147 = arith.constant 0 : index
    %331 = vector.load %arg7[%c0_146, %c0_147] : memref<8x32xf32, #tpu.memory_space<vmem>>, vector<8x32xf32>
    %332 = arith.index_cast %281 : i32 to index
    %c0_148 = arith.constant 0 : index
    %333 = vector.load %arg4[%332, %c0_148] : memref<24x32xf32, #tpu.memory_space<vmem>>, vector<8x32xf32>
    %334 = arith.addf %331, %333 : vector<8x32xf32>
    %cst_149 = arith.constant 0.000000e+00 : f32
    %335 = vector.broadcast %cst_149 : f32 to vector<8x32xf32>
    %336 = arith.maximumf %334, %335 : vector<8x32xf32>
    %337 = tpu.iota {dimensions = array<i32: 0>} : vector<8x1xi32>
    %338 = vector.broadcast %282 : i32 to vector<8x1xi32>
    %339 = arith.addi %338, %337 : vector<8x1xi32>
    %c24_i32_150 = arith.constant 24 : i32
    %340 = vector.broadcast %c24_i32_150 : i32 to vector<8x1xi32>
    %341 = arith.cmpi slt, %339, %340 : vector<8x1xi32>
    %cst_151 = arith.constant 0.000000e+00 : f32
    %342 = vector.shape_cast %341 : vector<8x1xi1> to vector<8x1xi1>
    %343 = vector.broadcast %342 : vector<8x1xi1> to vector<8x32xi1>
    %344 = vector.broadcast %cst_151 : f32 to vector<8x32xf32>
    %345 = arith.select %343, %336, %344 : vector<8x32xi1>, vector<8x32xf32>
    %c0_i32_152 = arith.constant 0 : i32
    %346 = arith.addi %282, %c0_i32_152 : i32
    %347 = arith.index_cast %346 : i32 to index
    %348 = memref.load %arg2[%347] : memref<24xi32, #tpu.memory_space<smem>>
    %349 = arith.index_cast %348 : i32 to index
    %c0_153 = arith.constant 0 : index
    %350 = vector.load %arg6[%349, %c0_153] : memref<12x32xf32, #tpu.memory_space<vmem>>, vector<1x32xf32>
    %351 = vector.extract_strided_slice %345 {offsets = [0, 0], sizes = [1, 32], strides = [1, 1]} : vector<8x32xf32> to vector<1x32xf32>
    %352 = arith.addf %350, %351 : vector<1x32xf32>
    %353 = arith.index_cast %348 : i32 to index
    %c0_154 = arith.constant 0 : index
    %354 = vector.load %arg6[%353, %c0_154] : memref<12x32xf32, #tpu.memory_space<vmem>>, vector<1x32xf32>
    tpu.vector_store %arg6[%353, %c0_154], %352 {strides = array<i32>} : memref<12x32xf32, #tpu.memory_space<vmem>>, vector<1x32xf32>,
    %c1_i32_155 = arith.constant 1 : i32
    %355 = arith.addi %282, %c1_i32_155 : i32
    %356 = arith.index_cast %355 : i32 to index
    %357 = memref.load %arg2[%356] : memref<24xi32, #tpu.memory_space<smem>>
    %358 = arith.index_cast %357 : i32 to index
    %c0_156 = arith.constant 0 : index
    %359 = vector.load %arg6[%358, %c0_156] : memref<12x32xf32, #tpu.memory_space<vmem>>, vector<1x32xf32>
    %360 = vector.extract_strided_slice %345 {offsets = [1, 0], sizes = [1, 32], strides = [1, 1]} : vector<8x32xf32> to vector<1x32xf32>
    %361 = arith.addf %359, %360 : vector<1x32xf32>
    %362 = arith.index_cast %357 : i32 to index
    %c0_157 = arith.constant 0 : index
    %363 = vector.load %arg6[%362, %c0_157] : memref<12x32xf32, #tpu.memory_space<vmem>>, vector<1x32xf32>
    tpu.vector_store %arg6[%362, %c0_157], %361 {strides = array<i32>} : memref<12x32xf32, #tpu.memory_space<vmem>>, vector<1x32xf32>,
    %c2_i32_158 = arith.constant 2 : i32
    %364 = arith.addi %282, %c2_i32_158 : i32
    %365 = arith.index_cast %364 : i32 to index
    %366 = memref.load %arg2[%365] : memref<24xi32, #tpu.memory_space<smem>>
    %367 = arith.index_cast %366 : i32 to index
    %c0_159 = arith.constant 0 : index
    %368 = vector.load %arg6[%367, %c0_159] : memref<12x32xf32, #tpu.memory_space<vmem>>, vector<1x32xf32>
    %369 = vector.extract_strided_slice %345 {offsets = [2, 0], sizes = [1, 32], strides = [1, 1]} : vector<8x32xf32> to vector<1x32xf32>
    %370 = arith.addf %368, %369 : vector<1x32xf32>
    %371 = arith.index_cast %366 : i32 to index
    %c0_160 = arith.constant 0 : index
    %372 = vector.load %arg6[%371, %c0_160] : memref<12x32xf32, #tpu.memory_space<vmem>>, vector<1x32xf32>
    tpu.vector_store %arg6[%371, %c0_160], %370 {strides = array<i32>} : memref<12x32xf32, #tpu.memory_space<vmem>>, vector<1x32xf32>,
    %c3_i32_161 = arith.constant 3 : i32
    %373 = arith.addi %282, %c3_i32_161 : i32
    %374 = arith.index_cast %373 : i32 to index
    %375 = memref.load %arg2[%374] : memref<24xi32, #tpu.memory_space<smem>>
    %376 = arith.index_cast %375 : i32 to index
    %c0_162 = arith.constant 0 : index
    %377 = vector.load %arg6[%376, %c0_162] : memref<12x32xf32, #tpu.memory_space<vmem>>, vector<1x32xf32>
    %378 = vector.extract_strided_slice %345 {offsets = [3, 0], sizes = [1, 32], strides = [1, 1]} : vector<8x32xf32> to vector<1x32xf32>
    %379 = arith.addf %377, %378 : vector<1x32xf32>
    %380 = arith.index_cast %375 : i32 to index
    %c0_163 = arith.constant 0 : index
    %381 = vector.load %arg6[%380, %c0_163] : memref<12x32xf32, #tpu.memory_space<vmem>>, vector<1x32xf32>
    tpu.vector_store %arg6[%380, %c0_163], %379 {strides = array<i32>} : memref<12x32xf32, #tpu.memory_space<vmem>>, vector<1x32xf32>,
    %c4_i32_164 = arith.constant 4 : i32
    %382 = arith.addi %282, %c4_i32_164 : i32
    %383 = arith.index_cast %382 : i32 to index
    %384 = memref.load %arg2[%383] : memref<24xi32, #tpu.memory_space<smem>>
    %385 = arith.index_cast %384 : i32 to index
    %c0_165 = arith.constant 0 : index
    %386 = vector.load %arg6[%385, %c0_165] : memref<12x32xf32, #tpu.memory_space<vmem>>, vector<1x32xf32>
    %387 = vector.extract_strided_slice %345 {offsets = [4, 0], sizes = [1, 32], strides = [1, 1]} : vector<8x32xf32> to vector<1x32xf32>
    %388 = arith.addf %386, %387 : vector<1x32xf32>
    %389 = arith.index_cast %384 : i32 to index
    %c0_166 = arith.constant 0 : index
    %390 = vector.load %arg6[%389, %c0_166] : memref<12x32xf32, #tpu.memory_space<vmem>>, vector<1x32xf32>
    tpu.vector_store %arg6[%389, %c0_166], %388 {strides = array<i32>} : memref<12x32xf32, #tpu.memory_space<vmem>>, vector<1x32xf32>,
    %c5_i32_167 = arith.constant 5 : i32
    %391 = arith.addi %282, %c5_i32_167 : i32
    %392 = arith.index_cast %391 : i32 to index
    %393 = memref.load %arg2[%392] : memref<24xi32, #tpu.memory_space<smem>>
    %394 = arith.index_cast %393 : i32 to index
    %c0_168 = arith.constant 0 : index
    %395 = vector.load %arg6[%394, %c0_168] : memref<12x32xf32, #tpu.memory_space<vmem>>, vector<1x32xf32>
    %396 = vector.extract_strided_slice %345 {offsets = [5, 0], sizes = [1, 32], strides = [1, 1]} : vector<8x32xf32> to vector<1x32xf32>
    %397 = arith.addf %395, %396 : vector<1x32xf32>
    %398 = arith.index_cast %393 : i32 to index
    %c0_169 = arith.constant 0 : index
    %399 = vector.load %arg6[%398, %c0_169] : memref<12x32xf32, #tpu.memory_space<vmem>>, vector<1x32xf32>
    tpu.vector_store %arg6[%398, %c0_169], %397 {strides = array<i32>} : memref<12x32xf32, #tpu.memory_space<vmem>>, vector<1x32xf32>,
    %c6_i32_170 = arith.constant 6 : i32
    %400 = arith.addi %282, %c6_i32_170 : i32
    %401 = arith.index_cast %400 : i32 to index
    %402 = memref.load %arg2[%401] : memref<24xi32, #tpu.memory_space<smem>>
    %403 = arith.index_cast %402 : i32 to index
    %c0_171 = arith.constant 0 : index
    %404 = vector.load %arg6[%403, %c0_171] : memref<12x32xf32, #tpu.memory_space<vmem>>, vector<1x32xf32>
    %405 = vector.extract_strided_slice %345 {offsets = [6, 0], sizes = [1, 32], strides = [1, 1]} : vector<8x32xf32> to vector<1x32xf32>
    %406 = arith.addf %404, %405 : vector<1x32xf32>
    %407 = arith.index_cast %402 : i32 to index
    %c0_172 = arith.constant 0 : index
    %408 = vector.load %arg6[%407, %c0_172] : memref<12x32xf32, #tpu.memory_space<vmem>>, vector<1x32xf32>
    tpu.vector_store %arg6[%407, %c0_172], %406 {strides = array<i32>} : memref<12x32xf32, #tpu.memory_space<vmem>>, vector<1x32xf32>,
    %c7_i32_173 = arith.constant 7 : i32
    %409 = arith.addi %282, %c7_i32_173 : i32
    %410 = arith.index_cast %409 : i32 to index
    %411 = memref.load %arg2[%410] : memref<24xi32, #tpu.memory_space<smem>>
    %412 = arith.index_cast %411 : i32 to index
    %c0_174 = arith.constant 0 : index
    %413 = vector.load %arg6[%412, %c0_174] : memref<12x32xf32, #tpu.memory_space<vmem>>, vector<1x32xf32>
    %414 = vector.extract_strided_slice %345 {offsets = [7, 0], sizes = [1, 32], strides = [1, 1]} : vector<8x32xf32> to vector<1x32xf32>
    %415 = arith.addf %413, %414 : vector<1x32xf32>
    %416 = arith.index_cast %411 : i32 to index
    %c0_175 = arith.constant 0 : index
    %417 = vector.load %arg6[%416, %c0_175] : memref<12x32xf32, #tpu.memory_space<vmem>>, vector<1x32xf32>
    tpu.vector_store %arg6[%416, %c0_175], %415 {strides = array<i32>} : memref<12x32xf32, #tpu.memory_space<vmem>>, vector<1x32xf32>,
    %c3_i32_176 = arith.constant 3 : i32
    %c0_i32_177 = arith.constant 0 : i32
    %418 = arith.cmpi eq, %arg0, %c0_i32_177 : i32
    %419 = arith.extui %418 : i1 to i32
    %c0_i32_178 = arith.constant 0 : i32
    %420 = arith.cmpi ne, %419, %c0_i32_178 : i32
    scf.if %420 {
      %c0_179 = arith.constant 0 : index
      %c0_180 = arith.constant 0 : index
      %421 = vector.load %arg3[%c0_179, %c0_180] : memref<12x32xf32, #tpu.memory_space<vmem>>, vector<12x32xf32>
      %c0_181 = arith.constant 0 : index
      %c0_182 = arith.constant 0 : index
      %422 = vector.load %arg6[%c0_181, %c0_182] : memref<12x32xf32, #tpu.memory_space<vmem>>, vector<12x32xf32>
      %423 = arith.addf %421, %422 : vector<12x32xf32>
      %c0_183 = arith.constant 0 : index
      %c0_184 = arith.constant 0 : index
      %424 = vector.load %arg5[%c0_183, %c0_184] : memref<12x32xf32, #tpu.memory_space<vmem>>, vector<12x32xf32>
      tpu.vector_store %arg5[%c0_183, %c0_184], %423 {strides = array<i32>} : memref<12x32xf32, #tpu.memory_space<vmem>>, vector<12x32xf32>,
    } else {
    }
    return
  }
  func.func @transform_0(%arg0: i32, %arg1: memref<24xi32, #tpu.memory_space<smem>>, %arg2: memref<24xi32, #tpu.memory_space<smem>>) -> (i32, i32) {
    %c0_i32 = arith.constant 0 : i32
    %c0_i32_0 = arith.constant 0 : i32
    %c0_i32_1 = arith.constant 0 : i32
    return %c0_i32, %c0_i32_0 : i32, i32
  }
  func.func @transform_1(%arg0: i32, %arg1: memref<24xi32, #tpu.memory_space<smem>>, %arg2: memref<24xi32, #tpu.memory_space<smem>>) -> (i32, i32) {
    %c0_i32 = arith.constant 0 : i32
    %c0_i32_0 = arith.constant 0 : i32
    return %arg0, %c0_i32 : i32, i32
  }
  func.func @transform_2(%arg0: i32, %arg1: memref<24xi32, #tpu.memory_space<smem>>, %arg2: memref<24xi32, #tpu.memory_space<smem>>) -> (i32, i32) {
    %c0_i32 = arith.constant 0 : i32
    %c0_i32_0 = arith.constant 0 : i32
    %c0_i32_1 = arith.constant 0 : i32
    return %c0_i32, %c0_i32_0 : i32, i32
  }
}

module attributes {stable_mosaic.version = 11 : i64} {
  func.func @_fused_mlp_kernel(%arg0: i32, %arg1: memref<24x32xf32, #tpu.memory_space<vmem>>, %arg2: memref<24x32xf32, #tpu.memory_space<vmem>>, %arg3: memref<24x32xf32, #tpu.memory_space<vmem>>, %arg4: memref<32x32xbf16, #tpu.memory_space<vmem>>, %arg5: memref<32x32xbf16, #tpu.memory_space<vmem>>, %arg6: memref<32x32xbf16, #tpu.memory_space<vmem>>, %arg7: memref<1x32xf32, #tpu.memory_space<vmem>>, %arg8: memref<32x32xbf16, #tpu.memory_space<vmem>>, %arg9: memref<1x32xf32, #tpu.memory_space<vmem>>, %arg10: memref<24x32xf32, #tpu.memory_space<vmem>>) attributes {dimension_semantics = [#tpu.dimension_semantics<parallel>], iteration_bounds = array<i64: 1>, scalar_prefetch = 0 : i64, scratch_operands = 0 : i64, tpu.core_type = #tpu.core_type<tc>, window_params = [{transform_indices = @transform_0, window_bounds = array<i64: 24, 32>}, {transform_indices = @transform_1, window_bounds = array<i64: 24, 32>}, {transform_indices = @transform_2, window_bounds = array<i64: 24, 32>}, {pipeline_mode = #tpu.pipeline_mode<synchronous>, transform_indices = @transform_3, window_bounds = array<i64: 32, 32>}, {pipeline_mode = #tpu.pipeline_mode<synchronous>, transform_indices = @transform_4, window_bounds = array<i64: 32, 32>}, {pipeline_mode = #tpu.pipeline_mode<synchronous>, transform_indices = @transform_5, window_bounds = array<i64: 32, 32>}, {pipeline_mode = #tpu.pipeline_mode<synchronous>, transform_indices = @transform_6, window_bounds = array<i64: 1, 32>}, {pipeline_mode = #tpu.pipeline_mode<synchronous>, transform_indices = @transform_7, window_bounds = array<i64: 32, 32>}, {pipeline_mode = #tpu.pipeline_mode<synchronous>, transform_indices = @transform_8, window_bounds = array<i64: 1, 32>}, {transform_indices = @transform_9, window_bounds = array<i64: 24, 32>}]} {
    %c0 = arith.constant 0 : index
    %c0_0 = arith.constant 0 : index
    %0 = vector.load %arg7[%c0, %c0_0] : memref<1x32xf32, #tpu.memory_space<vmem>>, vector<1x32xf32>
    %c0_1 = arith.constant 0 : index
    %c0_2 = arith.constant 0 : index
    %1 = vector.load %arg1[%c0_1, %c0_2] : memref<24x32xf32, #tpu.memory_space<vmem>>, vector<24x32xf32>
    %2 = arith.truncf %1 : vector<24x32xf32> to vector<24x32xbf16>
    %c0_3 = arith.constant 0 : index
    %c0_4 = arith.constant 0 : index
    %3 = vector.load %arg4[%c0_3, %c0_4] : memref<32x32xbf16, #tpu.memory_space<vmem>>, vector<32x32xbf16>
    %cst = arith.constant dense<0.000000e+00> : vector<24x32xf32>
    %4 = tpu.matmul %2, %3, %cst {dimension_numbers = #tpu.dot_dimension_numbers<[1], [0], [0], [1], [0, 0, 1, 1], [], []>} : vector<24x32xbf16>, vector<32x32xbf16>, vector<24x32xf32> -> vector<24x32xf32>
    %5 = vector.broadcast %0 : vector<1x32xf32> to vector<24x32xf32>
    %6 = arith.addf %5, %4 : vector<24x32xf32>
    %c0_5 = arith.constant 0 : index
    %c0_6 = arith.constant 0 : index
    %7 = vector.load %arg2[%c0_5, %c0_6] : memref<24x32xf32, #tpu.memory_space<vmem>>, vector<24x32xf32>
    %8 = arith.truncf %7 : vector<24x32xf32> to vector<24x32xbf16>
    %c0_7 = arith.constant 0 : index
    %c0_8 = arith.constant 0 : index
    %9 = vector.load %arg5[%c0_7, %c0_8] : memref<32x32xbf16, #tpu.memory_space<vmem>>, vector<32x32xbf16>
    %cst_9 = arith.constant dense<0.000000e+00> : vector<24x32xf32>
    %10 = tpu.matmul %8, %9, %cst_9 {dimension_numbers = #tpu.dot_dimension_numbers<[1], [0], [0], [1], [0, 0, 1, 1], [], []>} : vector<24x32xbf16>, vector<32x32xbf16>, vector<24x32xf32> -> vector<24x32xf32>
    %11 = arith.addf %6, %10 : vector<24x32xf32>
    %c0_10 = arith.constant 0 : index
    %c0_11 = arith.constant 0 : index
    %12 = vector.load %arg3[%c0_10, %c0_11] : memref<24x32xf32, #tpu.memory_space<vmem>>, vector<24x32xf32>
    %13 = arith.truncf %12 : vector<24x32xf32> to vector<24x32xbf16>
    %c0_12 = arith.constant 0 : index
    %c0_13 = arith.constant 0 : index
    %14 = vector.load %arg6[%c0_12, %c0_13] : memref<32x32xbf16, #tpu.memory_space<vmem>>, vector<32x32xbf16>
    %cst_14 = arith.constant dense<0.000000e+00> : vector<24x32xf32>
    %15 = tpu.matmul %13, %14, %cst_14 {dimension_numbers = #tpu.dot_dimension_numbers<[1], [0], [0], [1], [0, 0, 1, 1], [], []>} : vector<24x32xbf16>, vector<32x32xbf16>, vector<24x32xf32> -> vector<24x32xf32>
    %16 = arith.addf %11, %15 : vector<24x32xf32>
    %cst_15 = arith.constant 0.000000e+00 : f32
    %17 = vector.broadcast %cst_15 : f32 to vector<24x32xf32>
    %18 = arith.maximumf %16, %17 : vector<24x32xf32>
    %19 = arith.truncf %18 : vector<24x32xf32> to vector<24x32xbf16>
    %c0_16 = arith.constant 0 : index
    %c0_17 = arith.constant 0 : index
    %20 = vector.load %arg8[%c0_16, %c0_17] : memref<32x32xbf16, #tpu.memory_space<vmem>>, vector<32x32xbf16>
    %cst_18 = arith.constant dense<0.000000e+00> : vector<24x32xf32>
    %21 = tpu.matmul %19, %20, %cst_18 {dimension_numbers = #tpu.dot_dimension_numbers<[1], [0], [0], [1], [0, 0, 1, 1], [], []>} : vector<24x32xbf16>, vector<32x32xbf16>, vector<24x32xf32> -> vector<24x32xf32>
    %c0_19 = arith.constant 0 : index
    %c0_20 = arith.constant 0 : index
    %22 = vector.load %arg9[%c0_19, %c0_20] : memref<1x32xf32, #tpu.memory_space<vmem>>, vector<1x32xf32>
    %23 = vector.broadcast %22 : vector<1x32xf32> to vector<24x32xf32>
    %24 = arith.addf %21, %23 : vector<24x32xf32>
    %c0_21 = arith.constant 0 : index
    %c0_22 = arith.constant 0 : index
    %25 = vector.load %arg10[%c0_21, %c0_22] : memref<24x32xf32, #tpu.memory_space<vmem>>, vector<24x32xf32>
    tpu.vector_store %arg10[%c0_21, %c0_22], %24 {strides = array<i32>} : memref<24x32xf32, #tpu.memory_space<vmem>>, vector<24x32xf32>,
    return
  }
  func.func @transform_0(%arg0: i32) -> (i32, i32) {
    %c0_i32 = arith.constant 0 : i32
    %c0_i32_0 = arith.constant 0 : i32
    return %arg0, %c0_i32 : i32, i32
  }
  func.func @transform_1(%arg0: i32) -> (i32, i32) {
    %c0_i32 = arith.constant 0 : i32
    %c0_i32_0 = arith.constant 0 : i32
    return %arg0, %c0_i32 : i32, i32
  }
  func.func @transform_2(%arg0: i32) -> (i32, i32) {
    %c0_i32 = arith.constant 0 : i32
    %c0_i32_0 = arith.constant 0 : i32
    return %arg0, %c0_i32 : i32, i32
  }
  func.func @transform_3(%arg0: i32) -> (i32, i32) {
    %c0_i32 = arith.constant 0 : i32
    %c0_i32_0 = arith.constant 0 : i32
    %c0_i32_1 = arith.constant 0 : i32
    return %c0_i32, %c0_i32_0 : i32, i32
  }
  func.func @transform_4(%arg0: i32) -> (i32, i32) {
    %c0_i32 = arith.constant 0 : i32
    %c0_i32_0 = arith.constant 0 : i32
    %c0_i32_1 = arith.constant 0 : i32
    return %c0_i32, %c0_i32_0 : i32, i32
  }
  func.func @transform_5(%arg0: i32) -> (i32, i32) {
    %c0_i32 = arith.constant 0 : i32
    %c0_i32_0 = arith.constant 0 : i32
    %c0_i32_1 = arith.constant 0 : i32
    return %c0_i32, %c0_i32_0 : i32, i32
  }
  func.func @transform_6(%arg0: i32) -> (i32, i32) {
    %c0_i32 = arith.constant 0 : i32
    %c0_i32_0 = arith.constant 0 : i32
    %c0_i32_1 = arith.constant 0 : i32
    return %c0_i32, %c0_i32_0 : i32, i32
  }
  func.func @transform_7(%arg0: i32) -> (i32, i32) {
    %c0_i32 = arith.constant 0 : i32
    %c0_i32_0 = arith.constant 0 : i32
    %c0_i32_1 = arith.constant 0 : i32
    return %c0_i32, %c0_i32_0 : i32, i32
  }
  func.func @transform_8(%arg0: i32) -> (i32, i32) {
    %c0_i32 = arith.constant 0 : i32
    %c0_i32_0 = arith.constant 0 : i32
    %c0_i32_1 = arith.constant 0 : i32
    return %c0_i32, %c0_i32_0 : i32, i32
  }
  func.func @transform_9(%arg0: i32) -> (i32, i32) {
    %c0_i32 = arith.constant 0 : i32
    %c0_i32_0 = arith.constant 0 : i32
    return %arg0, %c0_i32 : i32, i32
  }
}

module attributes {stable_mosaic.version = 11 : i64} {
  func.func @_fused_linear_kernel(%arg0: i32, %arg1: memref<24x32xf32, #tpu.memory_space<vmem>>, %arg2: memref<24x32xf32, #tpu.memory_space<vmem>>, %arg3: memref<24x32xf32, #tpu.memory_space<vmem>>, %arg4: memref<32x128xbf16, #tpu.memory_space<vmem>>, %arg5: memref<32x128xbf16, #tpu.memory_space<vmem>>, %arg6: memref<32x128xbf16, #tpu.memory_space<vmem>>, %arg7: memref<1x128xf32, #tpu.memory_space<vmem>>, %arg8: memref<24x128xf32, #tpu.memory_space<vmem>>) attributes {dimension_semantics = [#tpu.dimension_semantics<parallel>], iteration_bounds = array<i64: 1>, scalar_prefetch = 0 : i64, scratch_operands = 0 : i64, tpu.core_type = #tpu.core_type<tc>, window_params = [{transform_indices = @transform_0, window_bounds = array<i64: 24, 32>}, {transform_indices = @transform_1, window_bounds = array<i64: 24, 32>}, {transform_indices = @transform_2, window_bounds = array<i64: 24, 32>}, {pipeline_mode = #tpu.pipeline_mode<synchronous>, transform_indices = @transform_3, window_bounds = array<i64: 32, 128>}, {pipeline_mode = #tpu.pipeline_mode<synchronous>, transform_indices = @transform_4, window_bounds = array<i64: 32, 128>}, {pipeline_mode = #tpu.pipeline_mode<synchronous>, transform_indices = @transform_5, window_bounds = array<i64: 32, 128>}, {pipeline_mode = #tpu.pipeline_mode<synchronous>, transform_indices = @transform_6, window_bounds = array<i64: 1, 128>}, {transform_indices = @transform_7, window_bounds = array<i64: 24, 128>}]} {
    %c0 = arith.constant 0 : index
    %c0_0 = arith.constant 0 : index
    %0 = vector.load %arg7[%c0, %c0_0] : memref<1x128xf32, #tpu.memory_space<vmem>>, vector<1x128xf32>
    %c0_1 = arith.constant 0 : index
    %c0_2 = arith.constant 0 : index
    %1 = vector.load %arg1[%c0_1, %c0_2] : memref<24x32xf32, #tpu.memory_space<vmem>>, vector<24x32xf32>
    %2 = arith.truncf %1 : vector<24x32xf32> to vector<24x32xbf16>
    %c0_3 = arith.constant 0 : index
    %c0_4 = arith.constant 0 : index
    %3 = vector.load %arg4[%c0_3, %c0_4] : memref<32x128xbf16, #tpu.memory_space<vmem>>, vector<32x128xbf16>
    %cst = arith.constant dense<0.000000e+00> : vector<24x128xf32>
    %4 = tpu.matmul %2, %3, %cst {dimension_numbers = #tpu.dot_dimension_numbers<[1], [0], [0], [1], [0, 0, 1, 1], [], []>} : vector<24x32xbf16>, vector<32x128xbf16>, vector<24x128xf32> -> vector<24x128xf32>
    %5 = vector.broadcast %0 : vector<1x128xf32> to vector<24x128xf32>
    %6 = arith.addf %5, %4 : vector<24x128xf32>
    %c0_5 = arith.constant 0 : index
    %c0_6 = arith.constant 0 : index
    %7 = vector.load %arg2[%c0_5, %c0_6] : memref<24x32xf32, #tpu.memory_space<vmem>>, vector<24x32xf32>
    %8 = arith.truncf %7 : vector<24x32xf32> to vector<24x32xbf16>
    %c0_7 = arith.constant 0 : index
    %c0_8 = arith.constant 0 : index
    %9 = vector.load %arg5[%c0_7, %c0_8] : memref<32x128xbf16, #tpu.memory_space<vmem>>, vector<32x128xbf16>
    %cst_9 = arith.constant dense<0.000000e+00> : vector<24x128xf32>
    %10 = tpu.matmul %8, %9, %cst_9 {dimension_numbers = #tpu.dot_dimension_numbers<[1], [0], [0], [1], [0, 0, 1, 1], [], []>} : vector<24x32xbf16>, vector<32x128xbf16>, vector<24x128xf32> -> vector<24x128xf32>
    %11 = arith.addf %6, %10 : vector<24x128xf32>
    %c0_10 = arith.constant 0 : index
    %c0_11 = arith.constant 0 : index
    %12 = vector.load %arg3[%c0_10, %c0_11] : memref<24x32xf32, #tpu.memory_space<vmem>>, vector<24x32xf32>
    %13 = arith.truncf %12 : vector<24x32xf32> to vector<24x32xbf16>
    %c0_12 = arith.constant 0 : index
    %c0_13 = arith.constant 0 : index
    %14 = vector.load %arg6[%c0_12, %c0_13] : memref<32x128xbf16, #tpu.memory_space<vmem>>, vector<32x128xbf16>
    %cst_14 = arith.constant dense<0.000000e+00> : vector<24x128xf32>
    %15 = tpu.matmul %13, %14, %cst_14 {dimension_numbers = #tpu.dot_dimension_numbers<[1], [0], [0], [1], [0, 0, 1, 1], [], []>} : vector<24x32xbf16>, vector<32x128xbf16>, vector<24x128xf32> -> vector<24x128xf32>
    %16 = arith.addf %11, %15 : vector<24x128xf32>
    %c0_15 = arith.constant 0 : index
    %c0_16 = arith.constant 0 : index
    %17 = vector.load %arg8[%c0_15, %c0_16] : memref<24x128xf32, #tpu.memory_space<vmem>>, vector<24x128xf32>
    tpu.vector_store %arg8[%c0_15, %c0_16], %16 {strides = array<i32>} : memref<24x128xf32, #tpu.memory_space<vmem>>, vector<24x128xf32>,
    return
  }
  func.func @transform_0(%arg0: i32) -> (i32, i32) {
    %c0_i32 = arith.constant 0 : i32
    %c0_i32_0 = arith.constant 0 : i32
    return %arg0, %c0_i32 : i32, i32
  }
  func.func @transform_1(%arg0: i32) -> (i32, i32) {
    %c0_i32 = arith.constant 0 : i32
    %c0_i32_0 = arith.constant 0 : i32
    return %arg0, %c0_i32 : i32, i32
  }
  func.func @transform_2(%arg0: i32) -> (i32, i32) {
    %c0_i32 = arith.constant 0 : i32
    %c0_i32_0 = arith.constant 0 : i32
    return %arg0, %c0_i32 : i32, i32
  }
  func.func @transform_3(%arg0: i32) -> (i32, i32) {
    %c0_i32 = arith.constant 0 : i32
    %c0_i32_0 = arith.constant 0 : i32
    %c0_i32_1 = arith.constant 0 : i32
    return %c0_i32, %c0_i32_0 : i32, i32
  }
  func.func @transform_4(%arg0: i32) -> (i32, i32) {
    %c0_i32 = arith.constant 0 : i32
    %c0_i32_0 = arith.constant 0 : i32
    %c0_i32_1 = arith.constant 0 : i32
    return %c0_i32, %c0_i32_0 : i32, i32
  }
  func.func @transform_5(%arg0: i32) -> (i32, i32) {
    %c0_i32 = arith.constant 0 : i32
    %c0_i32_0 = arith.constant 0 : i32
    %c0_i32_1 = arith.constant 0 : i32
    return %c0_i32, %c0_i32_0 : i32, i32
  }
  func.func @transform_6(%arg0: i32) -> (i32, i32) {
    %c0_i32 = arith.constant 0 : i32
    %c0_i32_0 = arith.constant 0 : i32
    %c0_i32_1 = arith.constant 0 : i32
    return %c0_i32, %c0_i32_0 : i32, i32
  }
  func.func @transform_7(%arg0: i32) -> (i32, i32) {
    %c0_i32 = arith.constant 0 : i32
    %c0_i32_0 = arith.constant 0 : i32
    return %arg0, %c0_i32 : i32, i32
  }
}

module attributes {stable_mosaic.version = 11 : i64} {
  func.func @_fused_linear_kernel(%arg0: i32, %arg1: memref<12x32xf32, #tpu.memory_space<vmem>>, %arg2: memref<12x32xf32, #tpu.memory_space<vmem>>, %arg3: memref<12x32xf32, #tpu.memory_space<vmem>>, %arg4: memref<32x128xbf16, #tpu.memory_space<vmem>>, %arg5: memref<32x128xbf16, #tpu.memory_space<vmem>>, %arg6: memref<32x128xbf16, #tpu.memory_space<vmem>>, %arg7: memref<1x128xf32, #tpu.memory_space<vmem>>, %arg8: memref<12x128xf32, #tpu.memory_space<vmem>>) attributes {dimension_semantics = [#tpu.dimension_semantics<parallel>], iteration_bounds = array<i64: 1>, scalar_prefetch = 0 : i64, scratch_operands = 0 : i64, tpu.core_type = #tpu.core_type<tc>, window_params = [{transform_indices = @transform_0, window_bounds = array<i64: 12, 32>}, {transform_indices = @transform_1, window_bounds = array<i64: 12, 32>}, {transform_indices = @transform_2, window_bounds = array<i64: 12, 32>}, {pipeline_mode = #tpu.pipeline_mode<synchronous>, transform_indices = @transform_3, window_bounds = array<i64: 32, 128>}, {pipeline_mode = #tpu.pipeline_mode<synchronous>, transform_indices = @transform_4, window_bounds = array<i64: 32, 128>}, {pipeline_mode = #tpu.pipeline_mode<synchronous>, transform_indices = @transform_5, window_bounds = array<i64: 32, 128>}, {pipeline_mode = #tpu.pipeline_mode<synchronous>, transform_indices = @transform_6, window_bounds = array<i64: 1, 128>}, {transform_indices = @transform_7, window_bounds = array<i64: 12, 128>}]} {
    %c0 = arith.constant 0 : index
    %c0_0 = arith.constant 0 : index
    %0 = vector.load %arg7[%c0, %c0_0] : memref<1x128xf32, #tpu.memory_space<vmem>>, vector<1x128xf32>
    %c0_1 = arith.constant 0 : index
    %c0_2 = arith.constant 0 : index
    %1 = vector.load %arg1[%c0_1, %c0_2] : memref<12x32xf32, #tpu.memory_space<vmem>>, vector<12x32xf32>
    %2 = arith.truncf %1 : vector<12x32xf32> to vector<12x32xbf16>
    %c0_3 = arith.constant 0 : index
    %c0_4 = arith.constant 0 : index
    %3 = vector.load %arg4[%c0_3, %c0_4] : memref<32x128xbf16, #tpu.memory_space<vmem>>, vector<32x128xbf16>
    %cst = arith.constant dense<0.000000e+00> : vector<12x128xf32>
    %4 = tpu.matmul %2, %3, %cst {dimension_numbers = #tpu.dot_dimension_numbers<[1], [0], [0], [1], [0, 0, 1, 1], [], []>} : vector<12x32xbf16>, vector<32x128xbf16>, vector<12x128xf32> -> vector<12x128xf32>
    %5 = vector.broadcast %0 : vector<1x128xf32> to vector<12x128xf32>
    %6 = arith.addf %5, %4 : vector<12x128xf32>
    %c0_5 = arith.constant 0 : index
    %c0_6 = arith.constant 0 : index
    %7 = vector.load %arg2[%c0_5, %c0_6] : memref<12x32xf32, #tpu.memory_space<vmem>>, vector<12x32xf32>
    %8 = arith.truncf %7 : vector<12x32xf32> to vector<12x32xbf16>
    %c0_7 = arith.constant 0 : index
    %c0_8 = arith.constant 0 : index
    %9 = vector.load %arg5[%c0_7, %c0_8] : memref<32x128xbf16, #tpu.memory_space<vmem>>, vector<32x128xbf16>
    %cst_9 = arith.constant dense<0.000000e+00> : vector<12x128xf32>
    %10 = tpu.matmul %8, %9, %cst_9 {dimension_numbers = #tpu.dot_dimension_numbers<[1], [0], [0], [1], [0, 0, 1, 1], [], []>} : vector<12x32xbf16>, vector<32x128xbf16>, vector<12x128xf32> -> vector<12x128xf32>
    %11 = arith.addf %6, %10 : vector<12x128xf32>
    %c0_10 = arith.constant 0 : index
    %c0_11 = arith.constant 0 : index
    %12 = vector.load %arg3[%c0_10, %c0_11] : memref<12x32xf32, #tpu.memory_space<vmem>>, vector<12x32xf32>
    %13 = arith.truncf %12 : vector<12x32xf32> to vector<12x32xbf16>
    %c0_12 = arith.constant 0 : index
    %c0_13 = arith.constant 0 : index
    %14 = vector.load %arg6[%c0_12, %c0_13] : memref<32x128xbf16, #tpu.memory_space<vmem>>, vector<32x128xbf16>
    %cst_14 = arith.constant dense<0.000000e+00> : vector<12x128xf32>
    %15 = tpu.matmul %13, %14, %cst_14 {dimension_numbers = #tpu.dot_dimension_numbers<[1], [0], [0], [1], [0, 0, 1, 1], [], []>} : vector<12x32xbf16>, vector<32x128xbf16>, vector<12x128xf32> -> vector<12x128xf32>
    %16 = arith.addf %11, %15 : vector<12x128xf32>
    %c0_15 = arith.constant 0 : index
    %c0_16 = arith.constant 0 : index
    %17 = vector.load %arg8[%c0_15, %c0_16] : memref<12x128xf32, #tpu.memory_space<vmem>>, vector<12x128xf32>
    tpu.vector_store %arg8[%c0_15, %c0_16], %16 {strides = array<i32>} : memref<12x128xf32, #tpu.memory_space<vmem>>, vector<12x128xf32>,
    return
  }
  func.func @transform_0(%arg0: i32) -> (i32, i32) {
    %c0_i32 = arith.constant 0 : i32
    %c0_i32_0 = arith.constant 0 : i32
    return %arg0, %c0_i32 : i32, i32
  }
  func.func @transform_1(%arg0: i32) -> (i32, i32) {
    %c0_i32 = arith.constant 0 : i32
    %c0_i32_0 = arith.constant 0 : i32
    return %arg0, %c0_i32 : i32, i32
  }
  func.func @transform_2(%arg0: i32) -> (i32, i32) {
    %c0_i32 = arith.constant 0 : i32
    %c0_i32_0 = arith.constant 0 : i32
    return %arg0, %c0_i32 : i32, i32
  }
  func.func @transform_3(%arg0: i32) -> (i32, i32) {
    %c0_i32 = arith.constant 0 : i32
    %c0_i32_0 = arith.constant 0 : i32
    %c0_i32_1 = arith.constant 0 : i32
    return %c0_i32, %c0_i32_0 : i32, i32
  }
  func.func @transform_4(%arg0: i32) -> (i32, i32) {
    %c0_i32 = arith.constant 0 : i32
    %c0_i32_0 = arith.constant 0 : i32
    %c0_i32_1 = arith.constant 0 : i32
    return %c0_i32, %c0_i32_0 : i32, i32
  }
  func.func @transform_5(%arg0: i32) -> (i32, i32) {
    %c0_i32 = arith.constant 0 : i32
    %c0_i32_0 = arith.constant 0 : i32
    %c0_i32_1 = arith.constant 0 : i32
    return %c0_i32, %c0_i32_0 : i32, i32
  }
  func.func @transform_6(%arg0: i32) -> (i32, i32) {
    %c0_i32 = arith.constant 0 : i32
    %c0_i32_0 = arith.constant 0 : i32
    %c0_i32_1 = arith.constant 0 : i32
    return %c0_i32, %c0_i32_0 : i32, i32
  }
  func.func @transform_7(%arg0: i32) -> (i32, i32) {
    %c0_i32 = arith.constant 0 : i32
    %c0_i32_0 = arith.constant 0 : i32
    return %arg0, %c0_i32 : i32, i32
  }
}

</mosaic_0001>

<llo_original>
// kernel: gine_forward.13
$region0: #{gine_forward.13}
  #allocation0 [shape = 'u32[]', space=smem, size = 0x4, offset = 0x4, fixed_abs, tag = 'smem constant byte address 0x4 - core index']
  #allocation1 [shape = 'u32[144,128]{1,0:T(1,128)}', space=vmem, size = 0x12000, scoped, tag = 'internal scratch']
  %s0 = inlined_call_operand.vmem [shape: f32[24,8], index: 0, kind: input, shape index: {}]
  %s1 = inlined_call_operand.vmem [shape: bf16[8,32], index: 1, kind: input, shape index: {}]
  %s2 = inlined_call_operand.vmem [shape: f32[1,32], index: 2, kind: input, shape index: {}]
  %s3 = inlined_call_operand.vmem [shape: f32[24,32], index: 3, kind: output, shape index: {}]
  %s4 = sld [smem:[#allocation0]]
  $region22: #{gine_forward.13} parent=0
    _
  %s6 = ssub.s32 1, %s4
  %s7 = scalar_select 0, %s6, %s4
  // Predicated region
  $region2: #{gine_forward.13} parent=0 // pred_check
    _
  $region3: #{gine_forward.13} parent=0 // pred_check_branch
    %9 = sbr.rel (0) target = $region5
  $region4: #{gine_forward.13} parent=0 // pred_region
    _
  $region5: #{gine_forward.13} parent=0 // pred_fallthru
    _
  // Predicated region
  $region6: #{gine_forward.13} parent=0 // pred_check
    _
  $region7: #{gine_forward.13} parent=0 // pred_check_branch
    %11 = sbr.rel (0) target = $region9
  $region8: #{gine_forward.13} parent=0 // pred_region
    _
  $region9: #{gine_forward.13} parent=0 // pred_fallthru
    _
  // Predicated region
  $region10: #{gine_forward.13} parent=0 // pred_check
    _
  $region11: #{gine_forward.13} parent=0 // pred_check_branch
    %13 = sbr.rel (0) target = $region13
  $region12: #{gine_forward.13} parent=0 // pred_region
    _
  $region13: #{gine_forward.13} parent=0 // pred_fallthru
    _
  %v15 = vld [vmem:[%s2] sm:$0x1]
  %v16 = vld [vmem:[%s0] sm:$0xff]
  %v17 = vld [vmem:[%s0 + $0x8] sm:$0xff]
  %v18 = vld [vmem:[%s0 + $0x10] sm:$0xff]
  %v19 = vpack.c.bf16 %v17, %v16
  %v20 = vpack.c.bf16 %v18, %v18
  %v21 = vld [vmem:[%s1] sm:$0xf]
  %vm22 = vcmask 64512
  %v24 = vsel %vm22, %v19, 0
  %v27 = vsel %vm22, %v20, 0
  %vm29 = vcmask 1043456
  %v31 = vsel %vm29, %v21, 0
  %33 = vmatprep.subr.bf16.mxu0 0
  %34 = vmatpush1.bf16.msra.mxu0 0
  %35 = vmatprep.subr.bf16.mxu0 0
  %36 = vmatpush1.bf16.msra.mxu0 0
  %37 = vmatprep.subr.bf16.mxu0 0
  %38 = vmatpush1.bf16.msra.mxu0 0
  %39 = vmatprep.subr.bf16.mxu0 0
  %40 = vmatpush1.bf16.msra.mxu0 0
  %41 = vmatprep.subr.bf16.mxu0 0
  %42 = vmatpush1.bf16.msra.mxu0 0
  %43 = vmatprep.subr.bf16.mxu0 0
  %44 = vmatpush1.bf16.msra.mxu0 0
  %45 = vmatprep.subr.bf16.mxu0 0
  %46 = vmatpush1.bf16.msra.mxu0 0
  %47 = vmatprep.subr.bf16.mxu0 0
  %48 = vmatpush1.bf16.msra.mxu0 %v31
  %49 = vmatprep.subr.bf16.mxu0 0
  %50 = vmatpush2.bf16.msra.mxu0 0
  %51 = vmatprep.subr.bf16.mxu0 0
  %52 = vmatpush2.bf16.msra.mxu0 0
  %53 = vmatprep.subr.bf16.mxu0 0
  %54 = vmatpush2.bf16.msra.mxu0 0
  %55 = vmatprep.subr.bf16.mxu0 0
  %56 = vmatpush2.bf16.msra.mxu0 0
  %57 = vmatprep.subr.bf16.mxu0 0
  %58 = vmatpush2.bf16.msra.mxu0 0
  %59 = vmatprep.subr.bf16.mxu0 0
  %60 = vmatpush2.bf16.msra.mxu0 0
  %61 = vmatprep.subr.bf16.mxu0 0
  %62 = vmatpush2.bf16.msra.mxu0 0
  %63 = vmatprep.subr.bf16.mxu0 0
  %64 = vmatpush2.bf16.msra.mxu0 0
  %65 = vmatprep.mubr.bf16.mxu0 0
  %66 = vmatmul.mubr.bf16.gmra.mxu0 %v24
  %v67 = vpop.f32.mrf.mxu0
  %v68 = vadd.f32 0.0, %v67
  %v69 = vpop.f32.mrf.mxu0
  %v70 = vpop.f32.mrf.mxu0
  %v71 = vadd.f32 0.0, %v70
  %v72 = vpop.f32.mrf.mxu0
  %73 = vmatprep.mubr.bf16.mxu0 0
  %74 = vmatmul.mubr.bf16.gmra.mxu0 %v27
  %v75 = vpop.f32.mrf.mxu0
  %v76 = vadd.f32 0.0, %v75
  %v77 = vpop.f32.mrf.mxu0
  %v78 = vpop.f32.mrf.mxu0
  %v79 = vpop.f32.mrf.mxu0
  %80 = vdwg.mxu0
  %v82 = vlaneseq
  %v83 = vshrl.u32 %v82, 7
  %v84 = vsub.s32 0, %v83
  %v85 = vrot.slane %v15, %v84
  %v87 = vadd.f32 %v85, %v68
  %v88 = vadd.f32 %v85, %v71
  %v89 = vadd.f32 %v85, %v76
  %vm90 = vcmask 261120
  %91 = vst.msk [vmem:[%s3] sm:$0xff] %vm90, %v87
  %92 = vst.msk [vmem:[%s3 + $0x8] sm:$0xff] %vm90, %v88
  %93 = vst.msk [vmem:[%s3 + $0x10] sm:$0xff] %vm90, %v89
  // Predicated region
  $region14: #{gine_forward.13} parent=0 // pred_check
    _
  $region15: #{gine_forward.13} parent=0 // pred_check_branch
    %95 = sbr.rel (0) target = $region17
  $region16: #{gine_forward.13} parent=0 // pred_region
    _
  $region17: #{gine_forward.13} parent=0 // pred_fallthru
    _
  // Predicated region
  $region18: #{gine_forward.13} parent=0 // pred_check
    _
  $region19: #{gine_forward.13} parent=0 // pred_check_branch
    %97 = sbr.rel (0) target = $region21
  $region20: #{gine_forward.13} parent=0 // pred_region
    _
  $region21: #{gine_forward.13} parent=0 // pred_fallthru
    _

// kernel: gine_forward.12
$region0: #{gine_forward.12}
  #allocation0 [shape = 'u32[]', space=smem, size = 0x4, offset = 0x4, fixed_abs, tag = 'smem constant byte address 0x4 - core index']
  #allocation1 [shape = 'u32[144,128]{1,0:T(1,128)}', space=vmem, size = 0x12000, scoped, tag = 'internal scratch']
  %s0 = inlined_call_operand.vmem [shape: f32[12,8], index: 0, kind: input, shape index: {}]
  %s1 = inlined_call_operand.vmem [shape: bf16[8,32], index: 1, kind: input, shape index: {}]
  %s2 = inlined_call_operand.vmem [shape: f32[1,32], index: 2, kind: input, shape index: {}]
  %s3 = inlined_call_operand.vmem [shape: f32[12,32], index: 3, kind: output, shape index: {}]
  %s4 = sld [smem:[#allocation0]]
  $region22: #{gine_forward.12} parent=0
    _
  %s6 = ssub.s32 1, %s4
  %s7 = scalar_select 0, %s6, %s4
  // Predicated region
  $region2: #{gine_forward.12} parent=0 // pred_check
    _
  $region3: #{gine_forward.12} parent=0 // pred_check_branch
    %9 = sbr.rel (0) target = $region5
  $region4: #{gine_forward.12} parent=0 // pred_region
    _
  $region5: #{gine_forward.12} parent=0 // pred_fallthru
    _
  // Predicated region
  $region6: #{gine_forward.12} parent=0 // pred_check
    _
  $region7: #{gine_forward.12} parent=0 // pred_check_branch
    %11 = sbr.rel (0) target = $region9
  $region8: #{gine_forward.12} parent=0 // pred_region
    _
  $region9: #{gine_forward.12} parent=0 // pred_fallthru
    _
  // Predicated region
  $region10: #{gine_forward.12} parent=0 // pred_check
    _
  $region11: #{gine_forward.12} parent=0 // pred_check_branch
    %13 = sbr.rel (0) target = $region13
  $region12: #{gine_forward.12} parent=0 // pred_region
    _
  $region13: #{gine_forward.12} parent=0 // pred_fallthru
    _
  %v15 = vld [vmem:[%s2] sm:$0x1]
  %v16 = vld [vmem:[%s0] sm:$0xff]
  %v17 = vld [vmem:[%s0 + $0x8] sm:$0xf]
  %v18 = vpack.c.bf16 %v17, %v16
  %v19 = vld [vmem:[%s1] sm:$0xf]
  %vm20 = vcmask 64512
  %v22 = vsel %vm20, %v18, 0
  %vm24 = vcmask 1043456
  %v26 = vsel %vm24, %v19, 0
  %28 = vmatprep.subr.bf16.mxu0 0
  %29 = vmatpush1.bf16.msra.mxu0 0
  %30 = vmatprep.subr.bf16.mxu0 0
  %31 = vmatpush1.bf16.msra.mxu0 0
  %32 = vmatprep.subr.bf16.mxu0 0
  %33 = vmatpush1.bf16.msra.mxu0 0
  %34 = vmatprep.subr.bf16.mxu0 0
  %35 = vmatpush1.bf16.msra.mxu0 0
  %36 = vmatprep.subr.bf16.mxu0 0
  %37 = vmatpush1.bf16.msra.mxu0 0
  %38 = vmatprep.subr.bf16.mxu0 0
  %39 = vmatpush1.bf16.msra.mxu0 0
  %40 = vmatprep.subr.bf16.mxu0 0
  %41 = vmatpush1.bf16.msra.mxu0 0
  %42 = vmatprep.subr.bf16.mxu0 0
  %43 = vmatpush1.bf16.msra.mxu0 %v26
  %44 = vmatprep.subr.bf16.mxu0 0
  %45 = vmatpush2.bf16.msra.mxu0 0
  %46 = vmatprep.subr.bf16.mxu0 0
  %47 = vmatpush2.bf16.msra.mxu0 0
  %48 = vmatprep.subr.bf16.mxu0 0
  %49 = vmatpush2.bf16.msra.mxu0 0
  %50 = vmatprep.subr.bf16.mxu0 0
  %51 = vmatpush2.bf16.msra.mxu0 0
  %52 = vmatprep.subr.bf16.mxu0 0
  %53 = vmatpush2.bf16.msra.mxu0 0
  %54 = vmatprep.subr.bf16.mxu0 0
  %55 = vmatpush2.bf16.msra.mxu0 0
  %56 = vmatprep.subr.bf16.mxu0 0
  %57 = vmatpush2.bf16.msra.mxu0 0
  %58 = vmatprep.subr.bf16.mxu0 0
  %59 = vmatpush2.bf16.msra.mxu0 0
  %60 = vmatprep.mubr.bf16.mxu0 0
  %61 = vmatmul.mubr.bf16.gmra.mxu0 %v22
  %v62 = vpop.f32.mrf.mxu0
  %v63 = vadd.f32 0.0, %v62
  %v64 = vpop.f32.mrf.mxu0
  %v65 = vpop.f32.mrf.mxu0
  %v66 = vadd.f32 0.0, %v65
  %v67 = vpop.f32.mrf.mxu0
  %68 = vdwg.mxu0
  %v70 = vlaneseq
  %v71 = vshrl.u32 %v70, 7
  %v72 = vsub.s32 0, %v71
  %v73 = vrot.slane %v15, %v72
  %v75 = vadd.f32 %v73, %v63
  %v76 = vadd.f32 %v73, %v66
  %vm77 = vcmask 261120
  %78 = vst.msk [vmem:[%s3] sm:$0xff] %vm77, %v75
  %vm79 = vcmask 257024
  %80 = vst.msk [vmem:[%s3 + $0x8] sm:$0xf] %vm79, %v76
  // Predicated region
  $region14: #{gine_forward.12} parent=0 // pred_check
    _
  $region15: #{gine_forward.12} parent=0 // pred_check_branch
    %82 = sbr.rel (0) target = $region17
  $region16: #{gine_forward.12} parent=0 // pred_region
    _
  $region17: #{gine_forward.12} parent=0 // pred_fallthru
    _
  // Predicated region
  $region18: #{gine_forward.12} parent=0 // pred_check
    _
  $region19: #{gine_forward.12} parent=0 // pred_check_branch
    %84 = sbr.rel (0) target = $region21
  $region20: #{gine_forward.12} parent=0 // pred_region
    _
  $region21: #{gine_forward.12} parent=0 // pred_fallthru
    _

// kernel: gine_forward.15
$region0: #{gine_forward.15}
  #allocation0 [shape = 'u32[]', space=smem, size = 0x4, offset = 0x4, fixed_abs, tag = 'smem constant byte address 0x4 - core index']
  #allocation1 [shape = 'u32[144,128]{1,0:T(1,128)}', space=vmem, size = 0x12000, scoped, tag = 'internal scratch']
  %s0 = inlined_call_operand.vmem [shape: f32[24,32], index: 0, kind: input, shape index: {}]
  %s1 = inlined_call_operand.vmem [shape: f32[24,32], index: 1, kind: input, shape index: {}]
  %s2 = inlined_call_operand.vmem [shape: f32[24,32], index: 2, kind: input, shape index: {}]
  %s3 = inlined_call_operand.vmem [shape: f32[24,32], index: 3, kind: input, shape index: {}]
  %s4 = inlined_call_operand.vmem [shape: f32[24,32], index: 4, kind: input, shape index: {}]
  %s5 = inlined_call_operand.vmem [shape: f32[24,32], index: 5, kind: input, shape index: {}]
  %s6 = inlined_call_operand.vmem [shape: bf16[32,32], index: 6, kind: input, shape index: {}]
  %s7 = inlined_call_operand.vmem [shape: bf16[32,32], index: 7, kind: input, shape index: {}]
  %s8 = inlined_call_operand.vmem [shape: bf16[32,32], index: 8, kind: input, shape index: {}]
  %s9 = inlined_call_operand.vmem [shape: bf16[32,32], index: 9, kind: input, shape index: {}]
  %s10 = inlined_call_operand.vmem [shape: bf16[32,32], index: 10, kind: input, shape index: {}]
  %s11 = inlined_call_operand.vmem [shape: bf16[32,32], index: 11, kind: input, shape index: {}]
  %s12 = inlined_call_operand.vmem [shape: f32[1,32], index: 12, kind: input, shape index: {}]
  %s13 = inlined_call_operand.vmem [shape: bf16[32,32], index: 13, kind: input, shape index: {}]
  %s14 = inlined_call_operand.vmem [shape: f32[1,32], index: 14, kind: input, shape index: {}]
  %s15 = inlined_call_operand.vmem [shape: f32[24,32], index: 15, kind: output, shape index: {}]
  %s16 = sld [smem:[#allocation0]]
  $region70: #{gine_forward.15} parent=0
    _
  %s18 = ssub.s32 1, %s16
  %s19 = scalar_select 0, %s18, %s16
  // Predicated region
  $region2: #{gine_forward.15} parent=0 // pred_check
    _
  $region3: #{gine_forward.15} parent=0 // pred_check_branch
    %21 = sbr.rel (0) target = $region5
  $region4: #{gine_forward.15} parent=0 // pred_region
    _
  $region5: #{gine_forward.15} parent=0 // pred_fallthru
    _
  // Predicated region
  $region6: #{gine_forward.15} parent=0 // pred_check
    _
  $region7: #{gine_forward.15} parent=0 // pred_check_branch
    %23 = sbr.rel (0) target = $region9
  $region8: #{gine_forward.15} parent=0 // pred_region
    _
  $region9: #{gine_forward.15} parent=0 // pred_fallthru
    _
  // Predicated region
  $region10: #{gine_forward.15} parent=0 // pred_check
    _
  $region11: #{gine_forward.15} parent=0 // pred_check_branch
    %25 = sbr.rel (0) target = $region13
  $region12: #{gine_forward.15} parent=0 // pred_region
    _
  $region13: #{gine_forward.15} parent=0 // pred_fallthru
    _
  // Predicated region
  $region14: #{gine_forward.15} parent=0 // pred_check
    _
  $region15: #{gine_forward.15} parent=0 // pred_check_branch
    %27 = sbr.rel (0) target = $region17
  $region16: #{gine_forward.15} parent=0 // pred_region
    _
  $region17: #{gine_forward.15} parent=0 // pred_fallthru
    _
  // Predicated region
  $region18: #{gine_forward.15} parent=0 // pred_check
    _
  $region19: #{gine_forward.15} parent=0 // pred_check_branch
    %29 = sbr.rel (0) target = $region21
  $region20: #{gine_forward.15} parent=0 // pred_region
    _
  $region21: #{gine_forward.15} parent=0 // pred_fallthru
    _
  // Predicated region
  $region22: #{gine_forward.15} parent=0 // pred_check
    _
  $region23: #{gine_forward.15} parent=0 // pred_check_branch
    %31 = sbr.rel (0) target = $region25
  $region24: #{gine_forward.15} parent=0 // pred_region
    _
  $region25: #{gine_forward.15} parent=0 // pred_fallthru
    _
  // Predicated region
  $region26: #{gine_forward.15} parent=0 // pred_check
    _
  $region27: #{gine_forward.15} parent=0 // pred_check_branch
    %33 = sbr.rel (0) target = $region29
  $region28: #{gine_forward.15} parent=0 // pred_region
    _
  $region29: #{gine_forward.15} parent=0 // pred_fallthru
    _
  // Predicated region
  $region30: #{gine_forward.15} parent=0 // pred_check
    _
  $region31: #{gine_forward.15} parent=0 // pred_check_branch
    %35 = sbr.rel (0) target = $region33
  $region32: #{gine_forward.15} parent=0 // pred_region
    _
  $region33: #{gine_forward.15} parent=0 // pred_fallthru
    _
  // Predicated region
  $region34: #{gine_forward.15} parent=0 // pred_check
    _
  $region35: #{gine_forward.15} parent=0 // pred_check_branch
    %37 = sbr.rel (0) target = $region37
  $region36: #{gine_forward.15} parent=0 // pred_region
    _
  $region37: #{gine_forward.15} parent=0 // pred_fallthru
    _
  // Predicated region
  $region38: #{gine_forward.15} parent=0 // pred_check
    _
  $region39: #{gine_forward.15} parent=0 // pred_check_branch
    %39 = sbr.rel (0) target = $region41
  $region40: #{gine_forward.15} parent=0 // pred_region
    _
  $region41: #{gine_forward.15} parent=0 // pred_fallthru
    _
  // Predicated region
  $region42: #{gine_forward.15} parent=0 // pred_check
    _
  $region43: #{gine_forward.15} parent=0 // pred_check_branch
    %41 = sbr.rel (0) target = $region45
  $region44: #{gine_forward.15} parent=0 // pred_region
    _
  $region45: #{gine_forward.15} parent=0 // pred_fallthru
    _
  // Predicated region
  $region46: #{gine_forward.15} parent=0 // pred_check
    _
  $region47: #{gine_forward.15} parent=0 // pred_check_branch
    %43 = sbr.rel (0) target = $region49
  $region48: #{gine_forward.15} parent=0 // pred_region
    _
  $region49: #{gine_forward.15} parent=0 // pred_fallthru
    _
  // Predicated region
  $region50: #{gine_forward.15} parent=0 // pred_check
    _
  $region51: #{gine_forward.15} parent=0 // pred_check_branch
    %45 = sbr.rel (0) target = $region53
  $region52: #{gine_forward.15} parent=0 // pred_region
    _
  $region53: #{gine_forward.15} parent=0 // pred_fallthru
    _
  // Predicated region
  $region54: #{gine_forward.15} parent=0 // pred_check
    _
  $region55: #{gine_forward.15} parent=0 // pred_check_branch
    %47 = sbr.rel (0) target = $region57
  $region56: #{gine_forward.15} parent=0 // pred_region
    _
  $region57: #{gine_forward.15} parent=0 // pred_fallthru
    _
  // Predicated region
  $region58: #{gine_forward.15} parent=0 // pred_check
    _
  $region59: #{gine_forward.15} parent=0 // pred_check_branch
    %49 = sbr.rel (0) target = $region61
  $region60: #{gine_forward.15} parent=0 // pred_region
    _
  $region61: #{gine_forward.15} parent=0 // pred_fallthru
    _
  %v51 = vld [vmem:[%s12] sm:$0x1]
  %v52 = vld [vmem:[%s0] sm:$0xff]
  %v53 = vld [vmem:[%s0 + $0x8] sm:$0xff]
  %v54 = vld [vmem:[%s0 + $0x10] sm:$0xff]
  %v55 = vpack.c.bf16 %v53, %v52
  %v56 = vpack.c.bf16 %v54, %v54
  %v57 = vld [vmem:[%s6] sm:$0xf]
  %v58 = vld [vmem:[%s6 + $0x4] sm:$0xf]
  %v59 = vld [vmem:[%s6 + $0x8] sm:$0xf]
  %v60 = vld [vmem:[%s6 + $0xc] sm:$0xf]
  %v65 = vunpack.c.l.b16 %v57
  %v66 = vunpack.c.l.b16 %v58
  %v67 = vunpack.c.l.b16 %v59
  %v68 = vunpack.c.l.b16 %v60
  %v69 = vpack.c.b16 %v66, %v65
  %v70 = vpack.c.b16 %v68, %v67
  %vm73 = vcmask 261120
  %v75 = vsel %vm73, %v55, 0
  %v78 = vsel %vm73, %v56, 0
  %80 = vmatprep.subr.bf16.mxu0 0
  %81 = vmatpush1.bf16.msra.mxu0 0
  %82 = vmatprep.subr.bf16.mxu0 0
  %83 = vmatpush1.bf16.msra.mxu0 0
  %84 = vmatprep.subr.bf16.mxu0 0
  %85 = vmatpush1.bf16.msra.mxu0 0
  %86 = vmatprep.subr.bf16.mxu0 0
  %87 = vmatpush1.bf16.msra.mxu0 0
  %88 = vmatprep.subr.bf16.mxu0 0
  %89 = vmatpush1.bf16.msra.mxu0 0
  %90 = vmatprep.subr.bf16.mxu0 0
  %91 = vmatpush1.bf16.msra.mxu0 0
  %92 = vmatprep.subr.bf16.mxu0 0
  %93 = vmatpush1.bf16.msra.mxu0 %v70
  %94 = vmatprep.subr.bf16.mxu0 0
  %95 = vmatpush1.bf16.msra.mxu0 %v69
  %96 = vmatprep.subr.bf16.mxu0 0
  %97 = vmatpush2.bf16.msra.mxu0 0
  %98 = vmatprep.subr.bf16.mxu0 0
  %99 = vmatpush2.bf16.msra.mxu0 0
  %100 = vmatprep.subr.bf16.mxu0 0
  %101 = vmatpush2.bf16.msra.mxu0 0
  %102 = vmatprep.subr.bf16.mxu0 0
  %103 = vmatpush2.bf16.msra.mxu0 0
  %104 = vmatprep.subr.bf16.mxu0 0
  %105 = vmatpush2.bf16.msra.mxu0 0
  %106 = vmatprep.subr.bf16.mxu0 0
  %107 = vmatpush2.bf16.msra.mxu0 0
  %108 = vmatprep.subr.bf16.mxu0 0
  %109 = vmatpush2.bf16.msra.mxu0 0
  %110 = vmatprep.subr.bf16.mxu0 0
  %111 = vmatpush2.bf16.msra.mxu0 0
  %112 = vmatprep.mubr.bf16.mxu0 0
  %113 = vmatmul.mubr.bf16.gmra.mxu0 %v75
  %v114 = vpop.f32.mrf.mxu0
  %v115 = vadd.f32 0.0, %v114
  %v116 = vpop.f32.mrf.mxu0
  %v117 = vpop.f32.mrf.mxu0
  %v118 = vadd.f32 0.0, %v117
  %v119 = vpop.f32.mrf.mxu0
  %120 = vmatprep.mubr.bf16.mxu0 0
  %121 = vmatmul.mubr.bf16.gmra.mxu0 %v78
  %v122 = vpop.f32.mrf.mxu0
  %v123 = vadd.f32 0.0, %v122
  %v124 = vpop.f32.mrf.mxu0
  %v125 = vpop.f32.mrf.mxu0
  %v126 = vpop.f32.mrf.mxu0
  %127 = vdwg.mxu0
  %v129 = vlaneseq
  %v130 = vshrl.u32 %v129, 7
  %v131 = vsub.s32 0, %v130
  %v132 = vrot.slane %v51, %v131
  %v134 = vadd.f32 %v132, %v115
  %v135 = vadd.f32 %v132, %v118
  %v136 = vadd.f32 %v132, %v123
  %v137 = vld [vmem:[%s1] sm:$0xff]
  %v138 = vld [vmem:[%s1 + $0x8] sm:$0xff]
  %v139 = vld [vmem:[%s1 + $0x10] sm:$0xff]
  %v140 = vpack.c.bf16 %v138, %v137
  %v141 = vpack.c.bf16 %v139, %v139
  %v142 = vld [vmem:[%s7] sm:$0xf]
  %v143 = vld [vmem:[%s7 + $0x4] sm:$0xf]
  %v144 = vld [vmem:[%s7 + $0x8] sm:$0xf]
  %v145 = vld [vmem:[%s7 + $0xc] sm:$0xf]
  %v150 = vunpack.c.l.b16 %v142
  %v151 = vunpack.c.l.b16 %v143
  %v152 = vunpack.c.l.b16 %v144
  %v153 = vunpack.c.l.b16 %v145
  %v154 = vpack.c.b16 %v151, %v150
  %v155 = vpack.c.b16 %v153, %v152
  %v159 = vsel %vm73, %v140, 0
  %v162 = vsel %vm73, %v141, 0
  %164 = vmatprep.subr.bf16.mxu0 0
  %165 = vmatpush1.bf16.msra.mxu0 0
  %166 = vmatprep.subr.bf16.mxu0 0
  %167 = vmatpush1.bf16.msra.mxu0 0
  %168 = vmatprep.subr.bf16.mxu0 0
  %169 = vmatpush1.bf16.msra.mxu0 0
  %170 = vmatprep.subr.bf16.mxu0 0
  %171 = vmatpush1.bf16.msra.mxu0 0
  %172 = vmatprep.subr.bf16.mxu0 0
  %173 = vmatpush1.bf16.msra.mxu0 0
  %174 = vmatprep.subr.bf16.mxu0 0
  %175 = vmatpush1.bf16.msra.mxu0 0
  %176 = vmatprep.subr.bf16.mxu0 0
  %177 = vmatpush1.bf16.msra.mxu0 %v155
  %178 = vmatprep.subr.bf16.mxu0 0
  %179 = vmatpush1.bf16.msra.mxu0 %v154
  %180 = vmatprep.subr.bf16.mxu0 0
  %181 = vmatpush2.bf16.msra.mxu0 0
  %182 = vmatprep.subr.bf16.mxu0 0
  %183 = vmatpush2.bf16.msra.mxu0 0
  %184 = vmatprep.subr.bf16.mxu0 0
  %185 = vmatpush2.bf16.msra.mxu0 0
  %186 = vmatprep.subr.bf16.mxu0 0
  %187 = vmatpush2.bf16.msra.mxu0 0
  %188 = vmatprep.subr.bf16.mxu0 0
  %189 = vmatpush2.bf16.msra.mxu0 0
  %190 = vmatprep.subr.bf16.mxu0 0
  %191 = vmatpush2.bf16.msra.mxu0 0
  %192 = vmatprep.subr.bf16.mxu0 0
  %193 = vmatpush2.bf16.msra.mxu0 0
  %194 = vmatprep.subr.bf16.mxu0 0
  %195 = vmatpush2.bf16.msra.mxu0 0
  %196 = vmatprep.mubr.bf16.mxu0 0
  %197 = vmatmul.mubr.bf16.gmra.mxu0 %v159
  %v198 = vpop.f32.mrf.mxu0
  %v199 = vadd.f32 0.0, %v198
  %v200 = vpop.f32.mrf.mxu0
  %v201 = vpop.f32.mrf.mxu0
  %v202 = vadd.f32 0.0, %v201
  %v203 = vpop.f32.mrf.mxu0
  %204 = vmatprep.mubr.bf16.mxu0 0
  %205 = vmatmul.mubr.bf16.gmra.mxu0 %v162
  %v206 = vpop.f32.mrf.mxu0
  %v207 = vadd.f32 0.0, %v206
  %v208 = vpop.f32.mrf.mxu0
  %v209 = vpop.f32.mrf.mxu0
  %v210 = vpop.f32.mrf.mxu0
  %211 = vdwg.mxu0
  %v212 = vadd.f32 %v134, %v199
  %v213 = vadd.f32 %v135, %v202
  %v214 = vadd.f32 %v136, %v207
  %v215 = vld [vmem:[%s2] sm:$0xff]
  %v216 = vld [vmem:[%s2 + $0x8] sm:$0xff]
  %v217 = vld [vmem:[%s2 + $0x10] sm:$0xff]
  %v218 = vpack.c.bf16 %v216, %v215
  %v219 = vpack.c.bf16 %v217, %v217
  %v220 = vld [vmem:[%s8] sm:$0xf]
  %v221 = vld [vmem:[%s8 + $0x4] sm:$0xf]
  %v222 = vld [vmem:[%s8 + $0x8] sm:$0xf]
  %v223 = vld [vmem:[%s8 + $0xc] sm:$0xf]
  %v228 = vunpack.c.l.b16 %v220
  %v229 = vunpack.c.l.b16 %v221
  %v230 = vunpack.c.l.b16 %v222
  %v231 = vunpack.c.l.b16 %v223
  %v232 = vpack.c.b16 %v229, %v228
  %v233 = vpack.c.b16 %v231, %v230
  %v237 = vsel %vm73, %v218, 0
  %v240 = vsel %vm73, %v219, 0
  %242 = vmatprep.subr.bf16.mxu0 0
  %243 = vmatpush1.bf16.msra.mxu0 0
  %244 = vmatprep.subr.bf16.mxu0 0
  %245 = vmatpush1.bf16.msra.mxu0 0
  %246 = vmatprep.subr.bf16.mxu0 0
  %247 = vmatpush1.bf16.msra.mxu0 0
  %248 = vmatprep.subr.bf16.mxu0 0
  %249 = vmatpush1.bf16.msra.mxu0 0
  %250 = vmatprep.subr.bf16.mxu0 0
  %251 = vmatpush1.bf16.msra.mxu0 0
  %252 = vmatprep.subr.bf16.mxu0 0
  %253 = vmatpush1.bf16.msra.mxu0 0
  %254 = vmatprep.subr.bf16.mxu0 0
  %255 = vmatpush1.bf16.msra.mxu0 %v233
  %256 = vmatprep.subr.bf16.mxu0 0
  %257 = vmatpush1.bf16.msra.mxu0 %v232
  %258 = vmatprep.subr.bf16.mxu0 0
  %259 = vmatpush2.bf16.msra.mxu0 0
  %260 = vmatprep.subr.bf16.mxu0 0
  %261 = vmatpush2.bf16.msra.mxu0 0
  %262 = vmatprep.subr.bf16.mxu0 0
  %263 = vmatpush2.bf16.msra.mxu0 0
  %264 = vmatprep.subr.bf16.mxu0 0
  %265 = vmatpush2.bf16.msra.mxu0 0
  %266 = vmatprep.subr.bf16.mxu0 0
  %267 = vmatpush2.bf16.msra.mxu0 0
  %268 = vmatprep.subr.bf16.mxu0 0
  %269 = vmatpush2.bf16.msra.mxu0 0
  %270 = vmatprep.subr.bf16.mxu0 0
  %271 = vmatpush2.bf16.msra.mxu0 0
  %272 = vmatprep.subr.bf16.mxu0 0
  %273 = vmatpush2.bf16.msra.mxu0 0
  %274 = vmatprep.mubr.bf16.mxu0 0
  %275 = vmatmul.mubr.bf16.gmra.mxu0 %v237
  %v276 = vpop.f32.mrf.mxu0
  %v277 = vadd.f32 0.0, %v276
  %v278 = vpop.f32.mrf.mxu0
  %v279 = vpop.f32.mrf.mxu0
  %v280 = vadd.f32 0.0, %v279
  %v281 = vpop.f32.mrf.mxu0
  %282 = vmatprep.mubr.bf16.mxu0 0
  %283 = vmatmul.mubr.bf16.gmra.mxu0 %v240
  %v284 = vpop.f32.mrf.mxu0
  %v285 = vadd.f32 0.0, %v284
  %v286 = vpop.f32.mrf.mxu0
  %v287 = vpop.f32.mrf.mxu0
  %v288 = vpop.f32.mrf.mxu0
  %289 = vdwg.mxu0
  %v290 = vadd.f32 %v212, %v277
  %v291 = vadd.f32 %v213, %v280
  %v292 = vadd.f32 %v214, %v285
  %v293 = vld [vmem:[%s3] sm:$0xff]
  %v294 = vld [vmem:[%s3 + $0x8] sm:$0xff]
  %v295 = vld [vmem:[%s3 + $0x10] sm:$0xff]
  %v296 = vpack.c.bf16 %v294, %v293
  %v297 = vpack.c.bf16 %v295, %v295
  %v298 = vld [vmem:[%s9] sm:$0xf]
  %v299 = vld [vmem:[%s9 + $0x4] sm:$0xf]
  %v300 = vld [vmem:[%s9 + $0x8] sm:$0xf]
  %v301 = vld [vmem:[%s9 + $0xc] sm:$0xf]
  %v306 = vunpack.c.l.b16 %v298
  %v307 = vunpack.c.l.b16 %v299
  %v308 = vunpack.c.l.b16 %v300
  %v309 = vunpack.c.l.b16 %v301
  %v310 = vpack.c.b16 %v307, %v306
  %v311 = vpack.c.b16 %v309, %v308
  %v315 = vsel %vm73, %v296, 0
  %v318 = vsel %vm73, %v297, 0
  %320 = vmatprep.subr.bf16.mxu0 0
  %321 = vmatpush1.bf16.msra.mxu0 0
  %322 = vmatprep.subr.bf16.mxu0 0
  %323 = vmatpush1.bf16.msra.mxu0 0
  %324 = vmatprep.subr.bf16.mxu0 0
  %325 = vmatpush1.bf16.msra.mxu0 0
  %326 = vmatprep.subr.bf16.mxu0 0
  %327 = vmatpush1.bf16.msra.mxu0 0
  %328 = vmatprep.subr.bf16.mxu0 0
  %329 = vmatpush1.bf16.msra.mxu0 0
  %330 = vmatprep.subr.bf16.mxu0 0
  %331 = vmatpush1.bf16.msra.mxu0 0
  %332 = vmatprep.subr.bf16.mxu0 0
  %333 = vmatpush1.bf16.msra.mxu0 %v311
  %334 = vmatprep.subr.bf16.mxu0 0
  %335 = vmatpush1.bf16.msra.mxu0 %v310
  %336 = vmatprep.subr.bf16.mxu0 0
  %337 = vmatpush2.bf16.msra.mxu0 0
  %338 = vmatprep.subr.bf16.mxu0 0
  %339 = vmatpush2.bf16.msra.mxu0 0
  %340 = vmatprep.subr.bf16.mxu0 0
  %341 = vmatpush2.bf16.msra.mxu0 0
  %342 = vmatprep.subr.bf16.mxu0 0
  %343 = vmatpush2.bf16.msra.mxu0 0
  %344 = vmatprep.subr.bf16.mxu0 0
  %345 = vmatpush2.bf16.msra.mxu0 0
  %346 = vmatprep.subr.bf16.mxu0 0
  %347 = vmatpush2.bf16.msra.mxu0 0
  %348 = vmatprep.subr.bf16.mxu0 0
  %349 = vmatpush2.bf16.msra.mxu0 0
  %350 = vmatprep.subr.bf16.mxu0 0
  %351 = vmatpush2.bf16.msra.mxu0 0
  %352 = vmatprep.mubr.bf16.mxu0 0
  %353 = vmatmul.mubr.bf16.gmra.mxu0 %v315
  %v354 = vpop.f32.mrf.mxu0
  %v355 = vadd.f32 0.0, %v354
  %v356 = vpop.f32.mrf.mxu0
  %v357 = vpop.f32.mrf.mxu0
  %v358 = vadd.f32 0.0, %v357
  %v359 = vpop.f32.mrf.mxu0
  %360 = vmatprep.mubr.bf16.mxu0 0
  %361 = vmatmul.mubr.bf16.gmra.mxu0 %v318
  %v362 = vpop.f32.mrf.mxu0
  %v363 = vadd.f32 0.0, %v362
  %v364 = vpop.f32.mrf.mxu0
  %v365 = vpop.f32.mrf.mxu0
  %v366 = vpop.f32.mrf.mxu0
  %367 = vdwg.mxu0
  %v368 = vadd.f32 %v290, %v355
  %v369 = vadd.f32 %v291, %v358
  %v370 = vadd.f32 %v292, %v363
  %v371 = vld [vmem:[%s4] sm:$0xff]
  %v372 = vld [vmem:[%s4 + $0x8] sm:$0xff]
  %v373 = vld [vmem:[%s4 + $0x10] sm:$0xff]
  %v374 = vpack.c.bf16 %v372, %v371
  %v375 = vpack.c.bf16 %v373, %v373
  %v376 = vld [vmem:[%s10] sm:$0xf]
  %v377 = vld [vmem:[%s10 + $0x4] sm:$0xf]
  %v378 = vld [vmem:[%s10 + $0x8] sm:$0xf]
  %v379 = vld [vmem:[%s10 + $0xc] sm:$0xf]
  %v384 = vunpack.c.l.b16 %v376
  %v385 = vunpack.c.l.b16 %v377
  %v386 = vunpack.c.l.b16 %v378
  %v387 = vunpack.c.l.b16 %v379
  %v388 = vpack.c.b16 %v385, %v384
  %v389 = vpack.c.b16 %v387, %v386
  %v393 = vsel %vm73, %v374, 0
  %v396 = vsel %vm73, %v375, 0
  %398 = vmatprep.subr.bf16.mxu0 0
  %399 = vmatpush1.bf16.msra.mxu0 0
  %400 = vmatprep.subr.bf16.mxu0 0
  %401 = vmatpush1.bf16.msra.mxu0 0
  %402 = vmatprep.subr.bf16.mxu0 0
  %403 = vmatpush1.bf16.msra.mxu0 0
  %404 = vmatprep.subr.bf16.mxu0 0
  %405 = vmatpush1.bf16.msra.mxu0 0
  %406 = vmatprep.subr.bf16.mxu0 0
  %407 = vmatpush1.bf16.msra.mxu0 0
  %408 = vmatprep.subr.bf16.mxu0 0
  %409 = vmatpush1.bf16.msra.mxu0 0
  %410 = vmatprep.subr.bf16.mxu0 0
  %411 = vmatpush1.bf16.msra.mxu0 %v389
  %412 = vmatprep.subr.bf16.mxu0 0
  %413 = vmatpush1.bf16.msra.mxu0 %v388
  %414 = vmatprep.subr.bf16.mxu0 0
  %415 = vmatpush2.bf16.msra.mxu0 0
  %416 = vmatprep.subr.bf16.mxu0 0
  %417 = vmatpush2.bf16.msra.mxu0 0
  %418 = vmatprep.subr.bf16.mxu0 0
  %419 = vmatpush2.bf16.msra.mxu0 0
  %420 = vmatprep.subr.bf16.mxu0 0
  %421 = vmatpush2.bf16.msra.mxu0 0
  %422 = vmatprep.subr.bf16.mxu0 0
  %423 = vmatpush2.bf16.msra.mxu0 0
  %424 = vmatprep.subr.bf16.mxu0 0
  %425 = vmatpush2.bf16.msra.mxu0 0
  %426 = vmatprep.subr.bf16.mxu0 0
  %427 = vmatpush2.bf16.msra.mxu0 0
  %428 = vmatprep.subr.bf16.mxu0 0
  %429 = vmatpush2.bf16.msra.mxu0 0
  %430 = vmatprep.mubr.bf16.mxu0 0
  %431 = vmatmul.mubr.bf16.gmra.mxu0 %v393
  %v432 = vpop.f32.mrf.mxu0
  %v433 = vadd.f32 0.0, %v432
  %v434 = vpop.f32.mrf.mxu0
  %v435 = vpop.f32.mrf.mxu0
  %v436 = vadd.f32 0.0, %v435
  %v437 = vpop.f32.mrf.mxu0
  %438 = vmatprep.mubr.bf16.mxu0 0
  %439 = vmatmul.mubr.bf16.gmra.mxu0 %v396
  %v440 = vpop.f32.mrf.mxu0
  %v441 = vadd.f32 0.0, %v440
  %v442 = vpop.f32.mrf.mxu0
  %v443 = vpop.f32.mrf.mxu0
  %v444 = vpop.f32.mrf.mxu0
  %445 = vdwg.mxu0
  %v446 = vadd.f32 %v368, %v433
  %v447 = vadd.f32 %v369, %v436
  %v448 = vadd.f32 %v370, %v441
  %v449 = vld [vmem:[%s5] sm:$0xff]
  %v450 = vld [vmem:[%s5 + $0x8] sm:$0xff]
  %v451 = vld [vmem:[%s5 + $0x10] sm:$0xff]
  %v452 = vpack.c.bf16 %v450, %v449
  %v453 = vpack.c.bf16 %v451, %v451
  %v454 = vld [vmem:[%s11] sm:$0xf]
  %v455 = vld [vmem:[%s11 + $0x4] sm:$0xf]
  %v456 = vld [vmem:[%s11 + $0x8] sm:$0xf]
  %v457 = vld [vmem:[%s11 + $0xc] sm:$0xf]
  %v462 = vunpack.c.l.b16 %v454
  %v463 = vunpack.c.l.b16 %v455
  %v464 = vunpack.c.l.b16 %v456
  %v465 = vunpack.c.l.b16 %v457
  %v466 = vpack.c.b16 %v463, %v462
  %v467 = vpack.c.b16 %v465, %v464
  %v471 = vsel %vm73, %v452, 0
  %v474 = vsel %vm73, %v453, 0
  %476 = vmatprep.subr.bf16.mxu0 0
  %477 = vmatpush1.bf16.msra.mxu0 0
  %478 = vmatprep.subr.bf16.mxu0 0
  %479 = vmatpush1.bf16.msra.mxu0 0
  %480 = vmatprep.subr.bf16.mxu0 0
  %481 = vmatpush1.bf16.msra.mxu0 0
  %482 = vmatprep.subr.bf16.mxu0 0
  %483 = vmatpush1.bf16.msra.mxu0 0
  %484 = vmatprep.subr.bf16.mxu0 0
  %485 = vmatpush1.bf16.msra.mxu0 0
  %486 = vmatprep.subr.bf16.mxu0 0
  %487 = vmatpush1.bf16.msra.mxu0 0
  %488 = vmatprep.subr.bf16.mxu0 0
  %489 = vmatpush1.bf16.msra.mxu0 %v467
  %490 = vmatprep.subr.bf16.mxu0 0
  %491 = vmatpush1.bf16.msra.mxu0 %v466
  %492 = vmatprep.subr.bf16.mxu0 0
  %493 = vmatpush2.bf16.msra.mxu0 0
  %494 = vmatprep.subr.bf16.mxu0 0
  %495 = vmatpush2.bf16.msra.mxu0 0
  %496 = vmatprep.subr.bf16.mxu0 0
  %497 = vmatpush2.bf16.msra.mxu0 0
  %498 = vmatprep.subr.bf16.mxu0 0
  %499 = vmatpush2.bf16.msra.mxu0 0
  %500 = vmatprep.subr.bf16.mxu0 0
  %501 = vmatpush2.bf16.msra.mxu0 0
  %502 = vmatprep.subr.bf16.mxu0 0
  %503 = vmatpush2.bf16.msra.mxu0 0
  %504 = vmatprep.subr.bf16.mxu0 0
  %505 = vmatpush2.bf16.msra.mxu0 0
  %506 = vmatprep.subr.bf16.mxu0 0
  %507 = vmatpush2.bf16.msra.mxu0 0
  %508 = vmatprep.mubr.bf16.mxu0 0
  %509 = vmatmul.mubr.bf16.gmra.mxu0 %v471
  %v510 = vpop.f32.mrf.mxu0
  %v511 = vadd.f32 0.0, %v510
  %v512 = vpop.f32.mrf.mxu0
  %v513 = vpop.f32.mrf.mxu0
  %v514 = vadd.f32 0.0, %v513
  %v515 = vpop.f32.mrf.mxu0
  %516 = vmatprep.mubr.bf16.mxu0 0
  %517 = vmatmul.mubr.bf16.gmra.mxu0 %v474
  %v518 = vpop.f32.mrf.mxu0
  %v519 = vadd.f32 0.0, %v518
  %v520 = vpop.f32.mrf.mxu0
  %v521 = vpop.f32.mrf.mxu0
  %v522 = vpop.f32.mrf.mxu0
  %523 = vdwg.mxu0
  %v524 = vadd.f32 %v446, %v511
  %v525 = vadd.f32 %v447, %v514
  %v526 = vadd.f32 %v448, %v519
  %v527 = vmax.f32 %v524, 0.0
  %v528 = vmax.f32 %v525, 0.0
  %v529 = vmax.f32 %v526, 0.0
  %v530 = vpack.c.bf16 %v528, %v527
  %v531 = vpack.c.bf16 %v529, %v529
  %v532 = vld [vmem:[%s13] sm:$0xf]
  %v533 = vld [vmem:[%s13 + $0x4] sm:$0xf]
  %v534 = vld [vmem:[%s13 + $0x8] sm:$0xf]
  %v535 = vld [vmem:[%s13 + $0xc] sm:$0xf]
  %v536 = vld [vmem:[%s14] sm:$0x1]
  %v538 = vlaneseq
  %v539 = vshrl.u32 %v538, 7
  %v540 = vsub.s32 0, %v539
  %v541 = vrot.slane %v536, %v540
  %v547 = vunpack.c.l.b16 %v532
  %v548 = vunpack.c.l.b16 %v533
  %v549 = vunpack.c.l.b16 %v534
  %v550 = vunpack.c.l.b16 %v535
  %v551 = vpack.c.b16 %v548, %v547
  %v552 = vpack.c.b16 %v550, %v549
  %v556 = vsel %vm73, %v530, 0
  %v559 = vsel %vm73, %v531, 0
  %561 = vmatprep.subr.bf16.mxu0 0
  %562 = vmatpush1.bf16.msra.mxu0 0
  %563 = vmatprep.subr.bf16.mxu0 0
  %564 = vmatpush1.bf16.msra.mxu0 0
  %565 = vmatprep.subr.bf16.mxu0 0
  %566 = vmatpush1.bf16.msra.mxu0 0
  %567 = vmatprep.subr.bf16.mxu0 0
  %568 = vmatpush1.bf16.msra.mxu0 0
  %569 = vmatprep.subr.bf16.mxu0 0
  %570 = vmatpush1.bf16.msra.mxu0 0
  %571 = vmatprep.subr.bf16.mxu0 0
  %572 = vmatpush1.bf16.msra.mxu0 0
  %573 = vmatprep.subr.bf16.mxu0 0
  %574 = vmatpush1.bf16.msra.mxu0 %v552
  %575 = vmatprep.subr.bf16.mxu0 0
  %576 = vmatpush1.bf16.msra.mxu0 %v551
  %577 = vmatprep.subr.bf16.mxu0 0
  %578 = vmatpush2.bf16.msra.mxu0 0
  %579 = vmatprep.subr.bf16.mxu0 0
  %580 = vmatpush2.bf16.msra.mxu0 0
  %581 = vmatprep.subr.bf16.mxu0 0
  %582 = vmatpush2.bf16.msra.mxu0 0
  %583 = vmatprep.subr.bf16.mxu0 0
  %584 = vmatpush2.bf16.msra.mxu0 0
  %585 = vmatprep.subr.bf16.mxu0 0
  %586 = vmatpush2.bf16.msra.mxu0 0
  %587 = vmatprep.subr.bf16.mxu0 0
  %588 = vmatpush2.bf16.msra.mxu0 0
  %589 = vmatprep.subr.bf16.mxu0 0
  %590 = vmatpush2.bf16.msra.mxu0 0
  %591 = vmatprep.subr.bf16.mxu0 0
  %592 = vmatpush2.bf16.msra.mxu0 0
  %593 = vmatprep.mubr.bf16.mxu0 0
  %594 = vmatmul.mubr.bf16.gmra.mxu0 %v556
  %v595 = vpop.f32.mrf.mxu0
  %v596 = vadd.f32 %v541, %v595
  %v597 = vpop.f32.mrf.mxu0
  %v598 = vpop.f32.mrf.mxu0
  %v599 = vadd.f32 %v541, %v598
  %v600 = vpop.f32.mrf.mxu0
  %601 = vmatprep.mubr.bf16.mxu0 0
  %602 = vmatmul.mubr.bf16.gmra.mxu0 %v559
  %v603 = vpop.f32.mrf.mxu0
  %v604 = vadd.f32 %v541, %v603
  %v605 = vpop.f32.mrf.mxu0
  %v606 = vpop.f32.mrf.mxu0
  %v607 = vpop.f32.mrf.mxu0
  %608 = vdwg.mxu0
  %609 = vst.msk [vmem:[%s15] sm:$0xff] %vm73, %v596
  %610 = vst.msk [vmem:[%s15 + $0x8] sm:$0xff] %vm73, %v599
  %611 = vst.msk [vmem:[%s15 + $0x10] sm:$0xff] %vm73, %v604
  // Predicated region
  $region62: #{gine_forward.15} parent=0 // pred_check
    _
  $region63: #{gine_forward.15} parent=0 // pred_check_branch
    %613 = sbr.rel (0) target = $region65
  $region64: #{gine_forward.15} parent=0 // pred_region
    _
  $region65: #{gine_forward.15} parent=0 // pred_fallthru
    _
  // Predicated region
  $region66: #{gine_forward.15} parent=0 // pred_check
    _
  $region67: #{gine_forward.15} parent=0 // pred_check_branch
    %615 = sbr.rel (0) target = $region69
  $region68: #{gine_forward.15} parent=0 // pred_region
    _
  $region69: #{gine_forward.15} parent=0 // pred_fallthru
    _

// kernel: gine_forward.14
$region0: #{gine_forward.14}
  #allocation0 [shape = 'u32[]', space=smem, size = 0x4, offset = 0x4, fixed_abs, tag = 'smem constant byte address 0x4 - core index']
  #allocation1 [shape = 'u32[144,128]{1,0:T(1,128)}', space=vmem, size = 0x12000, scoped, tag = 'internal scratch']
  %s0 = inlined_call_operand.vmem [shape: f32[12,32], index: 0, kind: input, shape index: {}]
  %s1 = inlined_call_operand.vmem [shape: f32[12,32], index: 1, kind: input, shape index: {}]
  %s2 = inlined_call_operand.vmem [shape: f32[12,32], index: 2, kind: input, shape index: {}]
  %s3 = inlined_call_operand.vmem [shape: f32[12,32], index: 3, kind: input, shape index: {}]
  %s4 = inlined_call_operand.vmem [shape: f32[12,32], index: 4, kind: input, shape index: {}]
  %s5 = inlined_call_operand.vmem [shape: bf16[32,32], index: 5, kind: input, shape index: {}]
  %s6 = inlined_call_operand.vmem [shape: bf16[32,32], index: 6, kind: input, shape index: {}]
  %s7 = inlined_call_operand.vmem [shape: bf16[32,32], index: 7, kind: input, shape index: {}]
  %s8 = inlined_call_operand.vmem [shape: bf16[32,32], index: 8, kind: input, shape index: {}]
  %s9 = inlined_call_operand.vmem [shape: bf16[32,32], index: 9, kind: input, shape index: {}]
  %s10 = inlined_call_operand.vmem [shape: f32[1,32], index: 10, kind: input, shape index: {}]
  %s11 = inlined_call_operand.vmem [shape: bf16[32,32], index: 11, kind: input, shape index: {}]
  %s12 = inlined_call_operand.vmem [shape: f32[1,32], index: 12, kind: input, shape index: {}]
  %s13 = inlined_call_operand.vmem [shape: f32[12,32], index: 13, kind: output, shape index: {}]
  %s14 = sld [smem:[#allocation0]]
  $region62: #{gine_forward.14} parent=0
    _
  %s16 = ssub.s32 1, %s14
  %s17 = scalar_select 0, %s16, %s14
  // Predicated region
  $region2: #{gine_forward.14} parent=0 // pred_check
    _
  $region3: #{gine_forward.14} parent=0 // pred_check_branch
    %19 = sbr.rel (0) target = $region5
  $region4: #{gine_forward.14} parent=0 // pred_region
    _
  $region5: #{gine_forward.14} parent=0 // pred_fallthru
    _
  // Predicated region
  $region6: #{gine_forward.14} parent=0 // pred_check
    _
  $region7: #{gine_forward.14} parent=0 // pred_check_branch
    %21 = sbr.rel (0) target = $region9
  $region8: #{gine_forward.14} parent=0 // pred_region
    _
  $region9: #{gine_forward.14} parent=0 // pred_fallthru
    _
  // Predicated region
  $region10: #{gine_forward.14} parent=0 // pred_check
    _
  $region11: #{gine_forward.14} parent=0 // pred_check_branch
    %23 = sbr.rel (0) target = $region13
  $region12: #{gine_forward.14} parent=0 // pred_region
    _
  $region13: #{gine_forward.14} parent=0 // pred_fallthru
    _
  // Predicated region
  $region14: #{gine_forward.14} parent=0 // pred_check
    _
  $region15: #{gine_forward.14} parent=0 // pred_check_branch
    %25 = sbr.rel (0) target = $region17
  $region16: #{gine_forward.14} parent=0 // pred_region
    _
  $region17: #{gine_forward.14} parent=0 // pred_fallthru
    _
  // Predicated region
  $region18: #{gine_forward.14} parent=0 // pred_check
    _
  $region19: #{gine_forward.14} parent=0 // pred_check_branch
    %27 = sbr.rel (0) target = $region21
  $region20: #{gine_forward.14} parent=0 // pred_region
    _
  $region21: #{gine_forward.14} parent=0 // pred_fallthru
    _
  // Predicated region
  $region22: #{gine_forward.14} parent=0 // pred_check
    _
  $region23: #{gine_forward.14} parent=0 // pred_check_branch
    %29 = sbr.rel (0) target = $region25
  $region24: #{gine_forward.14} parent=0 // pred_region
    _
  $region25: #{gine_forward.14} parent=0 // pred_fallthru
    _
  // Predicated region
  $region26: #{gine_forward.14} parent=0 // pred_check
    _
  $region27: #{gine_forward.14} parent=0 // pred_check_branch
    %31 = sbr.rel (0) target = $region29
  $region28: #{gine_forward.14} parent=0 // pred_region
    _
  $region29: #{gine_forward.14} parent=0 // pred_fallthru
    _
  // Predicated region
  $region30: #{gine_forward.14} parent=0 // pred_check
    _
  $region31: #{gine_forward.14} parent=0 // pred_check_branch
    %33 = sbr.rel (0) target = $region33
  $region32: #{gine_forward.14} parent=0 // pred_region
    _
  $region33: #{gine_forward.14} parent=0 // pred_fallthru
    _
  // Predicated region
  $region34: #{gine_forward.14} parent=0 // pred_check
    _
  $region35: #{gine_forward.14} parent=0 // pred_check_branch
    %35 = sbr.rel (0) target = $region37
  $region36: #{gine_forward.14} parent=0 // pred_region
    _
  $region37: #{gine_forward.14} parent=0 // pred_fallthru
    _
  // Predicated region
  $region38: #{gine_forward.14} parent=0 // pred_check
    _
  $region39: #{gine_forward.14} parent=0 // pred_check_branch
    %37 = sbr.rel (0) target = $region41
  $region40: #{gine_forward.14} parent=0 // pred_region
    _
  $region41: #{gine_forward.14} parent=0 // pred_fallthru
    _
  // Predicated region
  $region42: #{gine_forward.14} parent=0 // pred_check
    _
  $region43: #{gine_forward.14} parent=0 // pred_check_branch
    %39 = sbr.rel (0) target = $region45
  $region44: #{gine_forward.14} parent=0 // pred_region
    _
  $region45: #{gine_forward.14} parent=0 // pred_fallthru
    _
  // Predicated region
  $region46: #{gine_forward.14} parent=0 // pred_check
    _
  $region47: #{gine_forward.14} parent=0 // pred_check_branch
    %41 = sbr.rel (0) target = $region49
  $region48: #{gine_forward.14} parent=0 // pred_region
    _
  $region49: #{gine_forward.14} parent=0 // pred_fallthru
    _
  // Predicated region
  $region50: #{gine_forward.14} parent=0 // pred_check
    _
  $region51: #{gine_forward.14} parent=0 // pred_check_branch
    %43 = sbr.rel (0) target = $region53
  $region52: #{gine_forward.14} parent=0 // pred_region
    _
  $region53: #{gine_forward.14} parent=0 // pred_fallthru
    _
  %v45 = vld [vmem:[%s10] sm:$0x1]
  %v46 = vld [vmem:[%s0] sm:$0xff]
  %v47 = vld [vmem:[%s0 + $0x8] sm:$0xf]
  %v48 = vpack.c.bf16 %v47, %v46
  %v49 = vld [vmem:[%s5] sm:$0xf]
  %v50 = vld [vmem:[%s5 + $0x4] sm:$0xf]
  %v51 = vld [vmem:[%s5 + $0x8] sm:$0xf]
  %v52 = vld [vmem:[%s5 + $0xc] sm:$0xf]
  %v57 = vunpack.c.l.b16 %v49
  %v58 = vunpack.c.l.b16 %v50
  %v59 = vunpack.c.l.b16 %v51
  %v60 = vunpack.c.l.b16 %v52
  %v61 = vpack.c.b16 %v58, %v57
  %v62 = vpack.c.b16 %v60, %v59
  %vm65 = vcmask 261120
  %v67 = vsel %vm65, %v48, 0
  %69 = vmatprep.subr.bf16.mxu0 0
  %70 = vmatpush1.bf16.msra.mxu0 0
  %71 = vmatprep.subr.bf16.mxu0 0
  %72 = vmatpush1.bf16.msra.mxu0 0
  %73 = vmatprep.subr.bf16.mxu0 0
  %74 = vmatpush1.bf16.msra.mxu0 0
  %75 = vmatprep.subr.bf16.mxu0 0
  %76 = vmatpush1.bf16.msra.mxu0 0
  %77 = vmatprep.subr.bf16.mxu0 0
  %78 = vmatpush1.bf16.msra.mxu0 0
  %79 = vmatprep.subr.bf16.mxu0 0
  %80 = vmatpush1.bf16.msra.mxu0 0
  %81 = vmatprep.subr.bf16.mxu0 0
  %82 = vmatpush1.bf16.msra.mxu0 %v62
  %83 = vmatprep.subr.bf16.mxu0 0
  %84 = vmatpush1.bf16.msra.mxu0 %v61
  %85 = vmatprep.subr.bf16.mxu0 0
  %86 = vmatpush2.bf16.msra.mxu0 0
  %87 = vmatprep.subr.bf16.mxu0 0
  %88 = vmatpush2.bf16.msra.mxu0 0
  %89 = vmatprep.subr.bf16.mxu0 0
  %90 = vmatpush2.bf16.msra.mxu0 0
  %91 = vmatprep.subr.bf16.mxu0 0
  %92 = vmatpush2.bf16.msra.mxu0 0
  %93 = vmatprep.subr.bf16.mxu0 0
  %94 = vmatpush2.bf16.msra.mxu0 0
  %95 = vmatprep.subr.bf16.mxu0 0
  %96 = vmatpush2.bf16.msra.mxu0 0
  %97 = vmatprep.subr.bf16.mxu0 0
  %98 = vmatpush2.bf16.msra.mxu0 0
  %99 = vmatprep.subr.bf16.mxu0 0
  %100 = vmatpush2.bf16.msra.mxu0 0
  %101 = vmatprep.mubr.bf16.mxu0 0
  %102 = vmatmul.mubr.bf16.gmra.mxu0 %v67
  %v103 = vpop.f32.mrf.mxu0
  %v104 = vadd.f32 0.0, %v103
  %v105 = vpop.f32.mrf.mxu0
  %v106 = vpop.f32.mrf.mxu0
  %v107 = vadd.f32 0.0, %v106
  %v108 = vpop.f32.mrf.mxu0
  %109 = vdwg.mxu0
  %v111 = vlaneseq
  %v112 = vshrl.u32 %v111, 7
  %v113 = vsub.s32 0, %v112
  %v114 = vrot.slane %v45, %v113
  %v116 = vadd.f32 %v114, %v104
  %v117 = vadd.f32 %v114, %v107
  %v118 = vld [vmem:[%s1] sm:$0xff]
  %v119 = vld [vmem:[%s1 + $0x8] sm:$0xf]
  %v120 = vpack.c.bf16 %v119, %v118
  %v121 = vld [vmem:[%s6] sm:$0xf]
  %v122 = vld [vmem:[%s6 + $0x4] sm:$0xf]
  %v123 = vld [vmem:[%s6 + $0x8] sm:$0xf]
  %v124 = vld [vmem:[%s6 + $0xc] sm:$0xf]
  %v129 = vunpack.c.l.b16 %v121
  %v130 = vunpack.c.l.b16 %v122
  %v131 = vunpack.c.l.b16 %v123
  %v132 = vunpack.c.l.b16 %v124
  %v133 = vpack.c.b16 %v130, %v129
  %v134 = vpack.c.b16 %v132, %v131
  %v138 = vsel %vm65, %v120, 0
  %140 = vmatprep.subr.bf16.mxu0 0
  %141 = vmatpush1.bf16.msra.mxu0 0
  %142 = vmatprep.subr.bf16.mxu0 0
  %143 = vmatpush1.bf16.msra.mxu0 0
  %144 = vmatprep.subr.bf16.mxu0 0
  %145 = vmatpush1.bf16.msra.mxu0 0
  %146 = vmatprep.subr.bf16.mxu0 0
  %147 = vmatpush1.bf16.msra.mxu0 0
  %148 = vmatprep.subr.bf16.mxu0 0
  %149 = vmatpush1.bf16.msra.mxu0 0
  %150 = vmatprep.subr.bf16.mxu0 0
  %151 = vmatpush1.bf16.msra.mxu0 0
  %152 = vmatprep.subr.bf16.mxu0 0
  %153 = vmatpush1.bf16.msra.mxu0 %v134
  %154 = vmatprep.subr.bf16.mxu0 0
  %155 = vmatpush1.bf16.msra.mxu0 %v133
  %156 = vmatprep.subr.bf16.mxu0 0
  %157 = vmatpush2.bf16.msra.mxu0 0
  %158 = vmatprep.subr.bf16.mxu0 0
  %159 = vmatpush2.bf16.msra.mxu0 0
  %160 = vmatprep.subr.bf16.mxu0 0
  %161 = vmatpush2.bf16.msra.mxu0 0
  %162 = vmatprep.subr.bf16.mxu0 0
  %163 = vmatpush2.bf16.msra.mxu0 0
  %164 = vmatprep.subr.bf16.mxu0 0
  %165 = vmatpush2.bf16.msra.mxu0 0
  %166 = vmatprep.subr.bf16.mxu0 0
  %167 = vmatpush2.bf16.msra.mxu0 0
  %168 = vmatprep.subr.bf16.mxu0 0
  %169 = vmatpush2.bf16.msra.mxu0 0
  %170 = vmatprep.subr.bf16.mxu0 0
  %171 = vmatpush2.bf16.msra.mxu0 0
  %172 = vmatprep.mubr.bf16.mxu0 0
  %173 = vmatmul.mubr.bf16.gmra.mxu0 %v138
  %v174 = vpop.f32.mrf.mxu0
  %v175 = vadd.f32 0.0, %v174
  %v176 = vpop.f32.mrf.mxu0
  %v177 = vpop.f32.mrf.mxu0
  %v178 = vadd.f32 0.0, %v177
  %v179 = vpop.f32.mrf.mxu0
  %180 = vdwg.mxu0
  %v181 = vadd.f32 %v116, %v175
  %v182 = vadd.f32 %v117, %v178
  %v183 = vld [vmem:[%s2] sm:$0xff]
  %v184 = vld [vmem:[%s2 + $0x8] sm:$0xf]
  %v185 = vpack.c.bf16 %v184, %v183
  %v186 = vld [vmem:[%s7] sm:$0xf]
  %v187 = vld [vmem:[%s7 + $0x4] sm:$0xf]
  %v188 = vld [vmem:[%s7 + $0x8] sm:$0xf]
  %v189 = vld [vmem:[%s7 + $0xc] sm:$0xf]
  %v194 = vunpack.c.l.b16 %v186
  %v195 = vunpack.c.l.b16 %v187
  %v196 = vunpack.c.l.b16 %v188
  %v197 = vunpack.c.l.b16 %v189
  %v198 = vpack.c.b16 %v195, %v194
  %v199 = vpack.c.b16 %v197, %v196
  %v203 = vsel %vm65, %v185, 0
  %205 = vmatprep.subr.bf16.mxu0 0
  %206 = vmatpush1.bf16.msra.mxu0 0
  %207 = vmatprep.subr.bf16.mxu0 0
  %208 = vmatpush1.bf16.msra.mxu0 0
  %209 = vmatprep.subr.bf16.mxu0 0
  %210 = vmatpush1.bf16.msra.mxu0 0
  %211 = vmatprep.subr.bf16.mxu0 0
  %212 = vmatpush1.bf16.msra.mxu0 0
  %213 = vmatprep.subr.bf16.mxu0 0
  %214 = vmatpush1.bf16.msra.mxu0 0
  %215 = vmatprep.subr.bf16.mxu0 0
  %216 = vmatpush1.bf16.msra.mxu0 0
  %217 = vmatprep.subr.bf16.mxu0 0
  %218 = vmatpush1.bf16.msra.mxu0 %v199
  %219 = vmatprep.subr.bf16.mxu0 0
  %220 = vmatpush1.bf16.msra.mxu0 %v198
  %221 = vmatprep.subr.bf16.mxu0 0
  %222 = vmatpush2.bf16.msra.mxu0 0
  %223 = vmatprep.subr.bf16.mxu0 0
  %224 = vmatpush2.bf16.msra.mxu0 0
  %225 = vmatprep.subr.bf16.mxu0 0
  %226 = vmatpush2.bf16.msra.mxu0 0
  %227 = vmatprep.subr.bf16.mxu0 0
  %228 = vmatpush2.bf16.msra.mxu0 0
  %229 = vmatprep.subr.bf16.mxu0 0
  %230 = vmatpush2.bf16.msra.mxu0 0
  %231 = vmatprep.subr.bf16.mxu0 0
  %232 = vmatpush2.bf16.msra.mxu0 0
  %233 = vmatprep.subr.bf16.mxu0 0
  %234 = vmatpush2.bf16.msra.mxu0 0
  %235 = vmatprep.subr.bf16.mxu0 0
  %236 = vmatpush2.bf16.msra.mxu0 0
  %237 = vmatprep.mubr.bf16.mxu0 0
  %238 = vmatmul.mubr.bf16.gmra.mxu0 %v203
  %v239 = vpop.f32.mrf.mxu0
  %v240 = vadd.f32 0.0, %v239
  %v241 = vpop.f32.mrf.mxu0
  %v242 = vpop.f32.mrf.mxu0
  %v243 = vadd.f32 0.0, %v242
  %v244 = vpop.f32.mrf.mxu0
  %245 = vdwg.mxu0
  %v246 = vadd.f32 %v181, %v240
  %v247 = vadd.f32 %v182, %v243
  %v248 = vld [vmem:[%s3] sm:$0xff]
  %v249 = vld [vmem:[%s3 + $0x8] sm:$0xf]
  %v250 = vpack.c.bf16 %v249, %v248
  %v251 = vld [vmem:[%s8] sm:$0xf]
  %v252 = vld [vmem:[%s8 + $0x4] sm:$0xf]
  %v253 = vld [vmem:[%s8 + $0x8] sm:$0xf]
  %v254 = vld [vmem:[%s8 + $0xc] sm:$0xf]
  %v259 = vunpack.c.l.b16 %v251
  %v260 = vunpack.c.l.b16 %v252
  %v261 = vunpack.c.l.b16 %v253
  %v262 = vunpack.c.l.b16 %v254
  %v263 = vpack.c.b16 %v260, %v259
  %v264 = vpack.c.b16 %v262, %v261
  %v268 = vsel %vm65, %v250, 0
  %270 = vmatprep.subr.bf16.mxu0 0
  %271 = vmatpush1.bf16.msra.mxu0 0
  %272 = vmatprep.subr.bf16.mxu0 0
  %273 = vmatpush1.bf16.msra.mxu0 0
  %274 = vmatprep.subr.bf16.mxu0 0
  %275 = vmatpush1.bf16.msra.mxu0 0
  %276 = vmatprep.subr.bf16.mxu0 0
  %277 = vmatpush1.bf16.msra.mxu0 0
  %278 = vmatprep.subr.bf16.mxu0 0
  %279 = vmatpush1.bf16.msra.mxu0 0
  %280 = vmatprep.subr.bf16.mxu0 0
  %281 = vmatpush1.bf16.msra.mxu0 0
  %282 = vmatprep.subr.bf16.mxu0 0
  %283 = vmatpush1.bf16.msra.mxu0 %v264
  %284 = vmatprep.subr.bf16.mxu0 0
  %285 = vmatpush1.bf16.msra.mxu0 %v263
  %286 = vmatprep.subr.bf16.mxu0 0
  %287 = vmatpush2.bf16.msra.mxu0 0
  %288 = vmatprep.subr.bf16.mxu0 0
  %289 = vmatpush2.bf16.msra.mxu0 0
  %290 = vmatprep.subr.bf16.mxu0 0
  %291 = vmatpush2.bf16.msra.mxu0 0
  %292 = vmatprep.subr.bf16.mxu0 0
  %293 = vmatpush2.bf16.msra.mxu0 0
  %294 = vmatprep.subr.bf16.mxu0 0
  %295 = vmatpush2.bf16.msra.mxu0 0
  %296 = vmatprep.subr.bf16.mxu0 0
  %297 = vmatpush2.bf16.msra.mxu0 0
  %298 = vmatprep.subr.bf16.mxu0 0
  %299 = vmatpush2.bf16.msra.mxu0 0
  %300 = vmatprep.subr.bf16.mxu0 0
  %301 = vmatpush2.bf16.msra.mxu0 0
  %302 = vmatprep.mubr.bf16.mxu0 0
  %303 = vmatmul.mubr.bf16.gmra.mxu0 %v268
  %v304 = vpop.f32.mrf.mxu0
  %v305 = vadd.f32 0.0, %v304
  %v306 = vpop.f32.mrf.mxu0
  %v307 = vpop.f32.mrf.mxu0
  %v308 = vadd.f32 0.0, %v307
  %v309 = vpop.f32.mrf.mxu0
  %310 = vdwg.mxu0
  %v311 = vadd.f32 %v246, %v305
  %v312 = vadd.f32 %v247, %v308
  %v313 = vld [vmem:[%s4] sm:$0xff]
  %v314 = vld [vmem:[%s4 + $0x8] sm:$0xf]
  %v315 = vpack.c.bf16 %v314, %v313
  %v316 = vld [vmem:[%s9] sm:$0xf]
  %v317 = vld [vmem:[%s9 + $0x4] sm:$0xf]
  %v318 = vld [vmem:[%s9 + $0x8] sm:$0xf]
  %v319 = vld [vmem:[%s9 + $0xc] sm:$0xf]
  %v324 = vunpack.c.l.b16 %v316
  %v325 = vunpack.c.l.b16 %v317
  %v326 = vunpack.c.l.b16 %v318
  %v327 = vunpack.c.l.b16 %v319
  %v328 = vpack.c.b16 %v325, %v324
  %v329 = vpack.c.b16 %v327, %v326
  %v333 = vsel %vm65, %v315, 0
  %335 = vmatprep.subr.bf16.mxu0 0
  %336 = vmatpush1.bf16.msra.mxu0 0
  %337 = vmatprep.subr.bf16.mxu0 0
  %338 = vmatpush1.bf16.msra.mxu0 0
  %339 = vmatprep.subr.bf16.mxu0 0
  %340 = vmatpush1.bf16.msra.mxu0 0
  %341 = vmatprep.subr.bf16.mxu0 0
  %342 = vmatpush1.bf16.msra.mxu0 0
  %343 = vmatprep.subr.bf16.mxu0 0
  %344 = vmatpush1.bf16.msra.mxu0 0
  %345 = vmatprep.subr.bf16.mxu0 0
  %346 = vmatpush1.bf16.msra.mxu0 0
  %347 = vmatprep.subr.bf16.mxu0 0
  %348 = vmatpush1.bf16.msra.mxu0 %v329
  %349 = vmatprep.subr.bf16.mxu0 0
  %350 = vmatpush1.bf16.msra.mxu0 %v328
  %351 = vmatprep.subr.bf16.mxu0 0
  %352 = vmatpush2.bf16.msra.mxu0 0
  %353 = vmatprep.subr.bf16.mxu0 0
  %354 = vmatpush2.bf16.msra.mxu0 0
  %355 = vmatprep.subr.bf16.mxu0 0
  %356 = vmatpush2.bf16.msra.mxu0 0
  %357 = vmatprep.subr.bf16.mxu0 0
  %358 = vmatpush2.bf16.msra.mxu0 0
  %359 = vmatprep.subr.bf16.mxu0 0
  %360 = vmatpush2.bf16.msra.mxu0 0
  %361 = vmatprep.subr.bf16.mxu0 0
  %362 = vmatpush2.bf16.msra.mxu0 0
  %363 = vmatprep.subr.bf16.mxu0 0
  %364 = vmatpush2.bf16.msra.mxu0 0
  %365 = vmatprep.subr.bf16.mxu0 0
  %366 = vmatpush2.bf16.msra.mxu0 0
  %367 = vmatprep.mubr.bf16.mxu0 0
  %368 = vmatmul.mubr.bf16.gmra.mxu0 %v333
  %v369 = vpop.f32.mrf.mxu0
  %v370 = vadd.f32 0.0, %v369
  %v371 = vpop.f32.mrf.mxu0
  %v372 = vpop.f32.mrf.mxu0
  %v373 = vadd.f32 0.0, %v372
  %v374 = vpop.f32.mrf.mxu0
  %375 = vdwg.mxu0
  %v376 = vadd.f32 %v311, %v370
  %v377 = vadd.f32 %v312, %v373
  %v378 = vmax.f32 %v376, 0.0
  %v379 = vmax.f32 %v377, 0.0
  %v380 = vpack.c.bf16 %v379, %v378
  %v381 = vld [vmem:[%s11] sm:$0xf]
  %v382 = vld [vmem:[%s11 + $0x4] sm:$0xf]
  %v383 = vld [vmem:[%s11 + $0x8] sm:$0xf]
  %v384 = vld [vmem:[%s11 + $0xc] sm:$0xf]
  %v385 = vld [vmem:[%s12] sm:$0x1]
  %v387 = vlaneseq
  %v388 = vshrl.u32 %v387, 7
  %v389 = vsub.s32 0, %v388
  %v390 = vrot.slane %v385, %v389
  %v396 = vunpack.c.l.b16 %v381
  %v397 = vunpack.c.l.b16 %v382
  %v398 = vunpack.c.l.b16 %v383
  %v399 = vunpack.c.l.b16 %v384
  %v400 = vpack.c.b16 %v397, %v396
  %v401 = vpack.c.b16 %v399, %v398
  %v405 = vsel %vm65, %v380, 0
  %407 = vmatprep.subr.bf16.mxu0 0
  %408 = vmatpush1.bf16.msra.mxu0 0
  %409 = vmatprep.subr.bf16.mxu0 0
  %410 = vmatpush1.bf16.msra.mxu0 0
  %411 = vmatprep.subr.bf16.mxu0 0
  %412 = vmatpush1.bf16.msra.mxu0 0
  %413 = vmatprep.subr.bf16.mxu0 0
  %414 = vmatpush1.bf16.msra.mxu0 0
  %415 = vmatprep.subr.bf16.mxu0 0
  %416 = vmatpush1.bf16.msra.mxu0 0
  %417 = vmatprep.subr.bf16.mxu0 0
  %418 = vmatpush1.bf16.msra.mxu0 0
  %419 = vmatprep.subr.bf16.mxu0 0
  %420 = vmatpush1.bf16.msra.mxu0 %v401
  %421 = vmatprep.subr.bf16.mxu0 0
  %422 = vmatpush1.bf16.msra.mxu0 %v400
  %423 = vmatprep.subr.bf16.mxu0 0
  %424 = vmatpush2.bf16.msra.mxu0 0
  %425 = vmatprep.subr.bf16.mxu0 0
  %426 = vmatpush2.bf16.msra.mxu0 0
  %427 = vmatprep.subr.bf16.mxu0 0
  %428 = vmatpush2.bf16.msra.mxu0 0
  %429 = vmatprep.subr.bf16.mxu0 0
  %430 = vmatpush2.bf16.msra.mxu0 0
  %431 = vmatprep.subr.bf16.mxu0 0
  %432 = vmatpush2.bf16.msra.mxu0 0
  %433 = vmatprep.subr.bf16.mxu0 0
  %434 = vmatpush2.bf16.msra.mxu0 0
  %435 = vmatprep.subr.bf16.mxu0 0
  %436 = vmatpush2.bf16.msra.mxu0 0
  %437 = vmatprep.subr.bf16.mxu0 0
  %438 = vmatpush2.bf16.msra.mxu0 0
  %439 = vmatprep.mubr.bf16.mxu0 0
  %440 = vmatmul.mubr.bf16.gmra.mxu0 %v405
  %v441 = vpop.f32.mrf.mxu0
  %v442 = vadd.f32 %v390, %v441
  %v443 = vpop.f32.mrf.mxu0
  %v444 = vpop.f32.mrf.mxu0
  %v445 = vadd.f32 %v390, %v444
  %v446 = vpop.f32.mrf.mxu0
  %447 = vdwg.mxu0
  %448 = vst.msk [vmem:[%s13] sm:$0xff] %vm65, %v442
  %vm449 = vcmask 257024
  %450 = vst.msk [vmem:[%s13 + $0x8] sm:$0xf] %vm449, %v445
  // Predicated region
  $region54: #{gine_forward.14} parent=0 // pred_check
    _
  $region55: #{gine_forward.14} parent=0 // pred_check_branch
    %452 = sbr.rel (0) target = $region57
  $region56: #{gine_forward.14} parent=0 // pred_region
    _
  $region57: #{gine_forward.14} parent=0 // pred_fallthru
    _
  // Predicated region
  $region58: #{gine_forward.14} parent=0 // pred_check
    _
  $region59: #{gine_forward.14} parent=0 // pred_check_branch
    %454 = sbr.rel (0) target = $region61
  $region60: #{gine_forward.14} parent=0 // pred_region
    _
  $region61: #{gine_forward.14} parent=0 // pred_fallthru
    _

// kernel: gine_forward.17
$region0: #{gine_forward.17}
  #allocation0 [shape = 'u32[]', space=smem, size = 0x4, offset = 0x4, fixed_abs, tag = 'smem constant byte address 0x4 - core index']
  #allocation1 [shape = 'u32[144,128]{1,0:T(1,128)}', space=vmem, size = 0x12000, scoped, tag = 'internal scratch']
  %s0 = inlined_call_operand.vmem [shape: f32[12,32], index: 0, kind: input, shape index: {}]
  %s1 = inlined_call_operand.vmem [shape: bf16[32,32], index: 1, kind: input, shape index: {}]
  %s2 = inlined_call_operand.vmem [shape: f32[1,32], index: 2, kind: input, shape index: {}]
  %s3 = inlined_call_operand.vmem [shape: bf16[32,32], index: 3, kind: input, shape index: {}]
  %s4 = inlined_call_operand.vmem [shape: f32[1,32], index: 4, kind: input, shape index: {}]
  %s5 = inlined_call_operand.vmem [shape: f32[12,32], index: 5, kind: output, shape index: {}]
  %s6 = sld [smem:[#allocation0]]
  $region30: #{gine_forward.17} parent=0
    _
  %s8 = ssub.s32 1, %s6
  %s9 = scalar_select 0, %s8, %s6
  // Predicated region
  $region2: #{gine_forward.17} parent=0 // pred_check
    _
  $region3: #{gine_forward.17} parent=0 // pred_check_branch
    %11 = sbr.rel (0) target = $region5
  $region4: #{gine_forward.17} parent=0 // pred_region
    _
  $region5: #{gine_forward.17} parent=0 // pred_fallthru
    _
  // Predicated region
  $region6: #{gine_forward.17} parent=0 // pred_check
    _
  $region7: #{gine_forward.17} parent=0 // pred_check_branch
    %13 = sbr.rel (0) target = $region9
  $region8: #{gine_forward.17} parent=0 // pred_region
    _
  $region9: #{gine_forward.17} parent=0 // pred_fallthru
    _
  // Predicated region
  $region10: #{gine_forward.17} parent=0 // pred_check
    _
  $region11: #{gine_forward.17} parent=0 // pred_check_branch
    %15 = sbr.rel (0) target = $region13
  $region12: #{gine_forward.17} parent=0 // pred_region
    _
  $region13: #{gine_forward.17} parent=0 // pred_fallthru
    _
  // Predicated region
  $region14: #{gine_forward.17} parent=0 // pred_check
    _
  $region15: #{gine_forward.17} parent=0 // pred_check_branch
    %17 = sbr.rel (0) target = $region17
  $region16: #{gine_forward.17} parent=0 // pred_region
    _
  $region17: #{gine_forward.17} parent=0 // pred_fallthru
    _
  // Predicated region
  $region18: #{gine_forward.17} parent=0 // pred_check
    _
  $region19: #{gine_forward.17} parent=0 // pred_check_branch
    %19 = sbr.rel (0) target = $region21
  $region20: #{gine_forward.17} parent=0 // pred_region
    _
  $region21: #{gine_forward.17} parent=0 // pred_fallthru
    _
  %v21 = vld [vmem:[%s2] sm:$0x1]
  %v22 = vld [vmem:[%s0] sm:$0xff]
  %v23 = vld [vmem:[%s0 + $0x8] sm:$0xf]
  %v24 = vpack.c.bf16 %v23, %v22
  %v25 = vld [vmem:[%s1] sm:$0xf]
  %v26 = vld [vmem:[%s1 + $0x4] sm:$0xf]
  %v27 = vld [vmem:[%s1 + $0x8] sm:$0xf]
  %v28 = vld [vmem:[%s1 + $0xc] sm:$0xf]
  %v33 = vunpack.c.l.b16 %v25
  %v34 = vunpack.c.l.b16 %v26
  %v35 = vunpack.c.l.b16 %v27
  %v36 = vunpack.c.l.b16 %v28
  %v37 = vpack.c.b16 %v34, %v33
  %v38 = vpack.c.b16 %v36, %v35
  %vm41 = vcmask 261120
  %v43 = vsel %vm41, %v24, 0
  %45 = vmatprep.subr.bf16.mxu0 0
  %46 = vmatpush1.bf16.msra.mxu0 0
  %47 = vmatprep.subr.bf16.mxu0 0
  %48 = vmatpush1.bf16.msra.mxu0 0
  %49 = vmatprep.subr.bf16.mxu0 0
  %50 = vmatpush1.bf16.msra.mxu0 0
  %51 = vmatprep.subr.bf16.mxu0 0
  %52 = vmatpush1.bf16.msra.mxu0 0
  %53 = vmatprep.subr.bf16.mxu0 0
  %54 = vmatpush1.bf16.msra.mxu0 0
  %55 = vmatprep.subr.bf16.mxu0 0
  %56 = vmatpush1.bf16.msra.mxu0 0
  %57 = vmatprep.subr.bf16.mxu0 0
  %58 = vmatpush1.bf16.msra.mxu0 %v38
  %59 = vmatprep.subr.bf16.mxu0 0
  %60 = vmatpush1.bf16.msra.mxu0 %v37
  %61 = vmatprep.subr.bf16.mxu0 0
  %62 = vmatpush2.bf16.msra.mxu0 0
  %63 = vmatprep.subr.bf16.mxu0 0
  %64 = vmatpush2.bf16.msra.mxu0 0
  %65 = vmatprep.subr.bf16.mxu0 0
  %66 = vmatpush2.bf16.msra.mxu0 0
  %67 = vmatprep.subr.bf16.mxu0 0
  %68 = vmatpush2.bf16.msra.mxu0 0
  %69 = vmatprep.subr.bf16.mxu0 0
  %70 = vmatpush2.bf16.msra.mxu0 0
  %71 = vmatprep.subr.bf16.mxu0 0
  %72 = vmatpush2.bf16.msra.mxu0 0
  %73 = vmatprep.subr.bf16.mxu0 0
  %74 = vmatpush2.bf16.msra.mxu0 0
  %75 = vmatprep.subr.bf16.mxu0 0
  %76 = vmatpush2.bf16.msra.mxu0 0
  %77 = vmatprep.mubr.bf16.mxu0 0
  %78 = vmatmul.mubr.bf16.gmra.mxu0 %v43
  %v79 = vpop.f32.mrf.mxu0
  %v80 = vadd.f32 0.0, %v79
  %v81 = vpop.f32.mrf.mxu0
  %v82 = vpop.f32.mrf.mxu0
  %v83 = vadd.f32 0.0, %v82
  %v84 = vpop.f32.mrf.mxu0
  %85 = vdwg.mxu0
  %v87 = vlaneseq
  %v88 = vshrl.u32 %v87, 7
  %v89 = vsub.s32 0, %v88
  %v90 = vrot.slane %v21, %v89
  %v92 = vadd.f32 %v90, %v80
  %v93 = vadd.f32 %v90, %v83
  %v94 = vmax.f32 %v92, 0.0
  %v95 = vmax.f32 %v93, 0.0
  %v96 = vpack.c.bf16 %v95, %v94
  %v97 = vld [vmem:[%s3] sm:$0xf]
  %v98 = vld [vmem:[%s3 + $0x4] sm:$0xf]
  %v99 = vld [vmem:[%s3 + $0x8] sm:$0xf]
  %v100 = vld [vmem:[%s3 + $0xc] sm:$0xf]
  %v101 = vld [vmem:[%s4] sm:$0x1]
  %v103 = vlaneseq
  %v104 = vshrl.u32 %v103, 7
  %v105 = vsub.s32 0, %v104
  %v106 = vrot.slane %v101, %v105
  %v112 = vunpack.c.l.b16 %v97
  %v113 = vunpack.c.l.b16 %v98
  %v114 = vunpack.c.l.b16 %v99
  %v115 = vunpack.c.l.b16 %v100
  %v116 = vpack.c.b16 %v113, %v112
  %v117 = vpack.c.b16 %v115, %v114
  %v121 = vsel %vm41, %v96, 0
  %123 = vmatprep.subr.bf16.mxu0 0
  %124 = vmatpush1.bf16.msra.mxu0 0
  %125 = vmatprep.subr.bf16.mxu0 0
  %126 = vmatpush1.bf16.msra.mxu0 0
  %127 = vmatprep.subr.bf16.mxu0 0
  %128 = vmatpush1.bf16.msra.mxu0 0
  %129 = vmatprep.subr.bf16.mxu0 0
  %130 = vmatpush1.bf16.msra.mxu0 0
  %131 = vmatprep.subr.bf16.mxu0 0
  %132 = vmatpush1.bf16.msra.mxu0 0
  %133 = vmatprep.subr.bf16.mxu0 0
  %134 = vmatpush1.bf16.msra.mxu0 0
  %135 = vmatprep.subr.bf16.mxu0 0
  %136 = vmatpush1.bf16.msra.mxu0 %v117
  %137 = vmatprep.subr.bf16.mxu0 0
  %138 = vmatpush1.bf16.msra.mxu0 %v116
  %139 = vmatprep.subr.bf16.mxu0 0
  %140 = vmatpush2.bf16.msra.mxu0 0
  %141 = vmatprep.subr.bf16.mxu0 0
  %142 = vmatpush2.bf16.msra.mxu0 0
  %143 = vmatprep.subr.bf16.mxu0 0
  %144 = vmatpush2.bf16.msra.mxu0 0
  %145 = vmatprep.subr.bf16.mxu0 0
  %146 = vmatpush2.bf16.msra.mxu0 0
  %147 = vmatprep.subr.bf16.mxu0 0
  %148 = vmatpush2.bf16.msra.mxu0 0
  %149 = vmatprep.subr.bf16.mxu0 0
  %150 = vmatpush2.bf16.msra.mxu0 0
  %151 = vmatprep.subr.bf16.mxu0 0
  %152 = vmatpush2.bf16.msra.mxu0 0
  %153 = vmatprep.subr.bf16.mxu0 0
  %154 = vmatpush2.bf16.msra.mxu0 0
  %155 = vmatprep.mubr.bf16.mxu0 0
  %156 = vmatmul.mubr.bf16.gmra.mxu0 %v121
  %v157 = vpop.f32.mrf.mxu0
  %v158 = vadd.f32 %v106, %v157
  %v159 = vpop.f32.mrf.mxu0
  %v160 = vpop.f32.mrf.mxu0
  %v161 = vadd.f32 %v106, %v160
  %v162 = vpop.f32.mrf.mxu0
  %163 = vdwg.mxu0
  %164 = vst.msk [vmem:[%s5] sm:$0xff] %vm41, %v158
  %vm165 = vcmask 257024
  %166 = vst.msk [vmem:[%s5 + $0x8] sm:$0xf] %vm165, %v161
  // Predicated region
  $region22: #{gine_forward.17} parent=0 // pred_check
    _
  $region23: #{gine_forward.17} parent=0 // pred_check_branch
    %168 = sbr.rel (0) target = $region25
  $region24: #{gine_forward.17} parent=0 // pred_region
    _
  $region25: #{gine_forward.17} parent=0 // pred_fallthru
    _
  // Predicated region
  $region26: #{gine_forward.17} parent=0 // pred_check
    _
  $region27: #{gine_forward.17} parent=0 // pred_check_branch
    %170 = sbr.rel (0) target = $region29
  $region28: #{gine_forward.17} parent=0 // pred_region
    _
  $region29: #{gine_forward.17} parent=0 // pred_fallthru
    _

// kernel: gine_forward.18
$region0: #{gine_forward.18}
  #allocation0 [shape = 'u32[]', space=smem, size = 0x4, offset = 0x4, fixed_abs, tag = 'smem constant byte address 0x4 - core index']
  #allocation1 [shape = 'u32[144,128]{1,0:T(1,128)}', space=vmem, size = 0x12000, scoped, tag = 'internal scratch']
  %s0 = inlined_call_operand.vmem [shape: f32[24,32], index: 0, kind: input, shape index: {}]
  %s1 = inlined_call_operand.vmem [shape: f32[24,32], index: 1, kind: input, shape index: {}]
  %s2 = inlined_call_operand.vmem [shape: f32[24,32], index: 2, kind: input, shape index: {}]
  %s3 = inlined_call_operand.vmem [shape: bf16[32,32], index: 3, kind: input, shape index: {}]
  %s4 = inlined_call_operand.vmem [shape: bf16[32,32], index: 4, kind: input, shape index: {}]
  %s5 = inlined_call_operand.vmem [shape: bf16[32,32], index: 5, kind: input, shape index: {}]
  %s6 = inlined_call_operand.vmem [shape: f32[1,32], index: 6, kind: input, shape index: {}]
  %s7 = inlined_call_operand.vmem [shape: bf16[32,32], index: 7, kind: input, shape index: {}]
  %s8 = inlined_call_operand.vmem [shape: f32[1,32], index: 8, kind: input, shape index: {}]
  %s9 = inlined_call_operand.vmem [shape: f32[24,32], index: 9, kind: output, shape index: {}]
  %s10 = sld [smem:[#allocation0]]
  $region46: #{gine_forward.18} parent=0
    _
  %s12 = ssub.s32 1, %s10
  %s13 = scalar_select 0, %s12, %s10
  // Predicated region
  $region2: #{gine_forward.18} parent=0 // pred_check
    _
  $region3: #{gine_forward.18} parent=0 // pred_check_branch
    %15 = sbr.rel (0) target = $region5
  $region4: #{gine_forward.18} parent=0 // pred_region
    _
  $region5: #{gine_forward.18} parent=0 // pred_fallthru
    _
  // Predicated region
  $region6: #{gine_forward.18} parent=0 // pred_check
    _
  $region7: #{gine_forward.18} parent=0 // pred_check_branch
    %17 = sbr.rel (0) target = $region9
  $region8: #{gine_forward.18} parent=0 // pred_region
    _
  $region9: #{gine_forward.18} parent=0 // pred_fallthru
    _
  // Predicated region
  $region10: #{gine_forward.18} parent=0 // pred_check
    _
  $region11: #{gine_forward.18} parent=0 // pred_check_branch
    %19 = sbr.rel (0) target = $region13
  $region12: #{gine_forward.18} parent=0 // pred_region
    _
  $region13: #{gine_forward.18} parent=0 // pred_fallthru
    _
  // Predicated region
  $region14: #{gine_forward.18} parent=0 // pred_check
    _
  $region15: #{gine_forward.18} parent=0 // pred_check_branch
    %21 = sbr.rel (0) target = $region17
  $region16: #{gine_forward.18} parent=0 // pred_region
    _
  $region17: #{gine_forward.18} parent=0 // pred_fallthru
    _
  // Predicated region
  $region18: #{gine_forward.18} parent=0 // pred_check
    _
  $region19: #{gine_forward.18} parent=0 // pred_check_branch
    %23 = sbr.rel (0) target = $region21
  $region20: #{gine_forward.18} parent=0 // pred_region
    _
  $region21: #{gine_forward.18} parent=0 // pred_fallthru
    _
  // Predicated region
  $region22: #{gine_forward.18} parent=0 // pred_check
    _
  $region23: #{gine_forward.18} parent=0 // pred_check_branch
    %25 = sbr.rel (0) target = $region25
  $region24: #{gine_forward.18} parent=0 // pred_region
    _
  $region25: #{gine_forward.18} parent=0 // pred_fallthru
    _
  // Predicated region
  $region26: #{gine_forward.18} parent=0 // pred_check
    _
  $region27: #{gine_forward.18} parent=0 // pred_check_branch
    %27 = sbr.rel (0) target = $region29
  $region28: #{gine_forward.18} parent=0 // pred_region
    _
  $region29: #{gine_forward.18} parent=0 // pred_fallthru
    _
  // Predicated region
  $region30: #{gine_forward.18} parent=0 // pred_check
    _
  $region31: #{gine_forward.18} parent=0 // pred_check_branch
    %29 = sbr.rel (0) target = $region33
  $region32: #{gine_forward.18} parent=0 // pred_region
    _
  $region33: #{gine_forward.18} parent=0 // pred_fallthru
    _
  // Predicated region
  $region34: #{gine_forward.18} parent=0 // pred_check
    _
  $region35: #{gine_forward.18} parent=0 // pred_check_branch
    %31 = sbr.rel (0) target = $region37
  $region36: #{gine_forward.18} parent=0 // pred_region
    _
  $region37: #{gine_forward.18} parent=0 // pred_fallthru
    _
  %v33 = vld [vmem:[%s6] sm:$0x1]
  %v34 = vld [vmem:[%s0] sm:$0xff]
  %v35 = vld [vmem:[%s0 + $0x8] sm:$0xff]
  %v36 = vld [vmem:[%s0 + $0x10] sm:$0xff]
  %v37 = vpack.c.bf16 %v35, %v34
  %v38 = vpack.c.bf16 %v36, %v36
  %v39 = vld [vmem:[%s3] sm:$0xf]
  %v40 = vld [vmem:[%s3 + $0x4] sm:$0xf]
  %v41 = vld [vmem:[%s3 + $0x8] sm:$0xf]
  %v42 = vld [vmem:[%s3 + $0xc] sm:$0xf]
  %v47 = vunpack.c.l.b16 %v39
  %v48 = vunpack.c.l.b16 %v40
  %v49 = vunpack.c.l.b16 %v41
  %v50 = vunpack.c.l.b16 %v42
  %v51 = vpack.c.b16 %v48, %v47
  %v52 = vpack.c.b16 %v50, %v49
  %vm55 = vcmask 261120
  %v57 = vsel %vm55, %v37, 0
  %v60 = vsel %vm55, %v38, 0
  %62 = vmatprep.subr.bf16.mxu0 0
  %63 = vmatpush1.bf16.msra.mxu0 0
  %64 = vmatprep.subr.bf16.mxu0 0
  %65 = vmatpush1.bf16.msra.mxu0 0
  %66 = vmatprep.subr.bf16.mxu0 0
  %67 = vmatpush1.bf16.msra.mxu0 0
  %68 = vmatprep.subr.bf16.mxu0 0
  %69 = vmatpush1.bf16.msra.mxu0 0
  %70 = vmatprep.subr.bf16.mxu0 0
  %71 = vmatpush1.bf16.msra.mxu0 0
  %72 = vmatprep.subr.bf16.mxu0 0
  %73 = vmatpush1.bf16.msra.mxu0 0
  %74 = vmatprep.subr.bf16.mxu0 0
  %75 = vmatpush1.bf16.msra.mxu0 %v52
  %76 = vmatprep.subr.bf16.mxu0 0
  %77 = vmatpush1.bf16.msra.mxu0 %v51
  %78 = vmatprep.subr.bf16.mxu0 0
  %79 = vmatpush2.bf16.msra.mxu0 0
  %80 = vmatprep.subr.bf16.mxu0 0
  %81 = vmatpush2.bf16.msra.mxu0 0
  %82 = vmatprep.subr.bf16.mxu0 0
  %83 = vmatpush2.bf16.msra.mxu0 0
  %84 = vmatprep.subr.bf16.mxu0 0
  %85 = vmatpush2.bf16.msra.mxu0 0
  %86 = vmatprep.subr.bf16.mxu0 0
  %87 = vmatpush2.bf16.msra.mxu0 0
  %88 = vmatprep.subr.bf16.mxu0 0
  %89 = vmatpush2.bf16.msra.mxu0 0
  %90 = vmatprep.subr.bf16.mxu0 0
  %91 = vmatpush2.bf16.msra.mxu0 0
  %92 = vmatprep.subr.bf16.mxu0 0
  %93 = vmatpush2.bf16.msra.mxu0 0
  %94 = vmatprep.mubr.bf16.mxu0 0
  %95 = vmatmul.mubr.bf16.gmra.mxu0 %v57
  %v96 = vpop.f32.mrf.mxu0
  %v97 = vadd.f32 0.0, %v96
  %v98 = vpop.f32.mrf.mxu0
  %v99 = vpop.f32.mrf.mxu0
  %v100 = vadd.f32 0.0, %v99
  %v101 = vpop.f32.mrf.mxu0
  %102 = vmatprep.mubr.bf16.mxu0 0
  %103 = vmatmul.mubr.bf16.gmra.mxu0 %v60
  %v104 = vpop.f32.mrf.mxu0
  %v105 = vadd.f32 0.0, %v104
  %v106 = vpop.f32.mrf.mxu0
  %v107 = vpop.f32.mrf.mxu0
  %v108 = vpop.f32.mrf.mxu0
  %109 = vdwg.mxu0
  %v111 = vlaneseq
  %v112 = vshrl.u32 %v111, 7
  %v113 = vsub.s32 0, %v112
  %v114 = vrot.slane %v33, %v113
  %v116 = vadd.f32 %v114, %v97
  %v117 = vadd.f32 %v114, %v100
  %v118 = vadd.f32 %v114, %v105
  %v119 = vld [vmem:[%s1] sm:$0xff]
  %v120 = vld [vmem:[%s1 + $0x8] sm:$0xff]
  %v121 = vld [vmem:[%s1 + $0x10] sm:$0xff]
  %v122 = vpack.c.bf16 %v120, %v119
  %v123 = vpack.c.bf16 %v121, %v121
  %v124 = vld [vmem:[%s4] sm:$0xf]
  %v125 = vld [vmem:[%s4 + $0x4] sm:$0xf]
  %v126 = vld [vmem:[%s4 + $0x8] sm:$0xf]
  %v127 = vld [vmem:[%s4 + $0xc] sm:$0xf]
  %v132 = vunpack.c.l.b16 %v124
  %v133 = vunpack.c.l.b16 %v125
  %v134 = vunpack.c.l.b16 %v126
  %v135 = vunpack.c.l.b16 %v127
  %v136 = vpack.c.b16 %v133, %v132
  %v137 = vpack.c.b16 %v135, %v134
  %v141 = vsel %vm55, %v122, 0
  %v144 = vsel %vm55, %v123, 0
  %146 = vmatprep.subr.bf16.mxu0 0
  %147 = vmatpush1.bf16.msra.mxu0 0
  %148 = vmatprep.subr.bf16.mxu0 0
  %149 = vmatpush1.bf16.msra.mxu0 0
  %150 = vmatprep.subr.bf16.mxu0 0
  %151 = vmatpush1.bf16.msra.mxu0 0
  %152 = vmatprep.subr.bf16.mxu0 0
  %153 = vmatpush1.bf16.msra.mxu0 0
  %154 = vmatprep.subr.bf16.mxu0 0
  %155 = vmatpush1.bf16.msra.mxu0 0
  %156 = vmatprep.subr.bf16.mxu0 0
  %157 = vmatpush1.bf16.msra.mxu0 0
  %158 = vmatprep.subr.bf16.mxu0 0
  %159 = vmatpush1.bf16.msra.mxu0 %v137
  %160 = vmatprep.subr.bf16.mxu0 0
  %161 = vmatpush1.bf16.msra.mxu0 %v136
  %162 = vmatprep.subr.bf16.mxu0 0
  %163 = vmatpush2.bf16.msra.mxu0 0
  %164 = vmatprep.subr.bf16.mxu0 0
  %165 = vmatpush2.bf16.msra.mxu0 0
  %166 = vmatprep.subr.bf16.mxu0 0
  %167 = vmatpush2.bf16.msra.mxu0 0
  %168 = vmatprep.subr.bf16.mxu0 0
  %169 = vmatpush2.bf16.msra.mxu0 0
  %170 = vmatprep.subr.bf16.mxu0 0
  %171 = vmatpush2.bf16.msra.mxu0 0
  %172 = vmatprep.subr.bf16.mxu0 0
  %173 = vmatpush2.bf16.msra.mxu0 0
  %174 = vmatprep.subr.bf16.mxu0 0
  %175 = vmatpush2.bf16.msra.mxu0 0
  %176 = vmatprep.subr.bf16.mxu0 0
  %177 = vmatpush2.bf16.msra.mxu0 0
  %178 = vmatprep.mubr.bf16.mxu0 0
  %179 = vmatmul.mubr.bf16.gmra.mxu0 %v141
  %v180 = vpop.f32.mrf.mxu0
  %v181 = vadd.f32 0.0, %v180
  %v182 = vpop.f32.mrf.mxu0
  %v183 = vpop.f32.mrf.mxu0
  %v184 = vadd.f32 0.0, %v183
  %v185 = vpop.f32.mrf.mxu0
  %186 = vmatprep.mubr.bf16.mxu0 0
  %187 = vmatmul.mubr.bf16.gmra.mxu0 %v144
  %v188 = vpop.f32.mrf.mxu0
  %v189 = vadd.f32 0.0, %v188
  %v190 = vpop.f32.mrf.mxu0
  %v191 = vpop.f32.mrf.mxu0
  %v192 = vpop.f32.mrf.mxu0
  %193 = vdwg.mxu0
  %v194 = vadd.f32 %v116, %v181
  %v195 = vadd.f32 %v117, %v184
  %v196 = vadd.f32 %v118, %v189
  %v197 = vld [vmem:[%s2] sm:$0xff]
  %v198 = vld [vmem:[%s2 + $0x8] sm:$0xff]
  %v199 = vld [vmem:[%s2 + $0x10] sm:$0xff]
  %v200 = vpack.c.bf16 %v198, %v197
  %v201 = vpack.c.bf16 %v199, %v199
  %v202 = vld [vmem:[%s5] sm:$0xf]
  %v203 = vld [vmem:[%s5 + $0x4] sm:$0xf]
  %v204 = vld [vmem:[%s5 + $0x8] sm:$0xf]
  %v205 = vld [vmem:[%s5 + $0xc] sm:$0xf]
  %v210 = vunpack.c.l.b16 %v202
  %v211 = vunpack.c.l.b16 %v203
  %v212 = vunpack.c.l.b16 %v204
  %v213 = vunpack.c.l.b16 %v205
  %v214 = vpack.c.b16 %v211, %v210
  %v215 = vpack.c.b16 %v213, %v212
  %v219 = vsel %vm55, %v200, 0
  %v222 = vsel %vm55, %v201, 0
  %224 = vmatprep.subr.bf16.mxu0 0
  %225 = vmatpush1.bf16.msra.mxu0 0
  %226 = vmatprep.subr.bf16.mxu0 0
  %227 = vmatpush1.bf16.msra.mxu0 0
  %228 = vmatprep.subr.bf16.mxu0 0
  %229 = vmatpush1.bf16.msra.mxu0 0
  %230 = vmatprep.subr.bf16.mxu0 0
  %231 = vmatpush1.bf16.msra.mxu0 0
  %232 = vmatprep.subr.bf16.mxu0 0
  %233 = vmatpush1.bf16.msra.mxu0 0
  %234 = vmatprep.subr.bf16.mxu0 0
  %235 = vmatpush1.bf16.msra.mxu0 0
  %236 = vmatprep.subr.bf16.mxu0 0
  %237 = vmatpush1.bf16.msra.mxu0 %v215
  %238 = vmatprep.subr.bf16.mxu0 0
  %239 = vmatpush1.bf16.msra.mxu0 %v214
  %240 = vmatprep.subr.bf16.mxu0 0
  %241 = vmatpush2.bf16.msra.mxu0 0
  %242 = vmatprep.subr.bf16.mxu0 0
  %243 = vmatpush2.bf16.msra.mxu0 0
  %244 = vmatprep.subr.bf16.mxu0 0
  %245 = vmatpush2.bf16.msra.mxu0 0
  %246 = vmatprep.subr.bf16.mxu0 0
  %247 = vmatpush2.bf16.msra.mxu0 0
  %248 = vmatprep.subr.bf16.mxu0 0
  %249 = vmatpush2.bf16.msra.mxu0 0
  %250 = vmatprep.subr.bf16.mxu0 0
  %251 = vmatpush2.bf16.msra.mxu0 0
  %252 = vmatprep.subr.bf16.mxu0 0
  %253 = vmatpush2.bf16.msra.mxu0 0
  %254 = vmatprep.subr.bf16.mxu0 0
  %255 = vmatpush2.bf16.msra.mxu0 0
  %256 = vmatprep.mubr.bf16.mxu0 0
  %257 = vmatmul.mubr.bf16.gmra.mxu0 %v219
  %v258 = vpop.f32.mrf.mxu0
  %v259 = vadd.f32 0.0, %v258
  %v260 = vpop.f32.mrf.mxu0
  %v261 = vpop.f32.mrf.mxu0
  %v262 = vadd.f32 0.0, %v261
  %v263 = vpop.f32.mrf.mxu0
  %264 = vmatprep.mubr.bf16.mxu0 0
  %265 = vmatmul.mubr.bf16.gmra.mxu0 %v222
  %v266 = vpop.f32.mrf.mxu0
  %v267 = vadd.f32 0.0, %v266
  %v268 = vpop.f32.mrf.mxu0
  %v269 = vpop.f32.mrf.mxu0
  %v270 = vpop.f32.mrf.mxu0
  %271 = vdwg.mxu0
  %v272 = vadd.f32 %v194, %v259
  %v273 = vadd.f32 %v195, %v262
  %v274 = vadd.f32 %v196, %v267
  %v275 = vmax.f32 %v272, 0.0
  %v276 = vmax.f32 %v273, 0.0
  %v277 = vmax.f32 %v274, 0.0
  %v278 = vpack.c.bf16 %v276, %v275
  %v279 = vpack.c.bf16 %v277, %v277
  %v280 = vld [vmem:[%s7] sm:$0xf]
  %v281 = vld [vmem:[%s7 + $0x4] sm:$0xf]
  %v282 = vld [vmem:[%s7 + $0x8] sm:$0xf]
  %v283 = vld [vmem:[%s7 + $0xc] sm:$0xf]
  %v284 = vld [vmem:[%s8] sm:$0x1]
  %v286 = vlaneseq
  %v287 = vshrl.u32 %v286, 7
  %v288 = vsub.s32 0, %v287
  %v289 = vrot.slane %v284, %v288
  %v295 = vunpack.c.l.b16 %v280
  %v296 = vunpack.c.l.b16 %v281
  %v297 = vunpack.c.l.b16 %v282
  %v298 = vunpack.c.l.b16 %v283
  %v299 = vpack.c.b16 %v296, %v295
  %v300 = vpack.c.b16 %v298, %v297
  %v304 = vsel %vm55, %v278, 0
  %v307 = vsel %vm55, %v279, 0
  %309 = vmatprep.subr.bf16.mxu0 0
  %310 = vmatpush1.bf16.msra.mxu0 0
  %311 = vmatprep.subr.bf16.mxu0 0
  %312 = vmatpush1.bf16.msra.mxu0 0
  %313 = vmatprep.subr.bf16.mxu0 0
  %314 = vmatpush1.bf16.msra.mxu0 0
  %315 = vmatprep.subr.bf16.mxu0 0
  %316 = vmatpush1.bf16.msra.mxu0 0
  %317 = vmatprep.subr.bf16.mxu0 0
  %318 = vmatpush1.bf16.msra.mxu0 0
  %319 = vmatprep.subr.bf16.mxu0 0
  %320 = vmatpush1.bf16.msra.mxu0 0
  %321 = vmatprep.subr.bf16.mxu0 0
  %322 = vmatpush1.bf16.msra.mxu0 %v300
  %323 = vmatprep.subr.bf16.mxu0 0
  %324 = vmatpush1.bf16.msra.mxu0 %v299
  %325 = vmatprep.subr.bf16.mxu0 0
  %326 = vmatpush2.bf16.msra.mxu0 0
  %327 = vmatprep.subr.bf16.mxu0 0
  %328 = vmatpush2.bf16.msra.mxu0 0
  %329 = vmatprep.subr.bf16.mxu0 0
  %330 = vmatpush2.bf16.msra.mxu0 0
  %331 = vmatprep.subr.bf16.mxu0 0
  %332 = vmatpush2.bf16.msra.mxu0 0
  %333 = vmatprep.subr.bf16.mxu0 0
  %334 = vmatpush2.bf16.msra.mxu0 0
  %335 = vmatprep.subr.bf16.mxu0 0
  %336 = vmatpush2.bf16.msra.mxu0 0
  %337 = vmatprep.subr.bf16.mxu0 0
  %338 = vmatpush2.bf16.msra.mxu0 0
  %339 = vmatprep.subr.bf16.mxu0 0
  %340 = vmatpush2.bf16.msra.mxu0 0
  %341 = vmatprep.mubr.bf16.mxu0 0
  %342 = vmatmul.mubr.bf16.gmra.mxu0 %v304
  %v343 = vpop.f32.mrf.mxu0
  %v344 = vadd.f32 %v289, %v343
  %v345 = vpop.f32.mrf.mxu0
  %v346 = vpop.f32.mrf.mxu0
  %v347 = vadd.f32 %v289, %v346
  %v348 = vpop.f32.mrf.mxu0
  %349 = vmatprep.mubr.bf16.mxu0 0
  %350 = vmatmul.mubr.bf16.gmra.mxu0 %v307
  %v351 = vpop.f32.mrf.mxu0
  %v352 = vadd.f32 %v289, %v351
  %v353 = vpop.f32.mrf.mxu0
  %v354 = vpop.f32.mrf.mxu0
  %v355 = vpop.f32.mrf.mxu0
  %356 = vdwg.mxu0
  %357 = vst.msk [vmem:[%s9] sm:$0xff] %vm55, %v344
  %358 = vst.msk [vmem:[%s9 + $0x8] sm:$0xff] %vm55, %v347
  %359 = vst.msk [vmem:[%s9 + $0x10] sm:$0xff] %vm55, %v352
  // Predicated region
  $region38: #{gine_forward.18} parent=0 // pred_check
    _
  $region39: #{gine_forward.18} parent=0 // pred_check_branch
    %361 = sbr.rel (0) target = $region41
  $region40: #{gine_forward.18} parent=0 // pred_region
    _
  $region41: #{gine_forward.18} parent=0 // pred_fallthru
    _
  // Predicated region
  $region42: #{gine_forward.18} parent=0 // pred_check
    _
  $region43: #{gine_forward.18} parent=0 // pred_check_branch
    %363 = sbr.rel (0) target = $region45
  $region44: #{gine_forward.18} parent=0 // pred_region
    _
  $region45: #{gine_forward.18} parent=0 // pred_fallthru
    _

// kernel: gine_forward.16
$region0: #{gine_forward.16}
  #allocation0 [shape = 'u32[]', space=smem, size = 0x4, offset = 0x4, fixed_abs, tag = 'smem constant byte address 0x4 - core index']
  #allocation1 [shape = 'u32[144,128]{1,0:T(1,128)}', space=vmem, size = 0x12000, scoped, tag = 'internal scratch']
  #allocation2 [shape = 'f32[12,32]{1,0:T(8,128)}', space=vmem, size = 0x2000, scoped, tag = 'scratch operand']
  #allocation3 [shape = 'f32[8,32]{1,0:T(8,128)}', space=vmem, size = 0x1000, scoped, tag = 'scratch operand']
  #allocation4 [shape = 's32[1]{0}', space=sflag, size = 0x4, scoped, tag = 'scoped memory for gine_forward.16']
  #allocation5 [shape = 'u8[512]{0}', space=smem, size = 0x200, scoped, tag = 'prefetched SMEM operand 0']
  #allocation6 [shape = 'u8[512]{0}', space=smem, size = 0x200, scoped, tag = 'prefetched SMEM operand 1']
  %s0 = inlined_call_operand.vmem [shape: s32[24], index: 0, kind: input, shape index: {}]
  %s1 = inlined_call_operand.vmem [shape: s32[24], index: 1, kind: input, shape index: {}]
  %s2 = inlined_call_operand.vmem [shape: f32[12,32], index: 2, kind: input, shape index: {}]
  %s3 = inlined_call_operand.vmem [shape: f32[24,32], index: 3, kind: input, shape index: {}]
  %s4 = inlined_call_operand.vmem [shape: f32[12,32], index: 4, kind: output, shape index: {}]
  %s5 = sld [smem:[#allocation0]]
  $region26: #{gine_forward.16} parent=0
    _
  %s7 = ssub.s32 1, %s5
  %s8 = scalar_select 0, %s7, %s5
  %s9 = sshll.u32 %s0, 4
  %s10 = int_to_ptr.vmem [resolvable:$true] %s9
  %12 = dma.vmem_to_smem %s10, 16, [#allocation5], [#allocation4]
  %s13 = sshll.u32 %s1, 4
  %s14 = int_to_ptr.vmem [resolvable:$true] %s13
  %16 = dma.vmem_to_smem %s14, 16, [#allocation6], [#allocation4]
  %17 = dma.done [#allocation4], 32
  %18 = sfence
  // Predicated region
  $region2: #{gine_forward.16} parent=0 // pred_check
    _
  $region3: #{gine_forward.16} parent=0 // pred_check_branch
    %20 = sbr.rel (0) target = $region5
  $region4: #{gine_forward.16} parent=0 // pred_region
    _
  $region5: #{gine_forward.16} parent=0 // pred_fallthru
    _
  // Predicated region
  $region6: #{gine_forward.16} parent=0 // pred_check
    _
  $region7: #{gine_forward.16} parent=0 // pred_check_branch
    %22 = sbr.rel (0) target = $region9
  $region8: #{gine_forward.16} parent=0 // pred_region
    _
  $region9: #{gine_forward.16} parent=0 // pred_fallthru
    _
  %p23 = scmp.eq.s32.totalorder 0, 0
  // Predicated region
  $region10: #{gine_forward.16} parent=0 // pred_check
    %p24 = pneg %p23
  $region11: #{gine_forward.16} parent=0 // pred_check_branch
    %26 = sbr.rel (%p24) target = $region13
  $region12: #{gine_forward.16} parent=0 // pred_region
    %vm27 = vcmask 261120
    %28 = vst.msk [vmem:[#allocation2] sm:$0xff] %vm27, 0.0
    %vm29 = vcmask 257024
    %30 = vst.msk [vmem:[#allocation2 + $0x8] sm:$0xf] %vm29, 0.0
  $region13: #{gine_forward.16} parent=0 // pred_fallthru
    _
  %s31 = smul.u32 0, 24
  %s32 = sadd.s32 %s31, 0
  %s33 = sld [smem:[#allocation5 + %s32]]
  %s34 = scalar_lea.vmem %s2, %s33
  %v35 = vld [vmem:[%s34] sm:$0x1]
  %vm36 = vcmask 253952
  %37 = vst.msk [vmem:[#allocation3] sm:$0x1] %vm36, %v35
  %s38 = sadd.s32 %s32, 1
  %s39 = sld [smem:[#allocation5 + %s38]]
  %s40 = scalar_lea.vmem %s2, %s39
  %v41 = vld [vmem:[%s40] sm:$0x1]
  %42 = vst.msk [vmem:[#allocation3 + $0x1] sm:$0x1] %vm36, %v41
  %s43 = sadd.s32 %s32, 2
  %s44 = sld [smem:[#allocation5 + %s43]]
  %s45 = scalar_lea.vmem %s2, %s44
  %v46 = vld [vmem:[%s45] sm:$0x1]
  %47 = vst.msk [vmem:[#allocation3 + $0x2] sm:$0x1] %vm36, %v46
  %s48 = sadd.s32 %s32, 3
  %s49 = sld [smem:[#allocation5 + %s48]]
  %s50 = scalar_lea.vmem %s2, %s49
  %v51 = vld [vmem:[%s50] sm:$0x1]
  %52 = vst.msk [vmem:[#allocation3 + $0x3] sm:$0x1] %vm36, %v51
  %s53 = sadd.s32 %s32, 4
  %s54 = sld [smem:[#allocation5 + %s53]]
  %s55 = scalar_lea.vmem %s2, %s54
  %v56 = vld [vmem:[%s55] sm:$0x1]
  %57 = vst.msk [vmem:[#allocation3 + $0x4] sm:$0x1] %vm36, %v56
  %s58 = sadd.s32 %s32, 5
  %s59 = sld [smem:[#allocation5 + %s58]]
  %s60 = scalar_lea.vmem %s2, %s59
  %v61 = vld [vmem:[%s60] sm:$0x1]
  %62 = vst.msk [vmem:[#allocation3 + $0x5] sm:$0x1] %vm36, %v61
  %s63 = sadd.s32 %s32, 6
  %s64 = sld [smem:[#allocation5 + %s63]]
  %s65 = scalar_lea.vmem %s2, %s64
  %v66 = vld [vmem:[%s65] sm:$0x1]
  %67 = vst.msk [vmem:[#allocation3 + $0x6] sm:$0x1] %vm36, %v66
  %s68 = sadd.s32 %s32, 7
  %s69 = sld [smem:[#allocation5 + %s68]]
  %s70 = scalar_lea.vmem %s2, %s69
  %v71 = vld [vmem:[%s70] sm:$0x1]
  %72 = vst.msk [vmem:[#allocation3 + $0x7] sm:$0x1] %vm36, %v71
  %v73 = vld [vmem:[#allocation3] sm:$0xff]
  %v74 = vld [vmem:[%s3] sm:$0xff]
  %v75 = vadd.f32 %v73, %v74
  %v76 = vmax.f32 %v75, 0.0
  %v77 = vlaneseq
  %v78 = vshrl.u32 %v77, 7
  %v79 = vstv %s32
  %v80 = vadd.s32 %v79, %v78
  %vm81 = vcmp.lt.s32.totalorder %v80, 24
  %v82 = vsel %vm81, 1, 0
  %vm83 = vcmp.eq.s32.totalorder %v82, 1
  %v84 = vsel %vm83, %v76, 0.0
  %s85 = sld [smem:[#allocation6 + %s32]]
  %s86 = scalar_lea.vmem [#allocation2], %s85
  %v87 = vld [vmem:[%s86] sm:$0x1]
  %v88 = vadd.f32 %v87, %v84
  %89 = vst.msk [vmem:[%s86] sm:$0x1] %vm36, %v88
  %s90 = sld [smem:[#allocation6 + %s38]]
  %s91 = scalar_lea.vmem [#allocation2], %s90
  %v92 = vld [vmem:[%s91] sm:$0x1]
  %v94 = vrot.slane %v84, 1
  %v96 = vadd.f32 %v92, %v94
  %97 = vst.msk [vmem:[%s91] sm:$0x1] %vm36, %v96
  %s98 = sld [smem:[#allocation6 + %s43]]
  %s99 = scalar_lea.vmem [#allocation2], %s98
  %v100 = vld [vmem:[%s99] sm:$0x1]
  %v101 = vrot.slane %v84, 2
  %v103 = vadd.f32 %v100, %v101
  %104 = vst.msk [vmem:[%s99] sm:$0x1] %vm36, %v103
  %s105 = sld [smem:[#allocation6 + %s48]]
  %s106 = scalar_lea.vmem [#allocation2], %s105
  %v107 = vld [vmem:[%s106] sm:$0x1]
  %v108 = vrot.slane %v84, 3
  %v110 = vadd.f32 %v107, %v108
  %111 = vst.msk [vmem:[%s106] sm:$0x1] %vm36, %v110
  %s112 = sld [smem:[#allocation6 + %s53]]
  %s113 = scalar_lea.vmem [#allocation2], %s112
  %v114 = vld [vmem:[%s113] sm:$0x1]
  %v115 = vrot.slane %v84, 4
  %v117 = vadd.f32 %v114, %v115
  %118 = vst.msk [vmem:[%s113] sm:$0x1] %vm36, %v117
  %s119 = sld [smem:[#allocation6 + %s58]]
  %s120 = scalar_lea.vmem [#allocation2], %s119
  %v121 = vld [vmem:[%s120] sm:$0x1]
  %v122 = vrot.slane %v84, 5
  %v124 = vadd.f32 %v121, %v122
  %125 = vst.msk [vmem:[%s120] sm:$0x1] %vm36, %v124
  %s126 = sld [smem:[#allocation6 + %s63]]
  %s127 = scalar_lea.vmem [#allocation2], %s126
  %v128 = vld [vmem:[%s127] sm:$0x1]
  %v129 = vrot.slane %v84, 6
  %v131 = vadd.f32 %v128, %v129
  %132 = vst.msk [vmem:[%s127] sm:$0x1] %vm36, %v131
  %s133 = sld [smem:[#allocation6 + %s68]]
  %s134 = scalar_lea.vmem [#allocation2], %s133
  %v135 = vld [vmem:[%s134] sm:$0x1]
  %v136 = vrot.slane %v84, 7
  %v138 = vadd.f32 %v135, %v136
  %139 = vst.msk [vmem:[%s134] sm:$0x1] %vm36, %v138
  %s140 = sadd.s32 %s31, 8
  %s141 = sld [smem:[#allocation5 + %s140]]
  %s142 = scalar_lea.vmem %s2, %s141
  %v143 = vld [vmem:[%s142] sm:$0x1]
  %144 = vst.msk [vmem:[#allocation3] sm:$0x1] %vm36, %v143
  %s145 = sadd.s32 %s140, 1
  %s146 = sld [smem:[#allocation5 + %s145]]
  %s147 = scalar_lea.vmem %s2, %s146
  %v148 = vld [vmem:[%s147] sm:$0x1]
  %149 = vst.msk [vmem:[#allocation3 + $0x1] sm:$0x1] %vm36, %v148
  %s150 = sadd.s32 %s140, 2
  %s151 = sld [smem:[#allocation5 + %s150]]
  %s152 = scalar_lea.vmem %s2, %s151
  %v153 = vld [vmem:[%s152] sm:$0x1]
  %154 = vst.msk [vmem:[#allocation3 + $0x2] sm:$0x1] %vm36, %v153
  %s155 = sadd.s32 %s140, 3
  %s156 = sld [smem:[#allocation5 + %s155]]
  %s157 = scalar_lea.vmem %s2, %s156
  %v158 = vld [vmem:[%s157] sm:$0x1]
  %159 = vst.msk [vmem:[#allocation3 + $0x3] sm:$0x1] %vm36, %v158
  %s160 = sadd.s32 %s140, 4
  %s161 = sld [smem:[#allocation5 + %s160]]
  %s162 = scalar_lea.vmem %s2, %s161
  %v163 = vld [vmem:[%s162] sm:$0x1]
  %164 = vst.msk [vmem:[#allocation3 + $0x4] sm:$0x1] %vm36, %v163
  %s165 = sadd.s32 %s140, 5
  %s166 = sld [smem:[#allocation5 + %s165]]
  %s167 = scalar_lea.vmem %s2, %s166
  %v168 = vld [vmem:[%s167] sm:$0x1]
  %169 = vst.msk [vmem:[#allocation3 + $0x5] sm:$0x1] %vm36, %v168
  %s170 = sadd.s32 %s140, 6
  %s171 = sld [smem:[#allocation5 + %s170]]
  %s172 = scalar_lea.vmem %s2, %s171
  %v173 = vld [vmem:[%s172] sm:$0x1]
  %174 = vst.msk [vmem:[#allocation3 + $0x6] sm:$0x1] %vm36, %v173
  %s175 = sadd.s32 %s140, 7
  %s176 = sld [smem:[#allocation5 + %s175]]
  %s177 = scalar_lea.vmem %s2, %s176
  %v178 = vld [vmem:[%s177] sm:$0x1]
  %179 = vst.msk [vmem:[#allocation3 + $0x7] sm:$0x1] %vm36, %v178
  %v180 = vld [vmem:[#allocation3] sm:$0xff]
  %s181 = scalar_lea.vmem %s3, 8
  %v182 = vld [vmem:[%s181] sm:$0xff]
  %v183 = vadd.f32 %v180, %v182
  %v184 = vmax.f32 %v183, 0.0
  %v185 = vstv %s140
  %v186 = vadd.s32 %v185, %v78
  %vm187 = vcmp.lt.s32.totalorder %v186, 24
  %v188 = vsel %vm187, 1, 0
  %vm189 = vcmp.eq.s32.totalorder %v188, 1
  %v190 = vsel %vm189, %v184, 0.0
  %s191 = sld [smem:[#allocation6 + %s140]]
  %s192 = scalar_lea.vmem [#allocation2], %s191
  %v193 = vld [vmem:[%s192] sm:$0x1]
  %v194 = vadd.f32 %v193, %v190
  %195 = vst.msk [vmem:[%s192] sm:$0x1] %vm36, %v194
  %s196 = sld [smem:[#allocation6 + %s145]]
  %s197 = scalar_lea.vmem [#allocation2], %s196
  %v198 = vld [vmem:[%s197] sm:$0x1]
  %v200 = vrot.slane %v190, 1
  %v202 = vadd.f32 %v198, %v200
  %203 = vst.msk [vmem:[%s197] sm:$0x1] %vm36, %v202
  %s204 = sld [smem:[#allocation6 + %s150]]
  %s205 = scalar_lea.vmem [#allocation2], %s204
  %v206 = vld [vmem:[%s205] sm:$0x1]
  %v207 = vrot.slane %v190, 2
  %v209 = vadd.f32 %v206, %v207
  %210 = vst.msk [vmem:[%s205] sm:$0x1] %vm36, %v209
  %s211 = sld [smem:[#allocation6 + %s155]]
  %s212 = scalar_lea.vmem [#allocation2], %s211
  %v213 = vld [vmem:[%s212] sm:$0x1]
  %v214 = vrot.slane %v190, 3
  %v216 = vadd.f32 %v213, %v214
  %217 = vst.msk [vmem:[%s212] sm:$0x1] %vm36, %v216
  %s218 = sld [smem:[#allocation6 + %s160]]
  %s219 = scalar_lea.vmem [#allocation2], %s218
  %v220 = vld [vmem:[%s219] sm:$0x1]
  %v221 = vrot.slane %v190, 4
  %v223 = vadd.f32 %v220, %v221
  %224 = vst.msk [vmem:[%s219] sm:$0x1] %vm36, %v223
  %s225 = sld [smem:[#allocation6 + %s165]]
  %s226 = scalar_lea.vmem [#allocation2], %s225
  %v227 = vld [vmem:[%s226] sm:$0x1]
  %v228 = vrot.slane %v190, 5
  %v230 = vadd.f32 %v227, %v228
  %231 = vst.msk [vmem:[%s226] sm:$0x1] %vm36, %v230
  %s232 = sld [smem:[#allocation6 + %s170]]
  %s233 = scalar_lea.vmem [#allocation2], %s232
  %v234 = vld [vmem:[%s233] sm:$0x1]
  %v235 = vrot.slane %v190, 6
  %v237 = vadd.f32 %v234, %v235
  %238 = vst.msk [vmem:[%s233] sm:$0x1] %vm36, %v237
  %s239 = sld [smem:[#allocation6 + %s175]]
  %s240 = scalar_lea.vmem [#allocation2], %s239
  %v241 = vld [vmem:[%s240] sm:$0x1]
  %v242 = vrot.slane %v190, 7
  %v244 = vadd.f32 %v241, %v242
  %245 = vst.msk [vmem:[%s240] sm:$0x1] %vm36, %v244
  %s246 = sadd.s32 %s31, 16
  %s247 = sld [smem:[#allocation5 + %s246]]
  %s248 = scalar_lea.vmem %s2, %s247
  %v249 = vld [vmem:[%s248] sm:$0x1]
  %250 = vst.msk [vmem:[#allocation3] sm:$0x1] %vm36, %v249
  %s251 = sadd.s32 %s246, 1
  %s252 = sld [smem:[#allocation5 + %s251]]
  %s253 = scalar_lea.vmem %s2, %s252
  %v254 = vld [vmem:[%s253] sm:$0x1]
  %255 = vst.msk [vmem:[#allocation3 + $0x1] sm:$0x1] %vm36, %v254
  %s256 = sadd.s32 %s246, 2
  %s257 = sld [smem:[#allocation5 + %s256]]
  %s258 = scalar_lea.vmem %s2, %s257
  %v259 = vld [vmem:[%s258] sm:$0x1]
  %260 = vst.msk [vmem:[#allocation3 + $0x2] sm:$0x1] %vm36, %v259
  %s261 = sadd.s32 %s246, 3
  %s262 = sld [smem:[#allocation5 + %s261]]
  %s263 = scalar_lea.vmem %s2, %s262
  %v264 = vld [vmem:[%s263] sm:$0x1]
  %265 = vst.msk [vmem:[#allocation3 + $0x3] sm:$0x1] %vm36, %v264
  %s266 = sadd.s32 %s246, 4
  %s267 = sld [smem:[#allocation5 + %s266]]
  %s268 = scalar_lea.vmem %s2, %s267
  %v269 = vld [vmem:[%s268] sm:$0x1]
  %270 = vst.msk [vmem:[#allocation3 + $0x4] sm:$0x1] %vm36, %v269
  %s271 = sadd.s32 %s246, 5
  %s272 = sld [smem:[#allocation5 + %s271]]
  %s273 = scalar_lea.vmem %s2, %s272
  %v274 = vld [vmem:[%s273] sm:$0x1]
  %275 = vst.msk [vmem:[#allocation3 + $0x5] sm:$0x1] %vm36, %v274
  %s276 = sadd.s32 %s246, 6
  %s277 = sld [smem:[#allocation5 + %s276]]
  %s278 = scalar_lea.vmem %s2, %s277
  %v279 = vld [vmem:[%s278] sm:$0x1]
  %280 = vst.msk [vmem:[#allocation3 + $0x6] sm:$0x1] %vm36, %v279
  %s281 = sadd.s32 %s246, 7
  %s282 = sld [smem:[#allocation5 + %s281]]
  %s283 = scalar_lea.vmem %s2, %s282
  %v284 = vld [vmem:[%s283] sm:$0x1]
  %285 = vst.msk [vmem:[#allocation3 + $0x7] sm:$0x1] %vm36, %v284
  %v286 = vld [vmem:[#allocation3] sm:$0xff]
  %s287 = scalar_lea.vmem %s3, 16
  %v288 = vld [vmem:[%s287] sm:$0xff]
  %v289 = vadd.f32 %v286, %v288
  %v290 = vmax.f32 %v289, 0.0
  %v291 = vstv %s246
  %v292 = vadd.s32 %v291, %v78
  %vm293 = vcmp.lt.s32.totalorder %v292, 24
  %v294 = vsel %vm293, 1, 0
  %vm295 = vcmp.eq.s32.totalorder %v294, 1
  %v296 = vsel %vm295, %v290, 0.0
  %s297 = sld [smem:[#allocation6 + %s246]]
  %s298 = scalar_lea.vmem [#allocation2], %s297
  %v299 = vld [vmem:[%s298] sm:$0x1]
  %v300 = vadd.f32 %v299, %v296
  %301 = vst.msk [vmem:[%s298] sm:$0x1] %vm36, %v300
  %s302 = sld [smem:[#allocation6 + %s251]]
  %s303 = scalar_lea.vmem [#allocation2], %s302
  %v304 = vld [vmem:[%s303] sm:$0x1]
  %v306 = vrot.slane %v296, 1
  %v308 = vadd.f32 %v304, %v306
  %309 = vst.msk [vmem:[%s303] sm:$0x1] %vm36, %v308
  %s310 = sld [smem:[#allocation6 + %s256]]
  %s311 = scalar_lea.vmem [#allocation2], %s310
  %v312 = vld [vmem:[%s311] sm:$0x1]
  %v313 = vrot.slane %v296, 2
  %v315 = vadd.f32 %v312, %v313
  %316 = vst.msk [vmem:[%s311] sm:$0x1] %vm36, %v315
  %s317 = sld [smem:[#allocation6 + %s261]]
  %s318 = scalar_lea.vmem [#allocation2], %s317
  %v319 = vld [vmem:[%s318] sm:$0x1]
  %v320 = vrot.slane %v296, 3
  %v322 = vadd.f32 %v319, %v320
  %323 = vst.msk [vmem:[%s318] sm:$0x1] %vm36, %v322
  %s324 = sld [smem:[#allocation6 + %s266]]
  %s325 = scalar_lea.vmem [#allocation2], %s324
  %v326 = vld [vmem:[%s325] sm:$0x1]
  %v327 = vrot.slane %v296, 4
  %v329 = vadd.f32 %v326, %v327
  %330 = vst.msk [vmem:[%s325] sm:$0x1] %vm36, %v329
  %s331 = sld [smem:[#allocation6 + %s271]]
  %s332 = scalar_lea.vmem [#allocation2], %s331
  %v333 = vld [vmem:[%s332] sm:$0x1]
  %v334 = vrot.slane %v296, 5
  %v336 = vadd.f32 %v333, %v334
  %337 = vst.msk [vmem:[%s332] sm:$0x1] %vm36, %v336
  %s338 = sld [smem:[#allocation6 + %s276]]
  %s339 = scalar_lea.vmem [#allocation2], %s338
  %v340 = vld [vmem:[%s339] sm:$0x1]
  %v341 = vrot.slane %v296, 6
  %v343 = vadd.f32 %v340, %v341
  %344 = vst.msk [vmem:[%s339] sm:$0x1] %vm36, %v343
  %s345 = sld [smem:[#allocation6 + %s281]]
  %s346 = scalar_lea.vmem [#allocation2], %s345
  %v347 = vld [vmem:[%s346] sm:$0x1]
  %v348 = vrot.slane %v296, 7
  %v350 = vadd.f32 %v347, %v348
  %351 = vst.msk [vmem:[%s346] sm:$0x1] %vm36, %v350
  // Predicated region
  $region14: #{gine_forward.16} parent=0 // pred_check
    %p352 = pneg %p23
  $region15: #{gine_forward.16} parent=0 // pred_check_branch
    %354 = sbr.rel (%p352) target = $region17
  $region16: #{gine_forward.16} parent=0 // pred_region
    %v355 = vld [vmem:[%s2] sm:$0xff]
    %v356 = vld [vmem:[%s2 + $0x8] sm:$0xf]
    %v357 = vld [vmem:[#allocation2] sm:$0xff]
    %v358 = vld [vmem:[#allocation2 + $0x8] sm:$0xf]
    %v359 = vadd.f32 %v355, %v357
    %v360 = vadd.f32 %v356, %v358
    %vm361 = vcmask 261120
    %362 = vst.msk [vmem:[%s4] sm:$0xff] %vm361, %v359
    %vm363 = vcmask 257024
    %364 = vst.msk [vmem:[%s4 + $0x8] sm:$0xf] %vm363, %v360
  $region17: #{gine_forward.16} parent=0 // pred_fallthru
    _
  // Predicated region
  $region18: #{gine_forward.16} parent=0 // pred_check
    _
  $region19: #{gine_forward.16} parent=0 // pred_check_branch
    %366 = sbr.rel (0) target = $region21
  $region20: #{gine_forward.16} parent=0 // pred_region
    _
  $region21: #{gine_forward.16} parent=0 // pred_fallthru
    _
  // Predicated region
  $region22: #{gine_forward.16} parent=0 // pred_check
    _
  $region23: #{gine_forward.16} parent=0 // pred_check_branch
    %368 = sbr.rel (0) target = $region25
  $region24: #{gine_forward.16} parent=0 // pred_region
    _
  $region25: #{gine_forward.16} parent=0 // pred_fallthru
    _

// kernel: gine_forward.23
$region0: #{gine_forward.23}
  #allocation0 [shape = 'u32[]', space=smem, size = 0x4, offset = 0x4, fixed_abs, tag = 'smem constant byte address 0x4 - core index']
  #allocation1 [shape = 'u32[144,128]{1,0:T(1,128)}', space=vmem, size = 0x12000, scoped, tag = 'internal scratch']
  %s0 = inlined_call_operand.vmem [shape: f32[24,32], index: 0, kind: input, shape index: {}]
  %s1 = inlined_call_operand.vmem [shape: f32[24,32], index: 1, kind: input, shape index: {}]
  %s2 = inlined_call_operand.vmem [shape: f32[24,32], index: 2, kind: input, shape index: {}]
  %s3 = inlined_call_operand.vmem [shape: bf16[32,128], index: 3, kind: input, shape index: {}]
  %s4 = inlined_call_operand.vmem [shape: bf16[32,128], index: 4, kind: input, shape index: {}]
  %s5 = inlined_call_operand.vmem [shape: bf16[32,128], index: 5, kind: input, shape index: {}]
  %s6 = inlined_call_operand.vmem [shape: f32[1,128], index: 6, kind: input, shape index: {}]
  %s7 = inlined_call_operand.vmem [shape: f32[24,128], index: 7, kind: output, shape index: {}]
  %s8 = sld [smem:[#allocation0]]
  $region38: #{gine_forward.23} parent=0
    _
  %s10 = ssub.s32 1, %s8
  %s11 = scalar_select 0, %s10, %s8
  // Predicated region
  $region2: #{gine_forward.23} parent=0 // pred_check
    _
  $region3: #{gine_forward.23} parent=0 // pred_check_branch
    %13 = sbr.rel (0) target = $region5
  $region4: #{gine_forward.23} parent=0 // pred_region
    _
  $region5: #{gine_forward.23} parent=0 // pred_fallthru
    _
  // Predicated region
  $region6: #{gine_forward.23} parent=0 // pred_check
    _
  $region7: #{gine_forward.23} parent=0 // pred_check_branch
    %15 = sbr.rel (0) target = $region9
  $region8: #{gine_forward.23} parent=0 // pred_region
    _
  $region9: #{gine_forward.23} parent=0 // pred_fallthru
    _
  // Predicated region
  $region10: #{gine_forward.23} parent=0 // pred_check
    _
  $region11: #{gine_forward.23} parent=0 // pred_check_branch
    %17 = sbr.rel (0) target = $region13
  $region12: #{gine_forward.23} parent=0 // pred_region
    _
  $region13: #{gine_forward.23} parent=0 // pred_fallthru
    _
  // Predicated region
  $region14: #{gine_forward.23} parent=0 // pred_check
    _
  $region15: #{gine_forward.23} parent=0 // pred_check_branch
    %19 = sbr.rel (0) target = $region17
  $region16: #{gine_forward.23} parent=0 // pred_region
    _
  $region17: #{gine_forward.23} parent=0 // pred_fallthru
    _
  // Predicated region
  $region18: #{gine_forward.23} parent=0 // pred_check
    _
  $region19: #{gine_forward.23} parent=0 // pred_check_branch
    %21 = sbr.rel (0) target = $region21
  $region20: #{gine_forward.23} parent=0 // pred_region
    _
  $region21: #{gine_forward.23} parent=0 // pred_fallthru
    _
  // Predicated region
  $region22: #{gine_forward.23} parent=0 // pred_check
    _
  $region23: #{gine_forward.23} parent=0 // pred_check_branch
    %23 = sbr.rel (0) target = $region25
  $region24: #{gine_forward.23} parent=0 // pred_region
    _
  $region25: #{gine_forward.23} parent=0 // pred_fallthru
    _
  // Predicated region
  $region26: #{gine_forward.23} parent=0 // pred_check
    _
  $region27: #{gine_forward.23} parent=0 // pred_check_branch
    %25 = sbr.rel (0) target = $region29
  $region28: #{gine_forward.23} parent=0 // pred_region
    _
  $region29: #{gine_forward.23} parent=0 // pred_fallthru
    _
  %v27 = vld [vmem:[%s6] sm:$0x1]
  %v28 = vld [vmem:[%s0] sm:$0xff]
  %v29 = vld [vmem:[%s0 + $0x8] sm:$0xff]
  %v30 = vld [vmem:[%s0 + $0x10] sm:$0xff]
  %v31 = vpack.c.bf16 %v29, %v28
  %v32 = vpack.c.bf16 %v30, %v30
  %v33 = vld [vmem:[%s3] sm:$0xf]
  %v34 = vld [vmem:[%s3 + $0x4] sm:$0xf]
  %v35 = vld [vmem:[%s3 + $0x8] sm:$0xf]
  %v36 = vld [vmem:[%s3 + $0xc] sm:$0xf]
  %v41 = vunpack.c.l.b16 %v33
  %v42 = vunpack.c.l.b16 %v34
  %v43 = vunpack.c.l.b16 %v35
  %v44 = vunpack.c.l.b16 %v36
  %v45 = vpack.c.b16 %v42, %v41
  %v46 = vpack.c.b16 %v44, %v43
  %vm49 = vcmask 261120
  %v51 = vsel %vm49, %v31, 0
  %v54 = vsel %vm49, %v32, 0
  %56 = vmatprep.subr.bf16.mxu0 0
  %57 = vmatpush1.bf16.msra.mxu0 0
  %58 = vmatprep.subr.bf16.mxu0 0
  %59 = vmatpush1.bf16.msra.mxu0 0
  %60 = vmatprep.subr.bf16.mxu0 0
  %61 = vmatpush1.bf16.msra.mxu0 0
  %62 = vmatprep.subr.bf16.mxu0 0
  %63 = vmatpush1.bf16.msra.mxu0 0
  %64 = vmatprep.subr.bf16.mxu0 0
  %65 = vmatpush1.bf16.msra.mxu0 0
  %66 = vmatprep.subr.bf16.mxu0 0
  %67 = vmatpush1.bf16.msra.mxu0 0
  %68 = vmatprep.subr.bf16.mxu0 0
  %69 = vmatpush1.bf16.msra.mxu0 %v46
  %70 = vmatprep.subr.bf16.mxu0 0
  %71 = vmatpush1.bf16.msra.mxu0 %v45
  %72 = vmatprep.subr.bf16.mxu0 0
  %73 = vmatpush2.bf16.msra.mxu0 0
  %74 = vmatprep.subr.bf16.mxu0 0
  %75 = vmatpush2.bf16.msra.mxu0 0
  %76 = vmatprep.subr.bf16.mxu0 0
  %77 = vmatpush2.bf16.msra.mxu0 0
  %78 = vmatprep.subr.bf16.mxu0 0
  %79 = vmatpush2.bf16.msra.mxu0 0
  %80 = vmatprep.subr.bf16.mxu0 0
  %81 = vmatpush2.bf16.msra.mxu0 0
  %82 = vmatprep.subr.bf16.mxu0 0
  %83 = vmatpush2.bf16.msra.mxu0 0
  %84 = vmatprep.subr.bf16.mxu0 0
  %85 = vmatpush2.bf16.msra.mxu0 0
  %86 = vmatprep.subr.bf16.mxu0 0
  %87 = vmatpush2.bf16.msra.mxu0 0
  %88 = vmatprep.mubr.bf16.mxu0 0
  %89 = vmatmul.mubr.bf16.gmra.mxu0 %v51
  %v90 = vpop.f32.mrf.mxu0
  %v91 = vadd.f32 0.0, %v90
  %v92 = vpop.f32.mrf.mxu0
  %v93 = vpop.f32.mrf.mxu0
  %v94 = vadd.f32 0.0, %v93
  %v95 = vpop.f32.mrf.mxu0
  %96 = vmatprep.mubr.bf16.mxu0 0
  %97 = vmatmul.mubr.bf16.gmra.mxu0 %v54
  %v98 = vpop.f32.mrf.mxu0
  %v99 = vadd.f32 0.0, %v98
  %v100 = vpop.f32.mrf.mxu0
  %v101 = vpop.f32.mrf.mxu0
  %v102 = vpop.f32.mrf.mxu0
  %103 = vdwg.mxu0
  %v105 = vlaneseq
  %v106 = vshrl.u32 %v105, 7
  %v107 = vsub.s32 0, %v106
  %v108 = vrot.slane %v27, %v107
  %v110 = vadd.f32 %v108, %v91
  %v111 = vadd.f32 %v108, %v94
  %v112 = vadd.f32 %v108, %v99
  %v113 = vld [vmem:[%s1] sm:$0xff]
  %v114 = vld [vmem:[%s1 + $0x8] sm:$0xff]
  %v115 = vld [vmem:[%s1 + $0x10] sm:$0xff]
  %v116 = vpack.c.bf16 %v114, %v113
  %v117 = vpack.c.bf16 %v115, %v115
  %v118 = vld [vmem:[%s4] sm:$0xf]
  %v119 = vld [vmem:[%s4 + $0x4] sm:$0xf]
  %v120 = vld [vmem:[%s4 + $0x8] sm:$0xf]
  %v121 = vld [vmem:[%s4 + $0xc] sm:$0xf]
  %v126 = vunpack.c.l.b16 %v118
  %v127 = vunpack.c.l.b16 %v119
  %v128 = vunpack.c.l.b16 %v120
  %v129 = vunpack.c.l.b16 %v121
  %v130 = vpack.c.b16 %v127, %v126
  %v131 = vpack.c.b16 %v129, %v128
  %v135 = vsel %vm49, %v116, 0
  %v138 = vsel %vm49, %v117, 0
  %140 = vmatprep.subr.bf16.mxu0 0
  %141 = vmatpush1.bf16.msra.mxu0 0
  %142 = vmatprep.subr.bf16.mxu0 0
  %143 = vmatpush1.bf16.msra.mxu0 0
  %144 = vmatprep.subr.bf16.mxu0 0
  %145 = vmatpush1.bf16.msra.mxu0 0
  %146 = vmatprep.subr.bf16.mxu0 0
  %147 = vmatpush1.bf16.msra.mxu0 0
  %148 = vmatprep.subr.bf16.mxu0 0
  %149 = vmatpush1.bf16.msra.mxu0 0
  %150 = vmatprep.subr.bf16.mxu0 0
  %151 = vmatpush1.bf16.msra.mxu0 0
  %152 = vmatprep.subr.bf16.mxu0 0
  %153 = vmatpush1.bf16.msra.mxu0 %v131
  %154 = vmatprep.subr.bf16.mxu0 0
  %155 = vmatpush1.bf16.msra.mxu0 %v130
  %156 = vmatprep.subr.bf16.mxu0 0
  %157 = vmatpush2.bf16.msra.mxu0 0
  %158 = vmatprep.subr.bf16.mxu0 0
  %159 = vmatpush2.bf16.msra.mxu0 0
  %160 = vmatprep.subr.bf16.mxu0 0
  %161 = vmatpush2.bf16.msra.mxu0 0
  %162 = vmatprep.subr.bf16.mxu0 0
  %163 = vmatpush2.bf16.msra.mxu0 0
  %164 = vmatprep.subr.bf16.mxu0 0
  %165 = vmatpush2.bf16.msra.mxu0 0
  %166 = vmatprep.subr.bf16.mxu0 0
  %167 = vmatpush2.bf16.msra.mxu0 0
  %168 = vmatprep.subr.bf16.mxu0 0
  %169 = vmatpush2.bf16.msra.mxu0 0
  %170 = vmatprep.subr.bf16.mxu0 0
  %171 = vmatpush2.bf16.msra.mxu0 0
  %172 = vmatprep.mubr.bf16.mxu0 0
  %173 = vmatmul.mubr.bf16.gmra.mxu0 %v135
  %v174 = vpop.f32.mrf.mxu0
  %v175 = vadd.f32 0.0, %v174
  %v176 = vpop.f32.mrf.mxu0
  %v177 = vpop.f32.mrf.mxu0
  %v178 = vadd.f32 0.0, %v177
  %v179 = vpop.f32.mrf.mxu0
  %180 = vmatprep.mubr.bf16.mxu0 0
  %181 = vmatmul.mubr.bf16.gmra.mxu0 %v138
  %v182 = vpop.f32.mrf.mxu0
  %v183 = vadd.f32 0.0, %v182
  %v184 = vpop.f32.mrf.mxu0
  %v185 = vpop.f32.mrf.mxu0
  %v186 = vpop.f32.mrf.mxu0
  %187 = vdwg.mxu0
  %v188 = vadd.f32 %v110, %v175
  %v189 = vadd.f32 %v111, %v178
  %v190 = vadd.f32 %v112, %v183
  %v191 = vld [vmem:[%s2] sm:$0xff]
  %v192 = vld [vmem:[%s2 + $0x8] sm:$0xff]
  %v193 = vld [vmem:[%s2 + $0x10] sm:$0xff]
  %v194 = vpack.c.bf16 %v192, %v191
  %v195 = vpack.c.bf16 %v193, %v193
  %v196 = vld [vmem:[%s5] sm:$0xf]
  %v197 = vld [vmem:[%s5 + $0x4] sm:$0xf]
  %v198 = vld [vmem:[%s5 + $0x8] sm:$0xf]
  %v199 = vld [vmem:[%s5 + $0xc] sm:$0xf]
  %v204 = vunpack.c.l.b16 %v196
  %v205 = vunpack.c.l.b16 %v197
  %v206 = vunpack.c.l.b16 %v198
  %v207 = vunpack.c.l.b16 %v199
  %v208 = vpack.c.b16 %v205, %v204
  %v209 = vpack.c.b16 %v207, %v206
  %v213 = vsel %vm49, %v194, 0
  %v216 = vsel %vm49, %v195, 0
  %218 = vmatprep.subr.bf16.mxu0 0
  %219 = vmatpush1.bf16.msra.mxu0 0
  %220 = vmatprep.subr.bf16.mxu0 0
  %221 = vmatpush1.bf16.msra.mxu0 0
  %222 = vmatprep.subr.bf16.mxu0 0
  %223 = vmatpush1.bf16.msra.mxu0 0
  %224 = vmatprep.subr.bf16.mxu0 0
  %225 = vmatpush1.bf16.msra.mxu0 0
  %226 = vmatprep.subr.bf16.mxu0 0
  %227 = vmatpush1.bf16.msra.mxu0 0
  %228 = vmatprep.subr.bf16.mxu0 0
  %229 = vmatpush1.bf16.msra.mxu0 0
  %230 = vmatprep.subr.bf16.mxu0 0
  %231 = vmatpush1.bf16.msra.mxu0 %v209
  %232 = vmatprep.subr.bf16.mxu0 0
  %233 = vmatpush1.bf16.msra.mxu0 %v208
  %234 = vmatprep.subr.bf16.mxu0 0
  %235 = vmatpush2.bf16.msra.mxu0 0
  %236 = vmatprep.subr.bf16.mxu0 0
  %237 = vmatpush2.bf16.msra.mxu0 0
  %238 = vmatprep.subr.bf16.mxu0 0
  %239 = vmatpush2.bf16.msra.mxu0 0
  %240 = vmatprep.subr.bf16.mxu0 0
  %241 = vmatpush2.bf16.msra.mxu0 0
  %242 = vmatprep.subr.bf16.mxu0 0
  %243 = vmatpush2.bf16.msra.mxu0 0
  %244 = vmatprep.subr.bf16.mxu0 0
  %245 = vmatpush2.bf16.msra.mxu0 0
  %246 = vmatprep.subr.bf16.mxu0 0
  %247 = vmatpush2.bf16.msra.mxu0 0
  %248 = vmatprep.subr.bf16.mxu0 0
  %249 = vmatpush2.bf16.msra.mxu0 0
  %250 = vmatprep.mubr.bf16.mxu0 0
  %251 = vmatmul.mubr.bf16.gmra.mxu0 %v213
  %v252 = vpop.f32.mrf.mxu0
  %v253 = vadd.f32 0.0, %v252
  %v254 = vpop.f32.mrf.mxu0
  %v255 = vpop.f32.mrf.mxu0
  %v256 = vadd.f32 0.0, %v255
  %v257 = vpop.f32.mrf.mxu0
  %258 = vmatprep.mubr.bf16.mxu0 0
  %259 = vmatmul.mubr.bf16.gmra.mxu0 %v216
  %v260 = vpop.f32.mrf.mxu0
  %v261 = vadd.f32 0.0, %v260
  %v262 = vpop.f32.mrf.mxu0
  %v263 = vpop.f32.mrf.mxu0
  %v264 = vpop.f32.mrf.mxu0
  %265 = vdwg.mxu0
  %v266 = vadd.f32 %v188, %v253
  %v267 = vadd.f32 %v189, %v256
  %v268 = vadd.f32 %v190, %v261
  %269 = vst [vmem:[%s7] sm:$0xff] %v266
  %270 = vst [vmem:[%s7 + $0x8] sm:$0xff] %v267
  %271 = vst [vmem:[%s7 + $0x10] sm:$0xff] %v268
  // Predicated region
  $region30: #{gine_forward.23} parent=0 // pred_check
    _
  $region31: #{gine_forward.23} parent=0 // pred_check_branch
    %273 = sbr.rel (0) target = $region33
  $region32: #{gine_forward.23} parent=0 // pred_region
    _
  $region33: #{gine_forward.23} parent=0 // pred_fallthru
    _
  // Predicated region
  $region34: #{gine_forward.23} parent=0 // pred_check
    _
  $region35: #{gine_forward.23} parent=0 // pred_check_branch
    %275 = sbr.rel (0) target = $region37
  $region36: #{gine_forward.23} parent=0 // pred_region
    _
  $region37: #{gine_forward.23} parent=0 // pred_fallthru
    _

// kernel: gine_forward.22
$region0: #{gine_forward.22}
  #allocation0 [shape = 'u32[]', space=smem, size = 0x4, offset = 0x4, fixed_abs, tag = 'smem constant byte address 0x4 - core index']
  #allocation1 [shape = 'u32[144,128]{1,0:T(1,128)}', space=vmem, size = 0x12000, scoped, tag = 'internal scratch']
  %s0 = inlined_call_operand.vmem [shape: f32[12,32], index: 0, kind: input, shape index: {}]
  %s1 = inlined_call_operand.vmem [shape: f32[12,32], index: 1, kind: input, shape index: {}]
  %s2 = inlined_call_operand.vmem [shape: f32[12,32], index: 2, kind: input, shape index: {}]
  %s3 = inlined_call_operand.vmem [shape: bf16[32,128], index: 3, kind: input, shape index: {}]
  %s4 = inlined_call_operand.vmem [shape: bf16[32,128], index: 4, kind: input, shape index: {}]
  %s5 = inlined_call_operand.vmem [shape: bf16[32,128], index: 5, kind: input, shape index: {}]
  %s6 = inlined_call_operand.vmem [shape: f32[1,128], index: 6, kind: input, shape index: {}]
  %s7 = inlined_call_operand.vmem [shape: f32[12,128], index: 7, kind: output, shape index: {}]
  %s8 = sld [smem:[#allocation0]]
  $region38: #{gine_forward.22} parent=0
    _
  %s10 = ssub.s32 1, %s8
  %s11 = scalar_select 0, %s10, %s8
  // Predicated region
  $region2: #{gine_forward.22} parent=0 // pred_check
    _
  $region3: #{gine_forward.22} parent=0 // pred_check_branch
    %13 = sbr.rel (0) target = $region5
  $region4: #{gine_forward.22} parent=0 // pred_region
    _
  $region5: #{gine_forward.22} parent=0 // pred_fallthru
    _
  // Predicated region
  $region6: #{gine_forward.22} parent=0 // pred_check
    _
  $region7: #{gine_forward.22} parent=0 // pred_check_branch
    %15 = sbr.rel (0) target = $region9
  $region8: #{gine_forward.22} parent=0 // pred_region
    _
  $region9: #{gine_forward.22} parent=0 // pred_fallthru
    _
  // Predicated region
  $region10: #{gine_forward.22} parent=0 // pred_check
    _
  $region11: #{gine_forward.22} parent=0 // pred_check_branch
    %17 = sbr.rel (0) target = $region13
  $region12: #{gine_forward.22} parent=0 // pred_region
    _
  $region13: #{gine_forward.22} parent=0 // pred_fallthru
    _
  // Predicated region
  $region14: #{gine_forward.22} parent=0 // pred_check
    _
  $region15: #{gine_forward.22} parent=0 // pred_check_branch
    %19 = sbr.rel (0) target = $region17
  $region16: #{gine_forward.22} parent=0 // pred_region
    _
  $region17: #{gine_forward.22} parent=0 // pred_fallthru
    _
  // Predicated region
  $region18: #{gine_forward.22} parent=0 // pred_check
    _
  $region19: #{gine_forward.22} parent=0 // pred_check_branch
    %21 = sbr.rel (0) target = $region21
  $region20: #{gine_forward.22} parent=0 // pred_region
    _
  $region21: #{gine_forward.22} parent=0 // pred_fallthru
    _
  // Predicated region
  $region22: #{gine_forward.22} parent=0 // pred_check
    _
  $region23: #{gine_forward.22} parent=0 // pred_check_branch
    %23 = sbr.rel (0) target = $region25
  $region24: #{gine_forward.22} parent=0 // pred_region
    _
  $region25: #{gine_forward.22} parent=0 // pred_fallthru
    _
  // Predicated region
  $region26: #{gine_forward.22} parent=0 // pred_check
    _
  $region27: #{gine_forward.22} parent=0 // pred_check_branch
    %25 = sbr.rel (0) target = $region29
  $region28: #{gine_forward.22} parent=0 // pred_region
    _
  $region29: #{gine_forward.22} parent=0 // pred_fallthru
    _
  %v27 = vld [vmem:[%s6] sm:$0x1]
  %v28 = vld [vmem:[%s0] sm:$0xff]
  %v29 = vld [vmem:[%s0 + $0x8] sm:$0xf]
  %v30 = vpack.c.bf16 %v29, %v28
  %v31 = vld [vmem:[%s3] sm:$0xf]
  %v32 = vld [vmem:[%s3 + $0x4] sm:$0xf]
  %v33 = vld [vmem:[%s3 + $0x8] sm:$0xf]
  %v34 = vld [vmem:[%s3 + $0xc] sm:$0xf]
  %v39 = vunpack.c.l.b16 %v31
  %v40 = vunpack.c.l.b16 %v32
  %v41 = vunpack.c.l.b16 %v33
  %v42 = vunpack.c.l.b16 %v34
  %v43 = vpack.c.b16 %v40, %v39
  %v44 = vpack.c.b16 %v42, %v41
  %vm47 = vcmask 261120
  %v49 = vsel %vm47, %v30, 0
  %51 = vmatprep.subr.bf16.mxu0 0
  %52 = vmatpush1.bf16.msra.mxu0 0
  %53 = vmatprep.subr.bf16.mxu0 0
  %54 = vmatpush1.bf16.msra.mxu0 0
  %55 = vmatprep.subr.bf16.mxu0 0
  %56 = vmatpush1.bf16.msra.mxu0 0
  %57 = vmatprep.subr.bf16.mxu0 0
  %58 = vmatpush1.bf16.msra.mxu0 0
  %59 = vmatprep.subr.bf16.mxu0 0
  %60 = vmatpush1.bf16.msra.mxu0 0
  %61 = vmatprep.subr.bf16.mxu0 0
  %62 = vmatpush1.bf16.msra.mxu0 0
  %63 = vmatprep.subr.bf16.mxu0 0
  %64 = vmatpush1.bf16.msra.mxu0 %v44
  %65 = vmatprep.subr.bf16.mxu0 0
  %66 = vmatpush1.bf16.msra.mxu0 %v43
  %67 = vmatprep.subr.bf16.mxu0 0
  %68 = vmatpush2.bf16.msra.mxu0 0
  %69 = vmatprep.subr.bf16.mxu0 0
  %70 = vmatpush2.bf16.msra.mxu0 0
  %71 = vmatprep.subr.bf16.mxu0 0
  %72 = vmatpush2.bf16.msra.mxu0 0
  %73 = vmatprep.subr.bf16.mxu0 0
  %74 = vmatpush2.bf16.msra.mxu0 0
  %75 = vmatprep.subr.bf16.mxu0 0
  %76 = vmatpush2.bf16.msra.mxu0 0
  %77 = vmatprep.subr.bf16.mxu0 0
  %78 = vmatpush2.bf16.msra.mxu0 0
  %79 = vmatprep.subr.bf16.mxu0 0
  %80 = vmatpush2.bf16.msra.mxu0 0
  %81 = vmatprep.subr.bf16.mxu0 0
  %82 = vmatpush2.bf16.msra.mxu0 0
  %83 = vmatprep.mubr.bf16.mxu0 0
  %84 = vmatmul.mubr.bf16.gmra.mxu0 %v49
  %v85 = vpop.f32.mrf.mxu0
  %v86 = vadd.f32 0.0, %v85
  %v87 = vpop.f32.mrf.mxu0
  %v88 = vpop.f32.mrf.mxu0
  %v89 = vadd.f32 0.0, %v88
  %v90 = vpop.f32.mrf.mxu0
  %91 = vdwg.mxu0
  %v93 = vlaneseq
  %v94 = vshrl.u32 %v93, 7
  %v95 = vsub.s32 0, %v94
  %v96 = vrot.slane %v27, %v95
  %v98 = vadd.f32 %v96, %v86
  %v99 = vadd.f32 %v96, %v89
  %v100 = vld [vmem:[%s1] sm:$0xff]
  %v101 = vld [vmem:[%s1 + $0x8] sm:$0xf]
  %v102 = vpack.c.bf16 %v101, %v100
  %v103 = vld [vmem:[%s4] sm:$0xf]
  %v104 = vld [vmem:[%s4 + $0x4] sm:$0xf]
  %v105 = vld [vmem:[%s4 + $0x8] sm:$0xf]
  %v106 = vld [vmem:[%s4 + $0xc] sm:$0xf]
  %v111 = vunpack.c.l.b16 %v103
  %v112 = vunpack.c.l.b16 %v104
  %v113 = vunpack.c.l.b16 %v105
  %v114 = vunpack.c.l.b16 %v106
  %v115 = vpack.c.b16 %v112, %v111
  %v116 = vpack.c.b16 %v114, %v113
  %v120 = vsel %vm47, %v102, 0
  %122 = vmatprep.subr.bf16.mxu0 0
  %123 = vmatpush1.bf16.msra.mxu0 0
  %124 = vmatprep.subr.bf16.mxu0 0
  %125 = vmatpush1.bf16.msra.mxu0 0
  %126 = vmatprep.subr.bf16.mxu0 0
  %127 = vmatpush1.bf16.msra.mxu0 0
  %128 = vmatprep.subr.bf16.mxu0 0
  %129 = vmatpush1.bf16.msra.mxu0 0
  %130 = vmatprep.subr.bf16.mxu0 0
  %131 = vmatpush1.bf16.msra.mxu0 0
  %132 = vmatprep.subr.bf16.mxu0 0
  %133 = vmatpush1.bf16.msra.mxu0 0
  %134 = vmatprep.subr.bf16.mxu0 0
  %135 = vmatpush1.bf16.msra.mxu0 %v116
  %136 = vmatprep.subr.bf16.mxu0 0
  %137 = vmatpush1.bf16.msra.mxu0 %v115
  %138 = vmatprep.subr.bf16.mxu0 0
  %139 = vmatpush2.bf16.msra.mxu0 0
  %140 = vmatprep.subr.bf16.mxu0 0
  %141 = vmatpush2.bf16.msra.mxu0 0
  %142 = vmatprep.subr.bf16.mxu0 0
  %143 = vmatpush2.bf16.msra.mxu0 0
  %144 = vmatprep.subr.bf16.mxu0 0
  %145 = vmatpush2.bf16.msra.mxu0 0
  %146 = vmatprep.subr.bf16.mxu0 0
  %147 = vmatpush2.bf16.msra.mxu0 0
  %148 = vmatprep.subr.bf16.mxu0 0
  %149 = vmatpush2.bf16.msra.mxu0 0
  %150 = vmatprep.subr.bf16.mxu0 0
  %151 = vmatpush2.bf16.msra.mxu0 0
  %152 = vmatprep.subr.bf16.mxu0 0
  %153 = vmatpush2.bf16.msra.mxu0 0
  %154 = vmatprep.mubr.bf16.mxu0 0
  %155 = vmatmul.mubr.bf16.gmra.mxu0 %v120
  %v156 = vpop.f32.mrf.mxu0
  %v157 = vadd.f32 0.0, %v156
  %v158 = vpop.f32.mrf.mxu0
  %v159 = vpop.f32.mrf.mxu0
  %v160 = vadd.f32 0.0, %v159
  %v161 = vpop.f32.mrf.mxu0
  %162 = vdwg.mxu0
  %v163 = vadd.f32 %v98, %v157
  %v164 = vadd.f32 %v99, %v160
  %v165 = vld [vmem:[%s2] sm:$0xff]
  %v166 = vld [vmem:[%s2 + $0x8] sm:$0xf]
  %v167 = vpack.c.bf16 %v166, %v165
  %v168 = vld [vmem:[%s5] sm:$0xf]
  %v169 = vld [vmem:[%s5 + $0x4] sm:$0xf]
  %v170 = vld [vmem:[%s5 + $0x8] sm:$0xf]
  %v171 = vld [vmem:[%s5 + $0xc] sm:$0xf]
  %v176 = vunpack.c.l.b16 %v168
  %v177 = vunpack.c.l.b16 %v169
  %v178 = vunpack.c.l.b16 %v170
  %v179 = vunpack.c.l.b16 %v171
  %v180 = vpack.c.b16 %v177, %v176
  %v181 = vpack.c.b16 %v179, %v178
  %v185 = vsel %vm47, %v167, 0
  %187 = vmatprep.subr.bf16.mxu0 0
  %188 = vmatpush1.bf16.msra.mxu0 0
  %189 = vmatprep.subr.bf16.mxu0 0
  %190 = vmatpush1.bf16.msra.mxu0 0
  %191 = vmatprep.subr.bf16.mxu0 0
  %192 = vmatpush1.bf16.msra.mxu0 0
  %193 = vmatprep.subr.bf16.mxu0 0
  %194 = vmatpush1.bf16.msra.mxu0 0
  %195 = vmatprep.subr.bf16.mxu0 0
  %196 = vmatpush1.bf16.msra.mxu0 0
  %197 = vmatprep.subr.bf16.mxu0 0
  %198 = vmatpush1.bf16.msra.mxu0 0
  %199 = vmatprep.subr.bf16.mxu0 0
  %200 = vmatpush1.bf16.msra.mxu0 %v181
  %201 = vmatprep.subr.bf16.mxu0 0
  %202 = vmatpush1.bf16.msra.mxu0 %v180
  %203 = vmatprep.subr.bf16.mxu0 0
  %204 = vmatpush2.bf16.msra.mxu0 0
  %205 = vmatprep.subr.bf16.mxu0 0
  %206 = vmatpush2.bf16.msra.mxu0 0
  %207 = vmatprep.subr.bf16.mxu0 0
  %208 = vmatpush2.bf16.msra.mxu0 0
  %209 = vmatprep.subr.bf16.mxu0 0
  %210 = vmatpush2.bf16.msra.mxu0 0
  %211 = vmatprep.subr.bf16.mxu0 0
  %212 = vmatpush2.bf16.msra.mxu0 0
  %213 = vmatprep.subr.bf16.mxu0 0
  %214 = vmatpush2.bf16.msra.mxu0 0
  %215 = vmatprep.subr.bf16.mxu0 0
  %216 = vmatpush2.bf16.msra.mxu0 0
  %217 = vmatprep.subr.bf16.mxu0 0
  %218 = vmatpush2.bf16.msra.mxu0 0
  %219 = vmatprep.mubr.bf16.mxu0 0
  %220 = vmatmul.mubr.bf16.gmra.mxu0 %v185
  %v221 = vpop.f32.mrf.mxu0
  %v222 = vadd.f32 0.0, %v221
  %v223 = vpop.f32.mrf.mxu0
  %v224 = vpop.f32.mrf.mxu0
  %v225 = vadd.f32 0.0, %v224
  %v226 = vpop.f32.mrf.mxu0
  %227 = vdwg.mxu0
  %v228 = vadd.f32 %v163, %v222
  %v229 = vadd.f32 %v164, %v225
  %230 = vst [vmem:[%s7] sm:$0xff] %v228
  %231 = vst [vmem:[%s7 + $0x8] sm:$0xf] %v229
  // Predicated region
  $region30: #{gine_forward.22} parent=0 // pred_check
    _
  $region31: #{gine_forward.22} parent=0 // pred_check_branch
    %233 = sbr.rel (0) target = $region33
  $region32: #{gine_forward.22} parent=0 // pred_region
    _
  $region33: #{gine_forward.22} parent=0 // pred_fallthru
    _
  // Predicated region
  $region34: #{gine_forward.22} parent=0 // pred_check
    _
  $region35: #{gine_forward.22} parent=0 // pred_check_branch
    %235 = sbr.rel (0) target = $region37
  $region36: #{gine_forward.22} parent=0 // pred_region
    _
  $region37: #{gine_forward.22} parent=0 // pred_fallthru
    _

</llo_original>
